<compile_context>
chip_gen: v7x
topology: tpu7x:2x2x1
jax: 0.10.0
libtpu: 0.0.40
codegen_flags: <defaults>
</compile_context>

<pallas_src>
import numpy as np
import jax
import jax.numpy as jnp
from jax import lax
from jax.experimental import pallas as pl
from jax.experimental.pallas import tpu as pltpu

_BN_EPS = 1e-5

# (kernel, cin, cout, pad) per conv block; spatial sizes are 16 -> 8 -> 4 -> 2.
_CONV_CFG = [(5, 3, 16, 2), (5, 16, 32, 2), (3, 32, 64, 1)]
_FC_CFG = [(64, 512), (512, 128), (128, 64), (64, 4)]
_H_IN = [16, 8, 4]                                   # input spatial size per conv block

# Packed-layout geometry (static): each conv block's input buffer holds two padded
# image rows per ref row; lane order = (row-parity, padded-col, cin).
_WP = [h + 2 * c[3] for h, c in zip(_H_IN, _CONV_CFG)]        # padded widths [20, 12, 6]
_HPP = [(h + 2 * c[3]) // 2 for h, c in zip(_H_IN, _CONV_CFG)]  # packed rows  [10, 6, 3]
_LANES = [2 * wp * c[1] for wp, c in zip(_WP, _CONV_CFG)]     # packed lanes  [120, 384, 384]


# ----------------------------------------------------------------------------
# Fused Pallas kernel (one image per grid step)
# ----------------------------------------------------------------------------

def _fused_kernel(xp0_ref, b0_ref, s0_ref, b1_ref, s1_ref, b2_ref, s2_ref,
                  fw1_ref, fb1_ref, fw2_ref, fb2_ref, fw3_ref, fb3_ref,
                  fw4_ref, fb4_ref, o_ref, xp1_s, xp2_s):
    f32, bf16 = jnp.float32, jnp.bfloat16

    # Padding rows / lanes of the packed activation buffers must be zero.
    xp1_s[...] = jnp.zeros_like(xp1_s)
    xp2_s[...] = jnp.zeros_like(xp2_s)

    def conv_block(load_rows, w_ref, shift_ref, ho):
        """'same' conv + folded-BN shift + ReLU + 2x2/2 max-pool.

        w_ref: (taps, 2*Wp*Cin, 4*Wo*Cout) bf16 packed banded matrix.  Each output
        row of the accumulated matmul holds all four pool positions of one pooled
        output row as four 128-lane blocks; max-pool = max over the 4 lane blocks.
        """
        acc = jnp.zeros((ho, w_ref.shape[2]), f32)
        for dh in range(w_ref.shape[0]):                     # static unroll (2 or 3 taps)
            acc = acc + jnp.dot(load_rows(dh).astype(bf16), w_ref[dh],
                                preferred_element_type=f32)
        acc = jnp.maximum(acc + shift_ref[...], 0.0)         # folded BN shift + ReLU
        q = w_ref.shape[2] // 4                              # 128 lanes per pool position
        return jnp.maximum(jnp.maximum(acc[:, 0:q], acc[:, q:2 * q]),
                           jnp.maximum(acc[:, 2 * q:3 * q], acc[:, 3 * q:4 * q]))

    def scatter_rows(pool, dst_ref, wp, cin, pad):
        """Place pooled rows (Ho, Wo*Cout) into the next block's packed padded layout."""
        for ho in range(pool.shape[0]):                      # static unroll (<= 8 rows)
            r, vpar = divmod(pad + ho, 2)                    # packed row / row-parity
            off = vpar * wp * cin + pad * cin                # lane offset incl. left pad
            dst_ref[r:r + 1, off:off + pool.shape[1]] = pool[ho:ho + 1, :]

    # conv block 0: 16x16x3 -> 8x8x16
    pool0 = conv_block(lambda dh: xp0_ref[0, dh:dh + 8, :], b0_ref, s0_ref, ho=8)
    scatter_rows(pool0, xp1_s, wp=_WP[1], cin=_CONV_CFG[1][1], pad=_CONV_CFG[1][3])
    # TODO(synk): nn.Dropout2d(0.2) is identity in eval mode; training-mode channel
    # dropout is not implemented.

    # conv block 1: 8x8x16 -> 4x4x32
    pool1 = conv_block(lambda dh: xp1_s[dh:dh + 4, :], b1_ref, s1_ref, ho=4)
    scatter_rows(pool1, xp2_s, wp=_WP[2], cin=_CONV_CFG[2][1], pad=_CONV_CFG[2][3])

    # conv block 2: 4x4x32 -> 2x2x64
    pool2 = conv_block(lambda dh: xp2_s[dh:dh + 2, :], b2_ref, s2_ref, ho=2)

    # AdaptiveAvgPool2d(1) + Flatten: mean over the 2x2 spatial sites -> (1, 64)
    feat = (pool2[0:1, 0:64] + pool2[0:1, 64:128] +
            pool2[1:2, 0:64] + pool2[1:2, 64:128]) * 0.25

    # MLP head: 64 -> 512 -> 128 -> 64 -> 4 with ReLU, then sigmoid.
    h = jnp.maximum(jnp.dot(feat.astype(bf16), fw1_ref[...],
                            preferred_element_type=f32) + fb1_ref[...], 0.0)
    h = jnp.maximum(jnp.dot(h.astype(bf16), fw2_ref[...],
                            preferred_element_type=f32) + fb2_ref[...], 0.0)
    h = jnp.maximum(jnp.dot(h.astype(bf16), fw3_ref[...],
                            preferred_element_type=f32) + fb3_ref[...], 0.0)
    logits = (jnp.dot(h.astype(bf16), fw4_ref[...],
                      preferred_element_type=f32) + fb4_ref[...])

    e = jnp.exp(-jnp.abs(logits))                            # numerically stable sigmoid
    o_ref[0] = jnp.where(logits >= 0.0, 1.0 / (1.0 + e), e / (1.0 + e))


# ----------------------------------------------------------------------------
# Wrapper
# ----------------------------------------------------------------------------

def weather_cnn_forward(x_nchw, prepped):
    (b0, s0), (b1, s1), (b2, s2) = prepped["conv"]
    (fw1, fb1), (fw2, fb2), (fw3, fb3), (fw4, fb4) = prepped["fc"]
    N = x_nchw.shape[0]
    p0 = _CONV_CFG[0][3]

    # Input-only layout glue: NCHW -> NHWC, zero pad, pack row pairs onto lanes.
    x = jnp.transpose(x_nchw, (0, 2, 3, 1)).astype(jnp.float32)       # (N, 16, 16, 3)
    xpad = jnp.pad(x, ((0, 0), (p0, p0), (p0, p0), (0, 0)))           # (N, 20, 20, 3)
    xp0 = xpad.reshape(N, _HPP[0], _LANES[0]).astype(jnp.bfloat16)    # (N, 10, 120)

    args = (xp0, b0, s0, b1, s1, b2, s2, fw1, fb1, fw2, fb2, fw3, fb3, fw4, fb4)

    def _full(a):
        nd = a.ndim
        return pl.BlockSpec(a.shape, lambda n, nd=nd: (0,) * nd)

    in_specs = [pl.BlockSpec((1, _HPP[0], _LANES[0]), lambda n: (n, 0, 0))]
    in_specs += [_full(a) for a in args[1:]]

    out = pl.pallas_call(
        _fused_kernel,
        out_shape=jax.ShapeDtypeStruct((N, 1, 4), jnp.float32),
        grid=(N,),                                     # one image per grid step
        in_specs=in_specs,
        out_specs=pl.BlockSpec((1, 1, 4), lambda n: (n, 0, 0)),
        scratch_shapes=[pltpu.VMEM((_HPP[1], _LANES[1]), jnp.float32),   # packed input of conv1
                        pltpu.VMEM((_HPP[2], _LANES[2]), jnp.float32)],  # packed input of conv2
        compiler_params=pltpu.CompilerParams(dimension_semantics=("parallel",)),
    )(*args)
    return out.reshape(N, 4)


# ----------------------------------------------------------------------------
# One-time host-side (numpy) parameter folding / packing
# ----------------------------------------------------------------------------

def prepare_params(params):
    """Fold conv bias + BatchNorm into the conv weights and pack each conv into the
    packed banded matmul form used by the kernel.  Pure numpy; call once outside jit."""
    conv_prepped = []
    for li, (k, cin, cout, p) in enumerate(_CONV_CFG):
        w, b, gamma, beta, mean, var = [np.asarray(a, np.float32)
                                        for a in params[f"conv{li}"]]
        scale = gamma / np.sqrt(var + _BN_EPS)
        shift = beta + (b - mean) * scale
        wf = w * scale                                    # BN scale folded into weights

        wdim = _H_IN[li]
        wp, wo = _WP[li], wdim // 2
        khp = k // 2 + 1                                  # vertical taps in packed form
        bmat = np.zeros((khp, 2 * wp * cin, 4 * wo * cout), np.float32)
        for dh in range(k):
            for pr in range(2):                           # pool-window row parity
                dhp, vpar = divmod(pr + dh, 2)
                for dw in range(k):
                    for pc in range(2):                   # pool-window col parity
                        for woi in range(wo):
                            wi = 2 * woi + pc + dw        # padded input column
                            r0 = vpar * wp * cin + wi * cin
                            c0 = ((pr * 2 + pc) * wo + woi) * cout
                            bmat[dhp, r0:r0 + cin, c0:c0 + cout] = wf[dh, dw]
        shift_t = np.tile(shift, 4 * wo)[None, :]         # (1, 4*Wo*Cout)
        conv_prepped.append((jnp.asarray(bmat, jnp.bfloat16),
                             jnp.asarray(shift_t, jnp.float32)))

    fc_prepped = []
    for li in range(4):
        wl, bl = params[f"fc{li}"]
        fc_prepped.append((jnp.asarray(np.asarray(wl), jnp.bfloat16),
                           jnp.asarray(np.asarray(bl), jnp.float32)))
    return {"conv": conv_prepped, "fc": fc_prepped}


# ----------------------------------------------------------------------------
# Parameters + pure-JAX reference (correctness check)
# ----------------------------------------------------------------------------

def init_params(key):
    keys = iter(jax.random.split(key, 32))

    def nrm(shape, s):
        return jax.random.normal(next(keys), shape, jnp.float32) * s

    params = {}
    for li, (k, cin, cout, _p) in enumerate(_CONV_CFG):
        w = nrm((k, k, cin, cout), 0.1)                   # HWIO conv weight
        b = nrm((cout,), 0.05)                            # conv bias
        gamma = 1.0 + 0.2 * jax.random.normal(next(keys), (cout,), jnp.float32)
        beta = nrm((cout,), 0.05)
        mean = nrm((cout,), 0.05)                         # BN running_mean
        var = 1.0 + 0.2 * jax.random.uniform(next(keys), (cout,), jnp.float32)
        params[f"conv{li}"] = (w, b, gamma, beta, mean, var)
    for li, (fin, fout) in enumerate(_FC_CFG):
        params[f"fc{li}"] = (nrm((fin, fout), 0.1), nrm((1, fout), 0.05))
    return params


def reference_forward(x_nchw, params):
    x = jnp.transpose(x_nchw, (0, 2, 3, 1)).astype(jnp.float32)
    for li, (k, cin, cout, p) in enumerate(_CONV_CFG):
        w, b, gamma, beta, mean, var = params[f"conv{li}"]
        y = lax.conv_general_dilated(
            x, w, window_strides=(1, 1), padding=[(p, p), (p, p)],
            dimension_numbers=("NHWC", "HWIO", "NHWC"))
        y = y + b
        y = (y - mean) / jnp.sqrt(var + _BN_EPS) * gamma + beta
        y = jnp.maximum(y, 0.0)
        x = lax.reduce_window(y, -jnp.inf, lax.max, (1, 2, 2, 1), (1, 2, 2, 1), "VALID")
    feat = jnp.mean(x, axis=(1, 2))
    for li in range(3):
        wl, bl = params[f"fc{li}"]
        feat = jnp.maximum(feat @ wl + bl, 0.0)
    w4, b4 = params["fc3"]
    return jax.nn.sigmoid(feat @ w4 + b4)


# ----------------------------------------------------------------------------

if __name__ == "__main__":
    key = jax.random.PRNGKey(0)
    kp, kx = jax.random.split(key)
    params = init_params(kp)
    prepped = prepare_params(params)

    # PyTorch-style NCHW input: batch=2, channels=3 (module requires 3), 16x16 spatial.
    x = jax.random.normal(kx, (2, 3, 16, 16), jnp.float32)

    fwd = jax.jit(weather_cnn_forward)
    out = jax.block_until_ready(fwd(x, prepped))
    assert out.shape == (2, 4), out.shape

    ref = reference_forward(x, params)
    # bf16 matmul operands vs. the f32 reference -> loose-ish tolerance.
    assert jnp.allclose(out, ref, rtol=2e-2, atol=2e-2), (out, ref)

    print("KERNEL_OK")
</pallas_src>

<mosaic_0001>
module attributes {stable_mosaic.version = 11 : i64} {
  func.func @_fused_kernel(%arg0: i32, %arg1: memref<1x10x120xbf16, #tpu.memory_space<vmem>>, %arg2: memref<3x120x512xbf16, #tpu.memory_space<vmem>>, %arg3: memref<1x512xf32, #tpu.memory_space<vmem>>, %arg4: memref<3x384x512xbf16, #tpu.memory_space<vmem>>, %arg5: memref<1x512xf32, #tpu.memory_space<vmem>>, %arg6: memref<2x384x512xbf16, #tpu.memory_space<vmem>>, %arg7: memref<1x512xf32, #tpu.memory_space<vmem>>, %arg8: memref<64x512xbf16, #tpu.memory_space<vmem>>, %arg9: memref<1x512xf32, #tpu.memory_space<vmem>>, %arg10: memref<512x128xbf16, #tpu.memory_space<vmem>>, %arg11: memref<1x128xf32, #tpu.memory_space<vmem>>, %arg12: memref<128x64xbf16, #tpu.memory_space<vmem>>, %arg13: memref<1x64xf32, #tpu.memory_space<vmem>>, %arg14: memref<64x4xbf16, #tpu.memory_space<vmem>>, %arg15: memref<1x4xf32, #tpu.memory_space<vmem>>, %arg16: memref<1x1x4xf32, #tpu.memory_space<vmem>>, %arg17: memref<6x384xf32, #tpu.memory_space<vmem>>, %arg18: memref<3x384xf32, #tpu.memory_space<vmem>>) attributes {dimension_semantics = [#tpu.dimension_semantics<parallel>], iteration_bounds = array<i64: 2>, scalar_prefetch = 0 : i64, scratch_operands = 2 : i64, tpu.core_type = #tpu.core_type<tc>, window_params = [{transform_indices = @transform_0, window_bounds = array<i64: 1, 10, 120>}, {pipeline_mode = #tpu.pipeline_mode<synchronous>, transform_indices = @transform_1, window_bounds = array<i64: 3, 120, 512>}, {pipeline_mode = #tpu.pipeline_mode<synchronous>, transform_indices = @transform_2, window_bounds = array<i64: 1, 512>}, {pipeline_mode = #tpu.pipeline_mode<synchronous>, transform_indices = @transform_3, window_bounds = array<i64: 3, 384, 512>}, {pipeline_mode = #tpu.pipeline_mode<synchronous>, transform_indices = @transform_4, window_bounds = array<i64: 1, 512>}, {pipeline_mode = #tpu.pipeline_mode<synchronous>, transform_indices = @transform_5, window_bounds = array<i64: 2, 384, 512>}, {pipeline_mode = #tpu.pipeline_mode<synchronous>, transform_indices = @transform_6, window_bounds = array<i64: 1, 512>}, {pipeline_mode = #tpu.pipeline_mode<synchronous>, transform_indices = @transform_7, window_bounds = array<i64: 64, 512>}, {pipeline_mode = #tpu.pipeline_mode<synchronous>, transform_indices = @transform_8, window_bounds = array<i64: 1, 512>}, {pipeline_mode = #tpu.pipeline_mode<synchronous>, transform_indices = @transform_9, window_bounds = array<i64: 512, 128>}, {pipeline_mode = #tpu.pipeline_mode<synchronous>, transform_indices = @transform_10, window_bounds = array<i64: 1, 128>}, {pipeline_mode = #tpu.pipeline_mode<synchronous>, transform_indices = @transform_11, window_bounds = array<i64: 128, 64>}, {pipeline_mode = #tpu.pipeline_mode<synchronous>, transform_indices = @transform_12, window_bounds = array<i64: 1, 64>}, {pipeline_mode = #tpu.pipeline_mode<synchronous>, transform_indices = @transform_13, window_bounds = array<i64: 64, 4>}, {pipeline_mode = #tpu.pipeline_mode<synchronous>, transform_indices = @transform_14, window_bounds = array<i64: 1, 4>}, {transform_indices = @transform_15, window_bounds = array<i64: 1, 1, 4>}]} {
    %cst = arith.constant 0.000000e+00 : f32
    %0 = vector.broadcast %cst : f32 to vector<6x384xf32>
    %c0 = arith.constant 0 : index
    %c0_0 = arith.constant 0 : index
    %1 = vector.load %arg17[%c0, %c0_0] : memref<6x384xf32, #tpu.memory_space<vmem>>, vector<6x384xf32>
    tpu.vector_store %arg17[%c0, %c0_0], %0 {strides = array<i32>} : memref<6x384xf32, #tpu.memory_space<vmem>>, vector<6x384xf32>,
    %cst_1 = arith.constant 0.000000e+00 : f32
    %2 = vector.broadcast %cst_1 : f32 to vector<3x384xf32>
    %c0_2 = arith.constant 0 : index
    %c0_3 = arith.constant 0 : index
    %3 = vector.load %arg18[%c0_2, %c0_3] : memref<3x384xf32, #tpu.memory_space<vmem>>, vector<3x384xf32>
    tpu.vector_store %arg18[%c0_2, %c0_3], %2 {strides = array<i32>} : memref<3x384xf32, #tpu.memory_space<vmem>>, vector<3x384xf32>,
    %cst_4 = arith.constant 0.000000e+00 : f32
    %4 = vector.broadcast %cst_4 : f32 to vector<8x512xf32>
    %c0_5 = arith.constant 0 : index
    %c0_6 = arith.constant 0 : index
    %c0_7 = arith.constant 0 : index
    %5 = vector.load %arg1[%c0_5, %c0_6, %c0_7] : memref<1x10x120xbf16, #tpu.memory_space<vmem>>, vector<1x8x120xbf16>
    %6 = vector.shape_cast %5 : vector<1x8x120xbf16> to vector<8x120xbf16>
    %c0_8 = arith.constant 0 : index
    %c0_9 = arith.constant 0 : index
    %c0_10 = arith.constant 0 : index
    %7 = vector.load %arg2[%c0_8, %c0_9, %c0_10] : memref<3x120x512xbf16, #tpu.memory_space<vmem>>, vector<1x120x512xbf16>
    %8 = vector.shape_cast %7 : vector<1x120x512xbf16> to vector<120x512xbf16>
    %cst_11 = arith.constant dense<0.000000e+00> : vector<8x512xf32>
    %9 = tpu.matmul %6, %8, %cst_11 {dimension_numbers = #tpu.dot_dimension_numbers<[1], [0], [0], [1], [0, 0, 1, 1], [], []>} : vector<8x120xbf16>, vector<120x512xbf16>, vector<8x512xf32> -> vector<8x512xf32>
    %10 = arith.addf %4, %9 : vector<8x512xf32>
    %c0_12 = arith.constant 0 : index
    %c1 = arith.constant 1 : index
    %c0_13 = arith.constant 0 : index
    %11 = vector.load %arg1[%c0_12, %c1, %c0_13] : memref<1x10x120xbf16, #tpu.memory_space<vmem>>, vector<1x8x120xbf16>
    %12 = vector.shape_cast %11 : vector<1x8x120xbf16> to vector<8x120xbf16>
    %c1_14 = arith.constant 1 : index
    %c0_15 = arith.constant 0 : index
    %c0_16 = arith.constant 0 : index
    %13 = vector.load %arg2[%c1_14, %c0_15, %c0_16] : memref<3x120x512xbf16, #tpu.memory_space<vmem>>, vector<1x120x512xbf16>
    %14 = vector.shape_cast %13 : vector<1x120x512xbf16> to vector<120x512xbf16>
    %cst_17 = arith.constant dense<0.000000e+00> : vector<8x512xf32>
    %15 = tpu.matmul %12, %14, %cst_17 {dimension_numbers = #tpu.dot_dimension_numbers<[1], [0], [0], [1], [0, 0, 1, 1], [], []>} : vector<8x120xbf16>, vector<120x512xbf16>, vector<8x512xf32> -> vector<8x512xf32>
    %16 = arith.addf %10, %15 : vector<8x512xf32>
    %c0_18 = arith.constant 0 : index
    %c2 = arith.constant 2 : index
    %c0_19 = arith.constant 0 : index
    %17 = vector.load %arg1[%c0_18, %c2, %c0_19] : memref<1x10x120xbf16, #tpu.memory_space<vmem>>, vector<1x8x120xbf16>
    %18 = vector.shape_cast %17 : vector<1x8x120xbf16> to vector<8x120xbf16>
    %c2_20 = arith.constant 2 : index
    %c0_21 = arith.constant 0 : index
    %c0_22 = arith.constant 0 : index
    %19 = vector.load %arg2[%c2_20, %c0_21, %c0_22] : memref<3x120x512xbf16, #tpu.memory_space<vmem>>, vector<1x120x512xbf16>
    %20 = vector.shape_cast %19 : vector<1x120x512xbf16> to vector<120x512xbf16>
    %cst_23 = arith.constant dense<0.000000e+00> : vector<8x512xf32>
    %21 = tpu.matmul %18, %20, %cst_23 {dimension_numbers = #tpu.dot_dimension_numbers<[1], [0], [0], [1], [0, 0, 1, 1], [], []>} : vector<8x120xbf16>, vector<120x512xbf16>, vector<8x512xf32> -> vector<8x512xf32>
    %22 = arith.addf %16, %21 : vector<8x512xf32>
    %c0_24 = arith.constant 0 : index
    %c0_25 = arith.constant 0 : index
    %23 = vector.load %arg3[%c0_24, %c0_25] : memref<1x512xf32, #tpu.memory_space<vmem>>, vector<1x512xf32>
    %24 = vector.broadcast %23 : vector<1x512xf32> to vector<8x512xf32>
    %25 = arith.addf %22, %24 : vector<8x512xf32>
    %cst_26 = arith.constant 0.000000e+00 : f32
    %26 = vector.broadcast %cst_26 : f32 to vector<8x512xf32>
    %27 = arith.maximumf %25, %26 : vector<8x512xf32>
    %28 = vector.extract_strided_slice %27 {offsets = [0, 0], sizes = [8, 128], strides = [1, 1]} : vector<8x512xf32> to vector<8x128xf32>
    %29 = vector.extract_strided_slice %27 {offsets = [0, 128], sizes = [8, 128], strides = [1, 1]} : vector<8x512xf32> to vector<8x128xf32>
    %30 = arith.maximumf %28, %29 : vector<8x128xf32>
    %31 = vector.extract_strided_slice %27 {offsets = [0, 256], sizes = [8, 128], strides = [1, 1]} : vector<8x512xf32> to vector<8x128xf32>
    %32 = vector.extract_strided_slice %27 {offsets = [0, 384], sizes = [8, 128], strides = [1, 1]} : vector<8x512xf32> to vector<8x128xf32>
    %33 = arith.maximumf %31, %32 : vector<8x128xf32>
    %34 = arith.maximumf %30, %33 : vector<8x128xf32>
    %35 = vector.extract_strided_slice %34 {offsets = [0, 0], sizes = [1, 128], strides = [1, 1]} : vector<8x128xf32> to vector<1x128xf32>
    %c1_27 = arith.constant 1 : index
    %c32 = arith.constant 32 : index
    %36 = vector.load %arg17[%c1_27, %c32] : memref<6x384xf32, #tpu.memory_space<vmem>>, vector<1x128xf32>
    tpu.vector_store %arg17[%c1_27, %c32], %35 {strides = array<i32>} : memref<6x384xf32, #tpu.memory_space<vmem>>, vector<1x128xf32>,
    %37 = vector.extract_strided_slice %34 {offsets = [1, 0], sizes = [1, 128], strides = [1, 1]} : vector<8x128xf32> to vector<1x128xf32>
    %c1_28 = arith.constant 1 : index
    %c224 = arith.constant 224 : index
    %38 = vector.load %arg17[%c1_28, %c224] : memref<6x384xf32, #tpu.memory_space<vmem>>, vector<1x128xf32>
    tpu.vector_store %arg17[%c1_28, %c224], %37 {strides = array<i32>} : memref<6x384xf32, #tpu.memory_space<vmem>>, vector<1x128xf32>,
    %39 = vector.extract_strided_slice %34 {offsets = [2, 0], sizes = [1, 128], strides = [1, 1]} : vector<8x128xf32> to vector<1x128xf32>
    %c2_29 = arith.constant 2 : index
    %c32_30 = arith.constant 32 : index
    %40 = vector.load %arg17[%c2_29, %c32_30] : memref<6x384xf32, #tpu.memory_space<vmem>>, vector<1x128xf32>
    tpu.vector_store %arg17[%c2_29, %c32_30], %39 {strides = array<i32>} : memref<6x384xf32, #tpu.memory_space<vmem>>, vector<1x128xf32>,
    %41 = vector.extract_strided_slice %34 {offsets = [3, 0], sizes = [1, 128], strides = [1, 1]} : vector<8x128xf32> to vector<1x128xf32>
    %c2_31 = arith.constant 2 : index
    %c224_32 = arith.constant 224 : index
    %42 = vector.load %arg17[%c2_31, %c224_32] : memref<6x384xf32, #tpu.memory_space<vmem>>, vector<1x128xf32>
    tpu.vector_store %arg17[%c2_31, %c224_32], %41 {strides = array<i32>} : memref<6x384xf32, #tpu.memory_space<vmem>>, vector<1x128xf32>,
    %43 = vector.extract_strided_slice %34 {offsets = [4, 0], sizes = [1, 128], strides = [1, 1]} : vector<8x128xf32> to vector<1x128xf32>
    %c3 = arith.constant 3 : index
    %c32_33 = arith.constant 32 : index
    %44 = vector.load %arg17[%c3, %c32_33] : memref<6x384xf32, #tpu.memory_space<vmem>>, vector<1x128xf32>
    tpu.vector_store %arg17[%c3, %c32_33], %43 {strides = array<i32>} : memref<6x384xf32, #tpu.memory_space<vmem>>, vector<1x128xf32>,
    %45 = vector.extract_strided_slice %34 {offsets = [5, 0], sizes = [1, 128], strides = [1, 1]} : vector<8x128xf32> to vector<1x128xf32>
    %c3_34 = arith.constant 3 : index
    %c224_35 = arith.constant 224 : index
    %46 = vector.load %arg17[%c3_34, %c224_35] : memref<6x384xf32, #tpu.memory_space<vmem>>, vector<1x128xf32>
    tpu.vector_store %arg17[%c3_34, %c224_35], %45 {strides = array<i32>} : memref<6x384xf32, #tpu.memory_space<vmem>>, vector<1x128xf32>,
    %47 = vector.extract_strided_slice %34 {offsets = [6, 0], sizes = [1, 128], strides = [1, 1]} : vector<8x128xf32> to vector<1x128xf32>
    %c4 = arith.constant 4 : index
    %c32_36 = arith.constant 32 : index
    %48 = vector.load %arg17[%c4, %c32_36] : memref<6x384xf32, #tpu.memory_space<vmem>>, vector<1x128xf32>
    tpu.vector_store %arg17[%c4, %c32_36], %47 {strides = array<i32>} : memref<6x384xf32, #tpu.memory_space<vmem>>, vector<1x128xf32>,
    %49 = vector.extract_strided_slice %34 {offsets = [7, 0], sizes = [1, 128], strides = [1, 1]} : vector<8x128xf32> to vector<1x128xf32>
    %c4_37 = arith.constant 4 : index
    %c224_38 = arith.constant 224 : index
    %50 = vector.load %arg17[%c4_37, %c224_38] : memref<6x384xf32, #tpu.memory_space<vmem>>, vector<1x128xf32>
    tpu.vector_store %arg17[%c4_37, %c224_38], %49 {strides = array<i32>} : memref<6x384xf32, #tpu.memory_space<vmem>>, vector<1x128xf32>,
    %cst_39 = arith.constant 0.000000e+00 : f32
    %51 = vector.broadcast %cst_39 : f32 to vector<4x512xf32>
    %c0_40 = arith.constant 0 : index
    %c0_41 = arith.constant 0 : index
    %52 = vector.load %arg17[%c0_40, %c0_41] : memref<6x384xf32, #tpu.memory_space<vmem>>, vector<4x384xf32>
    %53 = arith.truncf %52 : vector<4x384xf32> to vector<4x384xbf16>
    %c0_42 = arith.constant 0 : index
    %c0_43 = arith.constant 0 : index
    %c0_44 = arith.constant 0 : index
    %54 = vector.load %arg4[%c0_42, %c0_43, %c0_44] : memref<3x384x512xbf16, #tpu.memory_space<vmem>>, vector<1x384x512xbf16>
    %55 = vector.shape_cast %54 : vector<1x384x512xbf16> to vector<384x512xbf16>
    %cst_45 = arith.constant dense<0.000000e+00> : vector<4x512xf32>
    %56 = tpu.matmul %53, %55, %cst_45 {dimension_numbers = #tpu.dot_dimension_numbers<[1], [0], [0], [1], [0, 0, 1, 1], [], []>} : vector<4x384xbf16>, vector<384x512xbf16>, vector<4x512xf32> -> vector<4x512xf32>
    %57 = arith.addf %51, %56 : vector<4x512xf32>
    %c1_46 = arith.constant 1 : index
    %c0_47 = arith.constant 0 : index
    %58 = vector.load %arg17[%c1_46, %c0_47] : memref<6x384xf32, #tpu.memory_space<vmem>>, vector<4x384xf32>
    %59 = arith.truncf %58 : vector<4x384xf32> to vector<4x384xbf16>
    %c1_48 = arith.constant 1 : index
    %c0_49 = arith.constant 0 : index
    %c0_50 = arith.constant 0 : index
    %60 = vector.load %arg4[%c1_48, %c0_49, %c0_50] : memref<3x384x512xbf16, #tpu.memory_space<vmem>>, vector<1x384x512xbf16>
    %61 = vector.shape_cast %60 : vector<1x384x512xbf16> to vector<384x512xbf16>
    %cst_51 = arith.constant dense<0.000000e+00> : vector<4x512xf32>
    %62 = tpu.matmul %59, %61, %cst_51 {dimension_numbers = #tpu.dot_dimension_numbers<[1], [0], [0], [1], [0, 0, 1, 1], [], []>} : vector<4x384xbf16>, vector<384x512xbf16>, vector<4x512xf32> -> vector<4x512xf32>
    %63 = arith.addf %57, %62 : vector<4x512xf32>
    %c2_52 = arith.constant 2 : index
    %c0_53 = arith.constant 0 : index
    %64 = vector.load %arg17[%c2_52, %c0_53] : memref<6x384xf32, #tpu.memory_space<vmem>>, vector<4x384xf32>
    %65 = arith.truncf %64 : vector<4x384xf32> to vector<4x384xbf16>
    %c2_54 = arith.constant 2 : index
    %c0_55 = arith.constant 0 : index
    %c0_56 = arith.constant 0 : index
    %66 = vector.load %arg4[%c2_54, %c0_55, %c0_56] : memref<3x384x512xbf16, #tpu.memory_space<vmem>>, vector<1x384x512xbf16>
    %67 = vector.shape_cast %66 : vector<1x384x512xbf16> to vector<384x512xbf16>
    %cst_57 = arith.constant dense<0.000000e+00> : vector<4x512xf32>
    %68 = tpu.matmul %65, %67, %cst_57 {dimension_numbers = #tpu.dot_dimension_numbers<[1], [0], [0], [1], [0, 0, 1, 1], [], []>} : vector<4x384xbf16>, vector<384x512xbf16>, vector<4x512xf32> -> vector<4x512xf32>
    %69 = arith.addf %63, %68 : vector<4x512xf32>
    %c0_58 = arith.constant 0 : index
    %c0_59 = arith.constant 0 : index
    %70 = vector.load %arg5[%c0_58, %c0_59] : memref<1x512xf32, #tpu.memory_space<vmem>>, vector<1x512xf32>
    %71 = vector.broadcast %70 : vector<1x512xf32> to vector<4x512xf32>
    %72 = arith.addf %69, %71 : vector<4x512xf32>
    %cst_60 = arith.constant 0.000000e+00 : f32
    %73 = vector.broadcast %cst_60 : f32 to vector<4x512xf32>
    %74 = arith.maximumf %72, %73 : vector<4x512xf32>
    %75 = vector.extract_strided_slice %74 {offsets = [0, 0], sizes = [4, 128], strides = [1, 1]} : vector<4x512xf32> to vector<4x128xf32>
    %76 = vector.extract_strided_slice %74 {offsets = [0, 128], sizes = [4, 128], strides = [1, 1]} : vector<4x512xf32> to vector<4x128xf32>
    %77 = arith.maximumf %75, %76 : vector<4x128xf32>
    %78 = vector.extract_strided_slice %74 {offsets = [0, 256], sizes = [4, 128], strides = [1, 1]} : vector<4x512xf32> to vector<4x128xf32>
    %79 = vector.extract_strided_slice %74 {offsets = [0, 384], sizes = [4, 128], strides = [1, 1]} : vector<4x512xf32> to vector<4x128xf32>
    %80 = arith.maximumf %78, %79 : vector<4x128xf32>
    %81 = arith.maximumf %77, %80 : vector<4x128xf32>
    %82 = vector.extract_strided_slice %81 {offsets = [0, 0], sizes = [1, 128], strides = [1, 1]} : vector<4x128xf32> to vector<1x128xf32>
    %c0_61 = arith.constant 0 : index
    %c224_62 = arith.constant 224 : index
    %83 = vector.load %arg18[%c0_61, %c224_62] : memref<3x384xf32, #tpu.memory_space<vmem>>, vector<1x128xf32>
    tpu.vector_store %arg18[%c0_61, %c224_62], %82 {strides = array<i32>} : memref<3x384xf32, #tpu.memory_space<vmem>>, vector<1x128xf32>,
    %84 = vector.extract_strided_slice %81 {offsets = [1, 0], sizes = [1, 128], strides = [1, 1]} : vector<4x128xf32> to vector<1x128xf32>
    %c1_63 = arith.constant 1 : index
    %c32_64 = arith.constant 32 : index
    %85 = vector.load %arg18[%c1_63, %c32_64] : memref<3x384xf32, #tpu.memory_space<vmem>>, vector<1x128xf32>
    tpu.vector_store %arg18[%c1_63, %c32_64], %84 {strides = array<i32>} : memref<3x384xf32, #tpu.memory_space<vmem>>, vector<1x128xf32>,
    %86 = vector.extract_strided_slice %81 {offsets = [2, 0], sizes = [1, 128], strides = [1, 1]} : vector<4x128xf32> to vector<1x128xf32>
    %c1_65 = arith.constant 1 : index
    %c224_66 = arith.constant 224 : index
    %87 = vector.load %arg18[%c1_65, %c224_66] : memref<3x384xf32, #tpu.memory_space<vmem>>, vector<1x128xf32>
    tpu.vector_store %arg18[%c1_65, %c224_66], %86 {strides = array<i32>} : memref<3x384xf32, #tpu.memory_space<vmem>>, vector<1x128xf32>,
    %88 = vector.extract_strided_slice %81 {offsets = [3, 0], sizes = [1, 128], strides = [1, 1]} : vector<4x128xf32> to vector<1x128xf32>
    %c2_67 = arith.constant 2 : index
    %c32_68 = arith.constant 32 : index
    %89 = vector.load %arg18[%c2_67, %c32_68] : memref<3x384xf32, #tpu.memory_space<vmem>>, vector<1x128xf32>
    tpu.vector_store %arg18[%c2_67, %c32_68], %88 {strides = array<i32>} : memref<3x384xf32, #tpu.memory_space<vmem>>, vector<1x128xf32>,
    %cst_69 = arith.constant 0.000000e+00 : f32
    %90 = vector.broadcast %cst_69 : f32 to vector<2x512xf32>
    %c0_70 = arith.constant 0 : index
    %c0_71 = arith.constant 0 : index
    %91 = vector.load %arg18[%c0_70, %c0_71] : memref<3x384xf32, #tpu.memory_space<vmem>>, vector<2x384xf32>
    %92 = arith.truncf %91 : vector<2x384xf32> to vector<2x384xbf16>
    %c0_72 = arith.constant 0 : index
    %c0_73 = arith.constant 0 : index
    %c0_74 = arith.constant 0 : index
    %93 = vector.load %arg6[%c0_72, %c0_73, %c0_74] : memref<2x384x512xbf16, #tpu.memory_space<vmem>>, vector<1x384x512xbf16>
    %94 = vector.shape_cast %93 : vector<1x384x512xbf16> to vector<384x512xbf16>
    %cst_75 = arith.constant dense<0.000000e+00> : vector<2x512xf32>
    %95 = tpu.matmul %92, %94, %cst_75 {dimension_numbers = #tpu.dot_dimension_numbers<[1], [0], [0], [1], [0, 0, 1, 1], [], []>} : vector<2x384xbf16>, vector<384x512xbf16>, vector<2x512xf32> -> vector<2x512xf32>
    %96 = arith.addf %90, %95 : vector<2x512xf32>
    %c1_76 = arith.constant 1 : index
    %c0_77 = arith.constant 0 : index
    %97 = vector.load %arg18[%c1_76, %c0_77] : memref<3x384xf32, #tpu.memory_space<vmem>>, vector<2x384xf32>
    %98 = arith.truncf %97 : vector<2x384xf32> to vector<2x384xbf16>
    %c1_78 = arith.constant 1 : index
    %c0_79 = arith.constant 0 : index
    %c0_80 = arith.constant 0 : index
    %99 = vector.load %arg6[%c1_78, %c0_79, %c0_80] : memref<2x384x512xbf16, #tpu.memory_space<vmem>>, vector<1x384x512xbf16>
    %100 = vector.shape_cast %99 : vector<1x384x512xbf16> to vector<384x512xbf16>
    %cst_81 = arith.constant dense<0.000000e+00> : vector<2x512xf32>
    %101 = tpu.matmul %98, %100, %cst_81 {dimension_numbers = #tpu.dot_dimension_numbers<[1], [0], [0], [1], [0, 0, 1, 1], [], []>} : vector<2x384xbf16>, vector<384x512xbf16>, vector<2x512xf32> -> vector<2x512xf32>
    %102 = arith.addf %96, %101 : vector<2x512xf32>
    %c0_82 = arith.constant 0 : index
    %c0_83 = arith.constant 0 : index
    %103 = vector.load %arg7[%c0_82, %c0_83] : memref<1x512xf32, #tpu.memory_space<vmem>>, vector<1x512xf32>
    %104 = vector.broadcast %103 : vector<1x512xf32> to vector<2x512xf32>
    %105 = arith.addf %102, %104 : vector<2x512xf32>
    %cst_84 = arith.constant 0.000000e+00 : f32
    %106 = vector.broadcast %cst_84 : f32 to vector<2x512xf32>
    %107 = arith.maximumf %105, %106 : vector<2x512xf32>
    %108 = vector.extract_strided_slice %107 {offsets = [0, 0], sizes = [2, 128], strides = [1, 1]} : vector<2x512xf32> to vector<2x128xf32>
    %109 = vector.extract_strided_slice %107 {offsets = [0, 128], sizes = [2, 128], strides = [1, 1]} : vector<2x512xf32> to vector<2x128xf32>
    %110 = arith.maximumf %108, %109 : vector<2x128xf32>
    %111 = vector.extract_strided_slice %107 {offsets = [0, 256], sizes = [2, 128], strides = [1, 1]} : vector<2x512xf32> to vector<2x128xf32>
    %112 = vector.extract_strided_slice %107 {offsets = [0, 384], sizes = [2, 128], strides = [1, 1]} : vector<2x512xf32> to vector<2x128xf32>
    %113 = arith.maximumf %111, %112 : vector<2x128xf32>
    %114 = arith.maximumf %110, %113 : vector<2x128xf32>
    %115 = vector.extract_strided_slice %114 {offsets = [0, 0], sizes = [1, 64], strides = [1, 1]} : vector<2x128xf32> to vector<1x64xf32>
    %116 = vector.extract_strided_slice %114 {offsets = [0, 64], sizes = [1, 64], strides = [1, 1]} : vector<2x128xf32> to vector<1x64xf32>
    %117 = arith.addf %115, %116 : vector<1x64xf32>
    %118 = vector.extract_strided_slice %114 {offsets = [1, 0], sizes = [1, 64], strides = [1, 1]} : vector<2x128xf32> to vector<1x64xf32>
    %119 = arith.addf %117, %118 : vector<1x64xf32>
    %120 = vector.extract_strided_slice %114 {offsets = [1, 64], sizes = [1, 64], strides = [1, 1]} : vector<2x128xf32> to vector<1x64xf32>
    %121 = arith.addf %119, %120 : vector<1x64xf32>
    %cst_85 = arith.constant 2.500000e-01 : f32
    %122 = vector.broadcast %cst_85 : f32 to vector<1x64xf32>
    %123 = arith.mulf %121, %122 : vector<1x64xf32>
    %124 = arith.truncf %123 : vector<1x64xf32> to vector<1x64xbf16>
    %c0_86 = arith.constant 0 : index
    %c0_87 = arith.constant 0 : index
    %125 = vector.load %arg8[%c0_86, %c0_87] : memref<64x512xbf16, #tpu.memory_space<vmem>>, vector<64x512xbf16>
    %cst_88 = arith.constant dense<0.000000e+00> : vector<1x512xf32>
    %126 = tpu.matmul %124, %125, %cst_88 {dimension_numbers = #tpu.dot_dimension_numbers<[1], [0], [0], [1], [0, 0, 1, 1], [], []>} : vector<1x64xbf16>, vector<64x512xbf16>, vector<1x512xf32> -> vector<1x512xf32>
    %c0_89 = arith.constant 0 : index
    %c0_90 = arith.constant 0 : index
    %127 = vector.load %arg9[%c0_89, %c0_90] : memref<1x512xf32, #tpu.memory_space<vmem>>, vector<1x512xf32>
    %128 = arith.addf %126, %127 : vector<1x512xf32>
    %cst_91 = arith.constant 0.000000e+00 : f32
    %129 = vector.broadcast %cst_91 : f32 to vector<1x512xf32>
    %130 = arith.maximumf %128, %129 : vector<1x512xf32>
    %131 = arith.truncf %130 : vector<1x512xf32> to vector<1x512xbf16>
    %c0_92 = arith.constant 0 : index
    %c0_93 = arith.constant 0 : index
    %132 = vector.load %arg10[%c0_92, %c0_93] : memref<512x128xbf16, #tpu.memory_space<vmem>>, vector<512x128xbf16>
    %cst_94 = arith.constant dense<0.000000e+00> : vector<1x128xf32>
    %133 = tpu.matmul %131, %132, %cst_94 {dimension_numbers = #tpu.dot_dimension_numbers<[1], [0], [0], [1], [0, 0, 1, 1], [], []>} : vector<1x512xbf16>, vector<512x128xbf16>, vector<1x128xf32> -> vector<1x128xf32>
    %c0_95 = arith.constant 0 : index
    %c0_96 = arith.constant 0 : index
    %134 = vector.load %arg11[%c0_95, %c0_96] : memref<1x128xf32, #tpu.memory_space<vmem>>, vector<1x128xf32>
    %135 = arith.addf %133, %134 : vector<1x128xf32>
    %cst_97 = arith.constant 0.000000e+00 : f32
    %136 = vector.broadcast %cst_97 : f32 to vector<1x128xf32>
    %137 = arith.maximumf %135, %136 : vector<1x128xf32>
    %138 = arith.truncf %137 : vector<1x128xf32> to vector<1x128xbf16>
    %c0_98 = arith.constant 0 : index
    %c0_99 = arith.constant 0 : index
    %139 = vector.load %arg12[%c0_98, %c0_99] : memref<128x64xbf16, #tpu.memory_space<vmem>>, vector<128x64xbf16>
    %cst_100 = arith.constant dense<0.000000e+00> : vector<1x64xf32>
    %140 = tpu.matmul %138, %139, %cst_100 {dimension_numbers = #tpu.dot_dimension_numbers<[1], [0], [0], [1], [0, 0, 1, 1], [], []>} : vector<1x128xbf16>, vector<128x64xbf16>, vector<1x64xf32> -> vector<1x64xf32>
    %c0_101 = arith.constant 0 : index
    %c0_102 = arith.constant 0 : index
    %141 = vector.load %arg13[%c0_101, %c0_102] : memref<1x64xf32, #tpu.memory_space<vmem>>, vector<1x64xf32>
    %142 = arith.addf %140, %141 : vector<1x64xf32>
    %cst_103 = arith.constant 0.000000e+00 : f32
    %143 = vector.broadcast %cst_103 : f32 to vector<1x64xf32>
    %144 = arith.maximumf %142, %143 : vector<1x64xf32>
    %145 = arith.truncf %144 : vector<1x64xf32> to vector<1x64xbf16>
    %c0_104 = arith.constant 0 : index
    %c0_105 = arith.constant 0 : index
    %146 = vector.load %arg14[%c0_104, %c0_105] : memref<64x4xbf16, #tpu.memory_space<vmem>>, vector<64x4xbf16>
    %cst_106 = arith.constant dense<0.000000e+00> : vector<1x4xf32>
    %147 = tpu.matmul %145, %146, %cst_106 {dimension_numbers = #tpu.dot_dimension_numbers<[1], [0], [0], [1], [0, 0, 1, 1], [], []>} : vector<1x64xbf16>, vector<64x4xbf16>, vector<1x4xf32> -> vector<1x4xf32>
    %c0_107 = arith.constant 0 : index
    %c0_108 = arith.constant 0 : index
    %148 = vector.load %arg15[%c0_107, %c0_108] : memref<1x4xf32, #tpu.memory_space<vmem>>, vector<1x4xf32>
    %149 = arith.addf %147, %148 : vector<1x4xf32>
    %150 = math.absf %149 : vector<1x4xf32>
    %cst_109 = arith.constant 0.000000e+00 : f32
    %151 = vector.broadcast %cst_109 : f32 to vector<1x4xf32>
    %152 = arith.subf %151, %150 : vector<1x4xf32>
    %153 = math.exp %152 : vector<1x4xf32>
    %cst_110 = arith.constant 0.000000e+00 : f32
    %154 = vector.broadcast %cst_110 : f32 to vector<1x4xf32>
    %155 = arith.cmpf oge, %149, %154 : vector<1x4xf32>
    %cst_111 = arith.constant 1.000000e+00 : f32
    %156 = vector.broadcast %cst_111 : f32 to vector<1x4xf32>
    %157 = arith.addf %156, %153 : vector<1x4xf32>
    %cst_112 = arith.constant 1.000000e+00 : f32
    %158 = vector.broadcast %cst_112 : f32 to vector<1x4xf32>
    %159 = arith.divf %158, %157 : vector<1x4xf32>
    %cst_113 = arith.constant 1.000000e+00 : f32
    %160 = vector.broadcast %cst_113 : f32 to vector<1x4xf32>
    %161 = arith.addf %160, %153 : vector<1x4xf32>
    %162 = arith.divf %153, %161 : vector<1x4xf32>
    %163 = arith.select %155, %159, %162 : vector<1x4xi1>, vector<1x4xf32>
    %c0_114 = arith.constant 0 : index
    %c0_115 = arith.constant 0 : index
    %c0_116 = arith.constant 0 : index
    %164 = vector.load %arg16[%c0_114, %c0_115, %c0_116] : memref<1x1x4xf32, #tpu.memory_space<vmem>>, vector<1x1x4xf32>
    %165 = vector.shape_cast %164 : vector<1x1x4xf32> to vector<1x4xf32>
    %166 = vector.shape_cast %163 : vector<1x4xf32> to vector<1x1x4xf32>
    tpu.vector_store %arg16[%c0_114, %c0_115, %c0_116], %166 {strides = array<i32>} : memref<1x1x4xf32, #tpu.memory_space<vmem>>, vector<1x1x4xf32>,
    return
  }
  func.func @transform_0(%arg0: i32) -> (i32, i32, i32) {
    %c0_i32 = arith.constant 0 : i32
    %c0_i32_0 = arith.constant 0 : i32
    %c0_i32_1 = arith.constant 0 : i32
    return %arg0, %c0_i32, %c0_i32_0 : i32, i32, i32
  }
  func.func @transform_1(%arg0: i32) -> (i32, i32, i32) {
    %c0_i32 = arith.constant 0 : i32
    %c0_i32_0 = arith.constant 0 : i32
    %c0_i32_1 = arith.constant 0 : i32
    %c0_i32_2 = arith.constant 0 : i32
    return %c0_i32, %c0_i32_0, %c0_i32_1 : i32, i32, i32
  }
  func.func @transform_2(%arg0: i32) -> (i32, i32) {
    %c0_i32 = arith.constant 0 : i32
    %c0_i32_0 = arith.constant 0 : i32
    %c0_i32_1 = arith.constant 0 : i32
    return %c0_i32, %c0_i32_0 : i32, i32
  }
  func.func @transform_3(%arg0: i32) -> (i32, i32, i32) {
    %c0_i32 = arith.constant 0 : i32
    %c0_i32_0 = arith.constant 0 : i32
    %c0_i32_1 = arith.constant 0 : i32
    %c0_i32_2 = arith.constant 0 : i32
    return %c0_i32, %c0_i32_0, %c0_i32_1 : i32, i32, i32
  }
  func.func @transform_4(%arg0: i32) -> (i32, i32) {
    %c0_i32 = arith.constant 0 : i32
    %c0_i32_0 = arith.constant 0 : i32
    %c0_i32_1 = arith.constant 0 : i32
    return %c0_i32, %c0_i32_0 : i32, i32
  }
  func.func @transform_5(%arg0: i32) -> (i32, i32, i32) {
    %c0_i32 = arith.constant 0 : i32
    %c0_i32_0 = arith.constant 0 : i32
    %c0_i32_1 = arith.constant 0 : i32
    %c0_i32_2 = arith.constant 0 : i32
    return %c0_i32, %c0_i32_0, %c0_i32_1 : i32, i32, i32
  }
  func.func @transform_6(%arg0: i32) -> (i32, i32) {
    %c0_i32 = arith.constant 0 : i32
    %c0_i32_0 = arith.constant 0 : i32
    %c0_i32_1 = arith.constant 0 : i32
    return %c0_i32, %c0_i32_0 : i32, i32
  }
  func.func @transform_7(%arg0: i32) -> (i32, i32) {
    %c0_i32 = arith.constant 0 : i32
    %c0_i32_0 = arith.constant 0 : i32
    %c0_i32_1 = arith.constant 0 : i32
    return %c0_i32, %c0_i32_0 : i32, i32
  }
  func.func @transform_8(%arg0: i32) -> (i32, i32) {
    %c0_i32 = arith.constant 0 : i32
    %c0_i32_0 = arith.constant 0 : i32
    %c0_i32_1 = arith.constant 0 : i32
    return %c0_i32, %c0_i32_0 : i32, i32
  }
  func.func @transform_9(%arg0: i32) -> (i32, i32) {
    %c0_i32 = arith.constant 0 : i32
    %c0_i32_0 = arith.constant 0 : i32
    %c0_i32_1 = arith.constant 0 : i32
    return %c0_i32, %c0_i32_0 : i32, i32
  }
  func.func @transform_10(%arg0: i32) -> (i32, i32) {
    %c0_i32 = arith.constant 0 : i32
    %c0_i32_0 = arith.constant 0 : i32
    %c0_i32_1 = arith.constant 0 : i32
    return %c0_i32, %c0_i32_0 : i32, i32
  }
  func.func @transform_11(%arg0: i32) -> (i32, i32) {
    %c0_i32 = arith.constant 0 : i32
    %c0_i32_0 = arith.constant 0 : i32
    %c0_i32_1 = arith.constant 0 : i32
    return %c0_i32, %c0_i32_0 : i32, i32
  }
  func.func @transform_12(%arg0: i32) -> (i32, i32) {
    %c0_i32 = arith.constant 0 : i32
    %c0_i32_0 = arith.constant 0 : i32
    %c0_i32_1 = arith.constant 0 : i32
    return %c0_i32, %c0_i32_0 : i32, i32
  }
  func.func @transform_13(%arg0: i32) -> (i32, i32) {
    %c0_i32 = arith.constant 0 : i32
    %c0_i32_0 = arith.constant 0 : i32
    %c0_i32_1 = arith.constant 0 : i32
    return %c0_i32, %c0_i32_0 : i32, i32
  }
  func.func @transform_14(%arg0: i32) -> (i32, i32) {
    %c0_i32 = arith.constant 0 : i32
    %c0_i32_0 = arith.constant 0 : i32
    %c0_i32_1 = arith.constant 0 : i32
    return %c0_i32, %c0_i32_0 : i32, i32
  }
  func.func @transform_15(%arg0: i32) -> (i32, i32, i32) {
    %c0_i32 = arith.constant 0 : i32
    %c0_i32_0 = arith.constant 0 : i32
    %c0_i32_1 = arith.constant 0 : i32
    return %arg0, %c0_i32, %c0_i32_0 : i32, i32, i32
  }
}

</mosaic_0001>

<llo_original>
// kernel: weather_cnn_forward.1
$region0: #{weather_cnn_forward.1}
  #allocation0 [shape = 'u32[]', space=smem, size = 0x4, offset = 0x4, fixed_abs, tag = 'smem constant byte address 0x4 - core index']
  #allocation1 [shape = 'u32[144,128]{1,0:T(1,128)}', space=vmem, size = 0x12000, scoped, tag = 'internal scratch']
  #allocation2 [shape = 'f32[6,384]{1,0:T(8,128)}', space=vmem, size = 0x3000, scoped, tag = 'scratch operand']
  #allocation3 [shape = 'f32[3,384]{1,0:T(4,128)}', space=vmem, size = 0x1800, scoped, tag = 'scratch operand']
  %s0 = inlined_call_operand.vmem [shape: bf16[2,10,120], index: 0, kind: input, shape index: {}]
  %s1 = inlined_call_operand.hbm [shape: bf16[3,120,512], index: 1, kind: input, shape index: {}]
  %s2 = inlined_call_operand.hbm [shape: f32[1,512], index: 2, kind: input, shape index: {}]
  %s3 = inlined_call_operand.hbm [shape: bf16[3,384,512], index: 3, kind: input, shape index: {}]
  %s4 = inlined_call_operand.hbm [shape: f32[1,512], index: 4, kind: input, shape index: {}]
  %s5 = inlined_call_operand.vmem [shape: bf16[2,384,512], index: 5, kind: input, shape index: {}]
  %s6 = inlined_call_operand.hbm [shape: f32[1,512], index: 6, kind: input, shape index: {}]
  %s7 = inlined_call_operand.hbm [shape: bf16[64,512], index: 7, kind: input, shape index: {}]
  %s8 = inlined_call_operand.hbm [shape: f32[1,512], index: 8, kind: input, shape index: {}]
  %s9 = inlined_call_operand.hbm [shape: bf16[512,128], index: 9, kind: input, shape index: {}]
  %s10 = inlined_call_operand.hbm [shape: f32[1,128], index: 10, kind: input, shape index: {}]
  %s11 = inlined_call_operand.vmem [shape: bf16[128,64], index: 11, kind: input, shape index: {}]
  %s12 = inlined_call_operand.hbm [shape: f32[1,64], index: 12, kind: input, shape index: {}]
  %s13 = inlined_call_operand.vmem [shape: bf16[64,4], index: 13, kind: input, shape index: {}]
  %s14 = inlined_call_operand.hbm [shape: f32[1,4], index: 14, kind: input, shape index: {}]
  %s15 = inlined_call_operand.hbm [shape: f32[2,1,4], index: 15, kind: output, shape index: {}]
  %s16 = sld [smem:[#allocation0]]
  $region137: #{weather_cnn_forward.1} parent=0
    _
  %s18 = ssub.s32 1, %s16
  %s19 = scalar_select 0, %s18, %s16
  $region1: #{weather_cnn_forward.1} parent=0
    #allocation4 [shape = 'u8[368640]{0}', space=vmem, size = 0x5a000, scoped, tag = 'input window, operand 1, single buffered']
    #allocation5 [shape = 's32[2]{0}', space=sflag, size = 0x8, scoped, tag = 'scoped memory for weather_cnn_forward.1']
    #allocation6 [shape = 's32[2]{0}', space=sflag, size = 0x8, scoped, tag = 'scoped memory for weather_cnn_forward.1']
    #allocation7 [shape = 'u8[2048]{0}', space=vmem, size = 0x800, scoped, tag = 'input window, operand 2, single buffered']
    #allocation8 [shape = 's32[1]{0}', space=sflag, size = 0x4, scoped, tag = 'scoped memory for weather_cnn_forward.1']
    #allocation9 [shape = 'u8[1179648]{0}', space=vmem, size = 0x120000, scoped, tag = 'input window, operand 3, single buffered']
    #allocation10 [shape = 'u8[2048]{0}', space=vmem, size = 0x800, scoped, tag = 'input window, operand 4, single buffered']
    #allocation11 [shape = 's32[1]{0}', space=sflag, size = 0x4, scoped, tag = 'scoped memory for weather_cnn_forward.1']
    #allocation12 [shape = 'u8[2048]{0}', space=vmem, size = 0x800, scoped, tag = 'input window, operand 6, single buffered']
    #allocation13 [shape = 'u8[65536]{0}', space=vmem, size = 0x10000, scoped, tag = 'input window, operand 7, single buffered']
    #allocation14 [shape = 's32[1]{0}', space=sflag, size = 0x4, scoped, tag = 'scoped memory for weather_cnn_forward.1']
    #allocation15 [shape = 'u8[2048]{0}', space=vmem, size = 0x800, scoped, tag = 'input window, operand 8, single buffered']
    #allocation16 [shape = 'u8[131072]{0}', space=vmem, size = 0x20000, scoped, tag = 'input window, operand 9, single buffered']
    #allocation17 [shape = 's32[1]{0}', space=sflag, size = 0x4, scoped, tag = 'scoped memory for weather_cnn_forward.1']
    #allocation18 [shape = 'u8[512]{0}', space=vmem, size = 0x400, scoped, tag = 'input window, operand 10, single buffered']
    #allocation19 [shape = 'u8[512]{0}', space=vmem, size = 0x400, scoped, tag = 'input window, operand 12, single buffered']
    #allocation20 [shape = 's32[1]{0}', space=sflag, size = 0x4, scoped, tag = 'scoped memory for weather_cnn_forward.1']
    #allocation21 [shape = 'u8[512]{0}', space=vmem, size = 0x400, scoped, tag = 'input window, operand 14, single buffered']
    #allocation22 [shape = 'u8[1024]{0}', space=vmem, size = 0x400, scoped, tag = 'output window, operand 0']
    %20 = vsyncpa [#allocation5], 0
    %21 = vsyncpa [#allocation8], 0
    %22 = vsyncpa [#allocation11], 0
    %23 = vsyncpa [#allocation14], 0
    %24 = vsyncpa [#allocation17], 0
    %25 = vsyncpa [#allocation20], 0
    %26 = vsyncpa [#allocation6], 0
    %s27 = scalar_lea.sflag [#allocation6], 1
    %28 = vsyncpa %s27, 0
    loop: start=0, step=1, limit=4
    $region2: #{weather_cnn_forward.1} parent=1 // loop_pre_header
      _
    $region3: #{weather_cnn_forward.1} parent=1 // loop_header
      %s30 = sphi 0, %s34
      %p31 = scmp.ge.s32.totalorder %s30, 4
      %s40 = sphi 0, %s42
      %s43 = sphi 0, %s40
      %s44 = sphi 0, %s43
      %s60 = sphi 0, %s44
      %s64 = sphi 0, %s64
      %s66 = sphi 0, %s64
      %s67 = sphi 0, %s66
      %s81 = sphi 0, %s67
      %s85 = sphi 0, %s85
      %s87 = sphi 0, %s85
      %s88 = sphi 0, %s87
      %s102 = sphi 0, %s88
      %s106 = sphi 0, %s106
      %s108 = sphi 0, %s106
      %s109 = sphi 0, %s108
      %s123 = sphi 0, %s109
      %s127 = sphi 0, %s127
      %s129 = sphi 0, %s127
      %s130 = sphi 0, %s129
      %s144 = sphi 0, %s130
      %s148 = sphi 0, %s148
      %s150 = sphi 0, %s148
      %s151 = sphi 0, %s150
      %s165 = sphi 0, %s151
      %s169 = sphi 0, %s169
      %s171 = sphi 0, %s169
      %s172 = sphi 0, %s171
      %s186 = sphi 0, %s172
      %s190 = sphi 0, %s190
      %s192 = sphi 0, %s190
      %s193 = sphi 0, %s192
      %s207 = sphi 0, %s193
      %s211 = sphi 0, %s211
      %s213 = sphi 0, %s211
      %s214 = sphi 0, %s213
      %s228 = sphi 0, %s214
      %s232 = sphi 0, %s232
      %s234 = sphi 0, %s232
      %s235 = sphi 0, %s234
      %s249 = sphi 0, %s235
      %s253 = sphi 0, %s253
      %s255 = sphi 0, %s253
      %s256 = sphi 0, %s255
      %s270 = sphi 0, %s256
      %s274 = sphi 0, %s274
      %s276 = sphi 0, %s274
      %s277 = sphi 0, %s276
      %s291 = sphi 0, %s277
      %s295 = sphi 0, %s295
      %s297 = sphi 0, %s295
      %s298 = sphi 0, %s297
      %s312 = sphi 0, %s298
      %s316 = sphi 0, %s316
      %s318 = sphi 0, %s316
      %s319 = sphi 0, %s318
      %s333 = sphi 0, %s319
      %s337 = sphi 0, %s337
      %s339 = sphi 0, %s337
      %s340 = sphi 0, %s339
      %s354 = sphi 0, %s340
      %s360 = sphi 0, %s362
      %s363 = sphi 0, %s360
      %s364 = sphi 0, %s363
      %s380 = sphi 0, %s364
    $region4: #{weather_cnn_forward.1} parent=1 // loop_header_branch
      %33 = sbr.rel (%p31) target = $region8
    $region5: #{weather_cnn_forward.1} parent=1 // loop_body
      %s35 = ssub.s32 %s30, 1
      %s36 = ssub.s32 %s30, 2
      %s37 = sadd.s32 %s30, 1
      %s38 = ssub.s32 %s30, %s37
      %p39 = scmp.eq.s32.totalorder %s38, 0
      %s41 = sadd.s32 %s40, 1
      %s42 = scalar_select %p39, %s40, %s41
      %p45 = pneg %p39
      %p46 = scmp.eq.s32.totalorder %s30, 1
      %p47 = por %p45, %p46
      %p48 = scmp.ne.s32.totalorder %s40, %s43
      %p49 = scmp.eq.s32.totalorder %s30, 0
      %p50 = por %p48, %p49
      %p51 = scmp.ne.s32.totalorder %s40, %s43
      %p52 = scmp.eq.s32.totalorder %s35, 1
      %p53 = por %p51, %p52
      %p54 = scmp.ne.s32.totalorder %s43, %s44
      %p55 = scmp.eq.s32.totalorder %s35, 0
      %p56 = por %p54, %p55
      %p57 = scmp.ne.s32.totalorder %s43, %s44
      %p58 = scmp.eq.s32.totalorder %s36, 1
      %p59 = por %p57, %p58
      %p61 = scmp.ne.s32.totalorder %s44, %s60
      %p62 = scmp.eq.s32.totalorder %s36, 0
      %p63 = por %p61, %p62
      %s65 = sadd.s32 %s64, 1
      %p68 = scmp.eq.s32.totalorder %s30, 1
      %p69 = scmp.ne.s32.totalorder %s64, %s66
      %p70 = scmp.eq.s32.totalorder %s30, 0
      %p71 = por %p69, %p70
      %p72 = scmp.ne.s32.totalorder %s64, %s66
      %p73 = scmp.eq.s32.totalorder %s35, 1
      %p74 = por %p72, %p73
      %p75 = scmp.ne.s32.totalorder %s66, %s67
      %p76 = scmp.eq.s32.totalorder %s35, 0
      %p77 = por %p75, %p76
      %p78 = scmp.ne.s32.totalorder %s66, %s67
      %p79 = scmp.eq.s32.totalorder %s36, 1
      %p80 = por %p78, %p79
      %p82 = scmp.ne.s32.totalorder %s67, %s81
      %p83 = scmp.eq.s32.totalorder %s36, 0
      %p84 = por %p82, %p83
      %s86 = sadd.s32 %s85, 1
      %p89 = scmp.eq.s32.totalorder %s30, 1
      %p90 = scmp.ne.s32.totalorder %s85, %s87
      %p91 = scmp.eq.s32.totalorder %s30, 0
      %p92 = por %p90, %p91
      %p93 = scmp.ne.s32.totalorder %s85, %s87
      %p94 = scmp.eq.s32.totalorder %s35, 1
      %p95 = por %p93, %p94
      %p96 = scmp.ne.s32.totalorder %s87, %s88
      %p97 = scmp.eq.s32.totalorder %s35, 0
      %p98 = por %p96, %p97
      %p99 = scmp.ne.s32.totalorder %s87, %s88
      %p100 = scmp.eq.s32.totalorder %s36, 1
      %p101 = por %p99, %p100
      %p103 = scmp.ne.s32.totalorder %s88, %s102
      %p104 = scmp.eq.s32.totalorder %s36, 0
      %p105 = por %p103, %p104
      %s107 = sadd.s32 %s106, 1
      %p110 = scmp.eq.s32.totalorder %s30, 1
      %p111 = scmp.ne.s32.totalorder %s106, %s108
      %p112 = scmp.eq.s32.totalorder %s30, 0
      %p113 = por %p111, %p112
      %p114 = scmp.ne.s32.totalorder %s106, %s108
      %p115 = scmp.eq.s32.totalorder %s35, 1
      %p116 = por %p114, %p115
      %p117 = scmp.ne.s32.totalorder %s108, %s109
      %p118 = scmp.eq.s32.totalorder %s35, 0
      %p119 = por %p117, %p118
      %p120 = scmp.ne.s32.totalorder %s108, %s109
      %p121 = scmp.eq.s32.totalorder %s36, 1
      %p122 = por %p120, %p121
      %p124 = scmp.ne.s32.totalorder %s109, %s123
      %p125 = scmp.eq.s32.totalorder %s36, 0
      %p126 = por %p124, %p125
      %s128 = sadd.s32 %s127, 1
      %p131 = scmp.eq.s32.totalorder %s30, 1
      %p132 = scmp.ne.s32.totalorder %s127, %s129
      %p133 = scmp.eq.s32.totalorder %s30, 0
      %p134 = por %p132, %p133
      %p135 = scmp.ne.s32.totalorder %s127, %s129
      %p136 = scmp.eq.s32.totalorder %s35, 1
      %p137 = por %p135, %p136
      %p138 = scmp.ne.s32.totalorder %s129, %s130
      %p139 = scmp.eq.s32.totalorder %s35, 0
      %p140 = por %p138, %p139
      %p141 = scmp.ne.s32.totalorder %s129, %s130
      %p142 = scmp.eq.s32.totalorder %s36, 1
      %p143 = por %p141, %p142
      %p145 = scmp.ne.s32.totalorder %s130, %s144
      %p146 = scmp.eq.s32.totalorder %s36, 0
      %p147 = por %p145, %p146
      %s149 = sadd.s32 %s148, 1
      %p152 = scmp.eq.s32.totalorder %s30, 1
      %p153 = scmp.ne.s32.totalorder %s148, %s150
      %p154 = scmp.eq.s32.totalorder %s30, 0
      %p155 = por %p153, %p154
      %p156 = scmp.ne.s32.totalorder %s148, %s150
      %p157 = scmp.eq.s32.totalorder %s35, 1
      %p158 = por %p156, %p157
      %p159 = scmp.ne.s32.totalorder %s150, %s151
      %p160 = scmp.eq.s32.totalorder %s35, 0
      %p161 = por %p159, %p160
      %p162 = scmp.ne.s32.totalorder %s150, %s151
      %p163 = scmp.eq.s32.totalorder %s36, 1
      %p164 = por %p162, %p163
      %p166 = scmp.ne.s32.totalorder %s151, %s165
      %p167 = scmp.eq.s32.totalorder %s36, 0
      %p168 = por %p166, %p167
      %s170 = sadd.s32 %s169, 1
      %p173 = scmp.eq.s32.totalorder %s30, 1
      %p174 = scmp.ne.s32.totalorder %s169, %s171
      %p175 = scmp.eq.s32.totalorder %s30, 0
      %p176 = por %p174, %p175
      %p177 = scmp.ne.s32.totalorder %s169, %s171
      %p178 = scmp.eq.s32.totalorder %s35, 1
      %p179 = por %p177, %p178
      %p180 = scmp.ne.s32.totalorder %s171, %s172
      %p181 = scmp.eq.s32.totalorder %s35, 0
      %p182 = por %p180, %p181
      %p183 = scmp.ne.s32.totalorder %s171, %s172
      %p184 = scmp.eq.s32.totalorder %s36, 1
      %p185 = por %p183, %p184
      %p187 = scmp.ne.s32.totalorder %s172, %s186
      %p188 = scmp.eq.s32.totalorder %s36, 0
      %p189 = por %p187, %p188
      %s191 = sadd.s32 %s190, 1
      %p194 = scmp.eq.s32.totalorder %s30, 1
      %p195 = scmp.ne.s32.totalorder %s190, %s192
      %p196 = scmp.eq.s32.totalorder %s30, 0
      %p197 = por %p195, %p196
      %p198 = scmp.ne.s32.totalorder %s190, %s192
      %p199 = scmp.eq.s32.totalorder %s35, 1
      %p200 = por %p198, %p199
      %p201 = scmp.ne.s32.totalorder %s192, %s193
      %p202 = scmp.eq.s32.totalorder %s35, 0
      %p203 = por %p201, %p202
      %p204 = scmp.ne.s32.totalorder %s192, %s193
      %p205 = scmp.eq.s32.totalorder %s36, 1
      %p206 = por %p204, %p205
      %p208 = scmp.ne.s32.totalorder %s193, %s207
      %p209 = scmp.eq.s32.totalorder %s36, 0
      %p210 = por %p208, %p209
      %s212 = sadd.s32 %s211, 1
      %p215 = scmp.eq.s32.totalorder %s30, 1
      %p216 = scmp.ne.s32.totalorder %s211, %s213
      %p217 = scmp.eq.s32.totalorder %s30, 0
      %p218 = por %p216, %p217
      %p219 = scmp.ne.s32.totalorder %s211, %s213
      %p220 = scmp.eq.s32.totalorder %s35, 1
      %p221 = por %p219, %p220
      %p222 = scmp.ne.s32.totalorder %s213, %s214
      %p223 = scmp.eq.s32.totalorder %s35, 0
      %p224 = por %p222, %p223
      %p225 = scmp.ne.s32.totalorder %s213, %s214
      %p226 = scmp.eq.s32.totalorder %s36, 1
      %p227 = por %p225, %p226
      %p229 = scmp.ne.s32.totalorder %s214, %s228
      %p230 = scmp.eq.s32.totalorder %s36, 0
      %p231 = por %p229, %p230
      %s233 = sadd.s32 %s232, 1
      %p236 = scmp.eq.s32.totalorder %s30, 1
      %p237 = scmp.ne.s32.totalorder %s232, %s234
      %p238 = scmp.eq.s32.totalorder %s30, 0
      %p239 = por %p237, %p238
      %p240 = scmp.ne.s32.totalorder %s232, %s234
      %p241 = scmp.eq.s32.totalorder %s35, 1
      %p242 = por %p240, %p241
      %p243 = scmp.ne.s32.totalorder %s234, %s235
      %p244 = scmp.eq.s32.totalorder %s35, 0
      %p245 = por %p243, %p244
      %p246 = scmp.ne.s32.totalorder %s234, %s235
      %p247 = scmp.eq.s32.totalorder %s36, 1
      %p248 = por %p246, %p247
      %p250 = scmp.ne.s32.totalorder %s235, %s249
      %p251 = scmp.eq.s32.totalorder %s36, 0
      %p252 = por %p250, %p251
      %s254 = sadd.s32 %s253, 1
      %p257 = scmp.eq.s32.totalorder %s30, 1
      %p258 = scmp.ne.s32.totalorder %s253, %s255
      %p259 = scmp.eq.s32.totalorder %s30, 0
      %p260 = por %p258, %p259
      %p261 = scmp.ne.s32.totalorder %s253, %s255
      %p262 = scmp.eq.s32.totalorder %s35, 1
      %p263 = por %p261, %p262
      %p264 = scmp.ne.s32.totalorder %s255, %s256
      %p265 = scmp.eq.s32.totalorder %s35, 0
      %p266 = por %p264, %p265
      %p267 = scmp.ne.s32.totalorder %s255, %s256
      %p268 = scmp.eq.s32.totalorder %s36, 1
      %p269 = por %p267, %p268
      %p271 = scmp.ne.s32.totalorder %s256, %s270
      %p272 = scmp.eq.s32.totalorder %s36, 0
      %p273 = por %p271, %p272
      %s275 = sadd.s32 %s274, 1
      %p278 = scmp.eq.s32.totalorder %s30, 1
      %p279 = scmp.ne.s32.totalorder %s274, %s276
      %p280 = scmp.eq.s32.totalorder %s30, 0
      %p281 = por %p279, %p280
      %p282 = scmp.ne.s32.totalorder %s274, %s276
      %p283 = scmp.eq.s32.totalorder %s35, 1
      %p284 = por %p282, %p283
      %p285 = scmp.ne.s32.totalorder %s276, %s277
      %p286 = scmp.eq.s32.totalorder %s35, 0
      %p287 = por %p285, %p286
      %p288 = scmp.ne.s32.totalorder %s276, %s277
      %p289 = scmp.eq.s32.totalorder %s36, 1
      %p290 = por %p288, %p289
      %p292 = scmp.ne.s32.totalorder %s277, %s291
      %p293 = scmp.eq.s32.totalorder %s36, 0
      %p294 = por %p292, %p293
      %s296 = sadd.s32 %s295, 1
      %p299 = scmp.eq.s32.totalorder %s30, 1
      %p300 = scmp.ne.s32.totalorder %s295, %s297
      %p301 = scmp.eq.s32.totalorder %s30, 0
      %p302 = por %p300, %p301
      %p303 = scmp.ne.s32.totalorder %s295, %s297
      %p304 = scmp.eq.s32.totalorder %s35, 1
      %p305 = por %p303, %p304
      %p306 = scmp.ne.s32.totalorder %s297, %s298
      %p307 = scmp.eq.s32.totalorder %s35, 0
      %p308 = por %p306, %p307
      %p309 = scmp.ne.s32.totalorder %s297, %s298
      %p310 = scmp.eq.s32.totalorder %s36, 1
      %p311 = por %p309, %p310
      %p313 = scmp.ne.s32.totalorder %s298, %s312
      %p314 = scmp.eq.s32.totalorder %s36, 0
      %p315 = por %p313, %p314
      %s317 = sadd.s32 %s316, 1
      %p320 = scmp.eq.s32.totalorder %s30, 1
      %p321 = scmp.ne.s32.totalorder %s316, %s318
      %p322 = scmp.eq.s32.totalorder %s30, 0
      %p323 = por %p321, %p322
      %p324 = scmp.ne.s32.totalorder %s316, %s318
      %p325 = scmp.eq.s32.totalorder %s35, 1
      %p326 = por %p324, %p325
      %p327 = scmp.ne.s32.totalorder %s318, %s319
      %p328 = scmp.eq.s32.totalorder %s35, 0
      %p329 = por %p327, %p328
      %p330 = scmp.ne.s32.totalorder %s318, %s319
      %p331 = scmp.eq.s32.totalorder %s36, 1
      %p332 = por %p330, %p331
      %p334 = scmp.ne.s32.totalorder %s319, %s333
      %p335 = scmp.eq.s32.totalorder %s36, 0
      %p336 = por %p334, %p335
      %s338 = sadd.s32 %s337, 1
      %p341 = scmp.eq.s32.totalorder %s30, 1
      %p342 = scmp.ne.s32.totalorder %s337, %s339
      %p343 = scmp.eq.s32.totalorder %s30, 0
      %p344 = por %p342, %p343
      %p345 = scmp.ne.s32.totalorder %s337, %s339
      %p346 = scmp.eq.s32.totalorder %s35, 1
      %p347 = por %p345, %p346
      %p348 = scmp.ne.s32.totalorder %s339, %s340
      %p349 = scmp.eq.s32.totalorder %s35, 0
      %p350 = por %p348, %p349
      %p351 = scmp.ne.s32.totalorder %s339, %s340
      %p352 = scmp.eq.s32.totalorder %s36, 1
      %p353 = por %p351, %p352
      %p355 = scmp.ne.s32.totalorder %s340, %s354
      %p356 = scmp.eq.s32.totalorder %s36, 0
      %p357 = por %p355, %p356
      %s358 = ssub.s32 %s30, %s37
      %p359 = scmp.eq.s32.totalorder %s358, 0
      %s361 = sadd.s32 %s360, 1
      %s362 = scalar_select %p359, %s360, %s361
      %p365 = pneg %p359
      %p366 = scmp.eq.s32.totalorder %s30, 1
      %p367 = por %p365, %p366
      %p368 = scmp.ne.s32.totalorder %s360, %s363
      %p369 = scmp.eq.s32.totalorder %s30, 0
      %p370 = por %p368, %p369
      %p371 = scmp.ne.s32.totalorder %s360, %s363
      %p372 = scmp.eq.s32.totalorder %s35, 1
      %p373 = por %p371, %p372
      %p374 = scmp.ne.s32.totalorder %s363, %s364
      %p375 = scmp.eq.s32.totalorder %s35, 0
      %p376 = por %p374, %p375
      %p377 = scmp.ne.s32.totalorder %s363, %s364
      %p378 = scmp.eq.s32.totalorder %s36, 1
      %p379 = por %p377, %p378
      %p381 = scmp.ne.s32.totalorder %s364, %s380
      %p382 = scmp.eq.s32.totalorder %s36, 0
      %p383 = por %p381, %p382
      %p384 = scmp.le.s32.totalorder 1, %s30
      %p385 = scmp.lt.s32.totalorder %s30, 3
      %p386 = pnand %p384, %p385
      %p387 = pneg %p386
      // Predicated region
      $region9: #{weather_cnn_forward.1} parent=5 // pred_check
        _
      $region10: #{weather_cnn_forward.1} parent=5 // pred_check_branch
        %389 = sbr.rel (%p386) target = $region12
      $region11: #{weather_cnn_forward.1} parent=5 // pred_region
        %s390 = ssub.s32 %s30, 1
        // Predicated region
        $region13: #{weather_cnn_forward.1} parent=11 // pred_check
          %p391 = pneg %p77
        $region14: #{weather_cnn_forward.1} parent=11 // pred_check_branch
          %393 = sbr.rel (%p391) target = $region16
        $region15: #{weather_cnn_forward.1} parent=11 // pred_region
          %s395 = ssub.s32 11520, 11520
          %396 = vsyncadd [#allocation5], %s395
          %s397 = sshll.u32 [#allocation4], 4
          %s398 = int_to_ptr.vmem [resolvable:$true] %s397
          %403 = dma.hbm_to_vmem [thread:$0]  %s1, 11520, %s398, [#allocation5], 256, 256, 16
        $region16: #{weather_cnn_forward.1} parent=11 // pred_fallthru
          _
        // Predicated region
        $region17: #{weather_cnn_forward.1} parent=11 // pred_check
          %p404 = pneg %p98
        $region18: #{weather_cnn_forward.1} parent=11 // pred_check_branch
          %406 = sbr.rel (%p404) target = $region20
        $region19: #{weather_cnn_forward.1} parent=11 // pred_region
          %s408 = ssub.s32 64, 64
          %409 = vsyncadd [#allocation8], %s408
          %s411 = sshll.u32 [#allocation7], 4
          %s412 = int_to_ptr.vmem [resolvable:$true] %s411
          %414 = dma.hbm_to_vmem [thread:$0]  %s2, 64, %s412, [#allocation8]
        $region20: #{weather_cnn_forward.1} parent=11 // pred_fallthru
          _
        // Predicated region
        $region21: #{weather_cnn_forward.1} parent=11 // pred_check
          %p415 = pneg %p119
        $region22: #{weather_cnn_forward.1} parent=11 // pred_check_branch
          %417 = sbr.rel (%p415) target = $region24
        $region23: #{weather_cnn_forward.1} parent=11 // pred_region
          %s419 = ssub.s32 36864, 36864
          %420 = vsyncadd [#allocation8], %s419
          %s421 = sshll.u32 [#allocation9], 4
          %s422 = int_to_ptr.vmem [resolvable:$true] %s421
          %427 = dma.hbm_to_vmem [thread:$0]  %s3, 36864, %s422, [#allocation8], 256, 256, 16
        $region24: #{weather_cnn_forward.1} parent=11 // pred_fallthru
          _
        // Predicated region
        $region25: #{weather_cnn_forward.1} parent=11 // pred_check
          %p428 = pneg %p140
        $region26: #{weather_cnn_forward.1} parent=11 // pred_check_branch
          %430 = sbr.rel (%p428) target = $region28
        $region27: #{weather_cnn_forward.1} parent=11 // pred_region
          %s432 = ssub.s32 64, 64
          %433 = vsyncadd [#allocation11], %s432
          %s435 = sshll.u32 [#allocation10], 4
          %s436 = int_to_ptr.vmem [resolvable:$true] %s435
          %438 = dma.hbm_to_vmem [thread:$0]  %s4, 64, %s436, [#allocation11]
        $region28: #{weather_cnn_forward.1} parent=11 // pred_fallthru
          _
        // Predicated region
        $region29: #{weather_cnn_forward.1} parent=11 // pred_check
          %p439 = pneg %p161
        $region30: #{weather_cnn_forward.1} parent=11 // pred_check_branch
          %441 = sbr.rel (%p439) target = $region32
        $region31: #{weather_cnn_forward.1} parent=11 // pred_region
          _
        $region32: #{weather_cnn_forward.1} parent=11 // pred_fallthru
          _
        // Predicated region
        $region33: #{weather_cnn_forward.1} parent=11 // pred_check
          %p442 = pneg %p182
        $region34: #{weather_cnn_forward.1} parent=11 // pred_check_branch
          %444 = sbr.rel (%p442) target = $region36
        $region35: #{weather_cnn_forward.1} parent=11 // pred_region
          %s446 = ssub.s32 64, 64
          %447 = vsyncadd [#allocation11], %s446
          %s449 = sshll.u32 [#allocation12], 4
          %s450 = int_to_ptr.vmem [resolvable:$true] %s449
          %452 = dma.hbm_to_vmem [thread:$0]  %s6, 64, %s450, [#allocation11]
        $region36: #{weather_cnn_forward.1} parent=11 // pred_fallthru
          _
        // Predicated region
        $region37: #{weather_cnn_forward.1} parent=11 // pred_check
          %p453 = pneg %p203
        $region38: #{weather_cnn_forward.1} parent=11 // pred_check_branch
          %455 = sbr.rel (%p453) target = $region40
        $region39: #{weather_cnn_forward.1} parent=11 // pred_region
          %s457 = ssub.s32 2048, 2048
          %458 = vsyncadd [#allocation14], %s457
          %s459 = sshll.u32 [#allocation13], 4
          %s460 = int_to_ptr.vmem [resolvable:$true] %s459
          %465 = dma.hbm_to_vmem [thread:$0]  %s7, 2048, %s460, [#allocation14], 256, 256, 16
        $region40: #{weather_cnn_forward.1} parent=11 // pred_fallthru
          _
        // Predicated region
        $region41: #{weather_cnn_forward.1} parent=11 // pred_check
          %p466 = pneg %p224
        $region42: #{weather_cnn_forward.1} parent=11 // pred_check_branch
          %468 = sbr.rel (%p466) target = $region44
        $region43: #{weather_cnn_forward.1} parent=11 // pred_region
          %s470 = ssub.s32 64, 64
          %471 = vsyncadd [#allocation14], %s470
          %s473 = sshll.u32 [#allocation15], 4
          %s474 = int_to_ptr.vmem [resolvable:$true] %s473
          %476 = dma.hbm_to_vmem [thread:$0]  %s8, 64, %s474, [#allocation14]
        $region44: #{weather_cnn_forward.1} parent=11 // pred_fallthru
          _
        // Predicated region
        $region45: #{weather_cnn_forward.1} parent=11 // pred_check
          %p477 = pneg %p245
        $region46: #{weather_cnn_forward.1} parent=11 // pred_check_branch
          %479 = sbr.rel (%p477) target = $region48
        $region47: #{weather_cnn_forward.1} parent=11 // pred_region
          %s481 = ssub.s32 4096, 4096
          %482 = vsyncadd [#allocation17], %s481
          %s483 = sshll.u32 [#allocation16], 4
          %s484 = int_to_ptr.vmem [resolvable:$true] %s483
          %489 = dma.hbm_to_vmem [thread:$0]  %s9, 4096, %s484, [#allocation17], 64, 64, 4
        $region48: #{weather_cnn_forward.1} parent=11 // pred_fallthru
          _
        // Predicated region
        $region49: #{weather_cnn_forward.1} parent=11 // pred_check
          %p490 = pneg %p266
        $region50: #{weather_cnn_forward.1} parent=11 // pred_check_branch
          %492 = sbr.rel (%p490) target = $region52
        $region51: #{weather_cnn_forward.1} parent=11 // pred_region
          %s494 = ssub.s32 16, 16
          %495 = vsyncadd [#allocation17], %s494
          %s497 = sshll.u32 [#allocation18], 4
          %s498 = int_to_ptr.vmem [resolvable:$true] %s497
          %500 = dma.hbm_to_vmem [thread:$0]  %s10, 16, %s498, [#allocation17]
        $region52: #{weather_cnn_forward.1} parent=11 // pred_fallthru
          _
        // Predicated region
        $region53: #{weather_cnn_forward.1} parent=11 // pred_check
          %p501 = pneg %p287
        $region54: #{weather_cnn_forward.1} parent=11 // pred_check_branch
          %503 = sbr.rel (%p501) target = $region56
        $region55: #{weather_cnn_forward.1} parent=11 // pred_region
          _
        $region56: #{weather_cnn_forward.1} parent=11 // pred_fallthru
          _
        // Predicated region
        $region57: #{weather_cnn_forward.1} parent=11 // pred_check
          %p504 = pneg %p308
        $region58: #{weather_cnn_forward.1} parent=11 // pred_check_branch
          %506 = sbr.rel (%p504) target = $region60
        $region59: #{weather_cnn_forward.1} parent=11 // pred_region
          %s508 = ssub.s32 16, 16
          %509 = vsyncadd [#allocation20], %s508
          %s511 = sshll.u32 [#allocation19], 4
          %s512 = int_to_ptr.vmem [resolvable:$true] %s511
          %514 = dma.hbm_to_vmem [thread:$0]  %s12, 16, %s512, [#allocation20]
        $region60: #{weather_cnn_forward.1} parent=11 // pred_fallthru
          _
        // Predicated region
        $region61: #{weather_cnn_forward.1} parent=11 // pred_check
          %p515 = pneg %p329
        $region62: #{weather_cnn_forward.1} parent=11 // pred_check_branch
          %517 = sbr.rel (%p515) target = $region64
        $region63: #{weather_cnn_forward.1} parent=11 // pred_region
          _
        $region64: #{weather_cnn_forward.1} parent=11 // pred_fallthru
          _
        // Predicated region
        $region65: #{weather_cnn_forward.1} parent=11 // pred_check
          %p518 = pneg %p350
        $region66: #{weather_cnn_forward.1} parent=11 // pred_check_branch
          %520 = sbr.rel (%p518) target = $region68
        $region67: #{weather_cnn_forward.1} parent=11 // pred_region
          %s522 = ssub.s32 16, 16
          %523 = vsyncadd [#allocation20], %s522
          %s525 = sshll.u32 [#allocation21], 4
          %s526 = int_to_ptr.vmem [resolvable:$true] %s525
          %528 = dma.hbm_to_vmem [thread:$0]  %s14, 16, %s526, [#allocation20]
        $region68: #{weather_cnn_forward.1} parent=11 // pred_fallthru
          _
      $region12: #{weather_cnn_forward.1} parent=5 // pred_fallthru
        _
      %p529 = scmp.lt.s32.totalorder %s30, 2
      // Predicated region
      $region69: #{weather_cnn_forward.1} parent=5 // pred_check
        %p530 = pneg %p529
      $region70: #{weather_cnn_forward.1} parent=5 // pred_check_branch
        %532 = sbr.rel (%p530) target = $region72
      $region71: #{weather_cnn_forward.1} parent=5 // pred_region
        // Predicated region
        $region73: #{weather_cnn_forward.1} parent=71 // pred_check
          %p533 = pneg %p50
        $region74: #{weather_cnn_forward.1} parent=71 // pred_check_branch
          %535 = sbr.rel (%p533) target = $region76
        $region75: #{weather_cnn_forward.1} parent=71 // pred_region
          %p536 = scmp.lt.s32.totalorder %s30, 1
          %s537 = scalar_select %p536, %s30, 1
          %s538 = smul.addr %s537, 2
          %s539 = smul.addr %s538, 4
          %s540 = scalar_lea.vmem %s0, %s539
        $region76: #{weather_cnn_forward.1} parent=71 // pred_fallthru
          _
      $region72: #{weather_cnn_forward.1} parent=5 // pred_fallthru
        _
      %p541 = scmp.le.s32.totalorder 1, %s30
      %p542 = scmp.lt.s32.totalorder %s30, 3
      %p543 = pnand %p541, %p542
      %p544 = pneg %p543
      // Predicated region
      $region77: #{weather_cnn_forward.1} parent=5 // pred_check
        _
      $region78: #{weather_cnn_forward.1} parent=5 // pred_check_branch
        %546 = sbr.rel (%p543) target = $region80
      $region79: #{weather_cnn_forward.1} parent=5 // pred_region
        %s547 = ssub.s32 %s30, 1
        // Predicated region
        $region81: #{weather_cnn_forward.1} parent=79 // pred_check
          %p548 = pneg %p77
        $region82: #{weather_cnn_forward.1} parent=79 // pred_check_branch
          %550 = sbr.rel (%p548) target = $region84
        $region83: #{weather_cnn_forward.1} parent=79 // pred_region
          %551 = dma.done [#allocation5], 11520
        $region84: #{weather_cnn_forward.1} parent=79 // pred_fallthru
          _
        // Predicated region
        $region85: #{weather_cnn_forward.1} parent=79 // pred_check
          %p552 = pneg %p98
        $region86: #{weather_cnn_forward.1} parent=79 // pred_check_branch
          %554 = sbr.rel (%p552) target = $region88
        $region87: #{weather_cnn_forward.1} parent=79 // pred_region
          %555 = dma.done [#allocation8], 64
        $region88: #{weather_cnn_forward.1} parent=79 // pred_fallthru
          _
        // Predicated region
        $region89: #{weather_cnn_forward.1} parent=79 // pred_check
          %p556 = pneg %p119
        $region90: #{weather_cnn_forward.1} parent=79 // pred_check_branch
          %558 = sbr.rel (%p556) target = $region92
        $region91: #{weather_cnn_forward.1} parent=79 // pred_region
          %559 = dma.done [#allocation8], 36864
        $region92: #{weather_cnn_forward.1} parent=79 // pred_fallthru
          _
        // Predicated region
        $region93: #{weather_cnn_forward.1} parent=79 // pred_check
          %p560 = pneg %p140
        $region94: #{weather_cnn_forward.1} parent=79 // pred_check_branch
          %562 = sbr.rel (%p560) target = $region96
        $region95: #{weather_cnn_forward.1} parent=79 // pred_region
          %563 = dma.done [#allocation11], 64
        $region96: #{weather_cnn_forward.1} parent=79 // pred_fallthru
          _
        // Predicated region
        $region97: #{weather_cnn_forward.1} parent=79 // pred_check
          %p564 = pneg %p182
        $region98: #{weather_cnn_forward.1} parent=79 // pred_check_branch
          %566 = sbr.rel (%p564) target = $region100
        $region99: #{weather_cnn_forward.1} parent=79 // pred_region
          %567 = dma.done [#allocation11], 64
        $region100: #{weather_cnn_forward.1} parent=79 // pred_fallthru
          _
        // Predicated region
        $region101: #{weather_cnn_forward.1} parent=79 // pred_check
          %p568 = pneg %p203
        $region102: #{weather_cnn_forward.1} parent=79 // pred_check_branch
          %570 = sbr.rel (%p568) target = $region104
        $region103: #{weather_cnn_forward.1} parent=79 // pred_region
          %571 = dma.done [#allocation14], 2048
        $region104: #{weather_cnn_forward.1} parent=79 // pred_fallthru
          _
        // Predicated region
        $region105: #{weather_cnn_forward.1} parent=79 // pred_check
          %p572 = pneg %p224
        $region106: #{weather_cnn_forward.1} parent=79 // pred_check_branch
          %574 = sbr.rel (%p572) target = $region108
        $region107: #{weather_cnn_forward.1} parent=79 // pred_region
          %575 = dma.done [#allocation14], 64
        $region108: #{weather_cnn_forward.1} parent=79 // pred_fallthru
          _
        // Predicated region
        $region109: #{weather_cnn_forward.1} parent=79 // pred_check
          %p576 = pneg %p245
        $region110: #{weather_cnn_forward.1} parent=79 // pred_check_branch
          %578 = sbr.rel (%p576) target = $region112
        $region111: #{weather_cnn_forward.1} parent=79 // pred_region
          %579 = dma.done [#allocation17], 4096
        $region112: #{weather_cnn_forward.1} parent=79 // pred_fallthru
          _
        // Predicated region
        $region113: #{weather_cnn_forward.1} parent=79 // pred_check
          %p580 = pneg %p266
        $region114: #{weather_cnn_forward.1} parent=79 // pred_check_branch
          %582 = sbr.rel (%p580) target = $region116
        $region115: #{weather_cnn_forward.1} parent=79 // pred_region
          %583 = dma.done [#allocation17], 16
        $region116: #{weather_cnn_forward.1} parent=79 // pred_fallthru
          _
        // Predicated region
        $region117: #{weather_cnn_forward.1} parent=79 // pred_check
          %p584 = pneg %p308
        $region118: #{weather_cnn_forward.1} parent=79 // pred_check_branch
          %586 = sbr.rel (%p584) target = $region120
        $region119: #{weather_cnn_forward.1} parent=79 // pred_region
          %587 = dma.done [#allocation20], 16
        $region120: #{weather_cnn_forward.1} parent=79 // pred_fallthru
          _
        // Predicated region
        $region121: #{weather_cnn_forward.1} parent=79 // pred_check
          %p588 = pneg %p350
        $region122: #{weather_cnn_forward.1} parent=79 // pred_check_branch
          %590 = sbr.rel (%p588) target = $region124
        $region123: #{weather_cnn_forward.1} parent=79 // pred_region
          %591 = dma.done [#allocation20], 16
        $region124: #{weather_cnn_forward.1} parent=79 // pred_fallthru
          _
        %p592 = scmp.lt.s32.totalorder %s35, 1
        %s593 = scalar_select %p592, %s35, 1
        %s594 = smul.addr %s593, 2
        %s595 = smul.addr %s594, 4
        %s596 = scalar_lea.vmem %s0, %s595
        %p597 = pneg %p56
        %p598 = pneg %p53
        %p599 = pneg %p77
        %p600 = pneg %p74
        %p601 = pneg %p98
        %p602 = pneg %p95
        %p603 = pneg %p119
        %p604 = pneg %p116
        %p605 = pneg %p140
        %p606 = pneg %p137
        %p607 = pneg %p161
        %p608 = pneg %p158
        %p609 = pneg %p182
        %p610 = pneg %p179
        %p611 = pneg %p203
        %p612 = pneg %p200
        %p613 = pneg %p224
        %p614 = pneg %p221
        %p615 = pneg %p245
        %p616 = pneg %p242
        %p617 = pneg %p266
        %p618 = pneg %p263
        %p619 = pneg %p287
        %p620 = pneg %p284
        %p621 = pneg %p308
        %p622 = pneg %p305
        %p623 = pneg %p329
        %p624 = pneg %p326
        %p625 = pneg %p350
        %p626 = pneg %p347
        %p627 = pneg %p376
        %p628 = pneg %p373
        %s629 = sand.u32 %s363, 1
        %s630 = scalar_lea.sflag [#allocation6], %s629
        %s631 = sand.u32 %s363, 1
        %s632 = scalar_lea.vmem [#allocation22], %s631
        %p633 = scmp.lt.s32.totalorder %s35, 1
        %s634 = scalar_select %p633, %s35, 1
        %s635 = smul.addr %s634, 2
        %s636 = smul.addr %s635, 4
        %s637 = scalar_lea.vmem %s0, %s636
        %639 = vst [vmem:[#allocation2] sm:$0x3f] 0.0
        %640 = vst [vmem:[#allocation2 + $0x8] sm:$0x3f] 0.0
        %641 = vst [vmem:[#allocation2 + $0x10] sm:$0x3f] 0.0
        %642 = vst [vmem:[#allocation3] sm:$0x77] 0.0
        %643 = vst [vmem:[#allocation3 + $0x8] sm:$0x7] 0.0
        %v644 = vld [vmem:[%s637] sm:$0xf]
        %v645 = vld [vmem:[#allocation4] sm:$0xff]
        %v646 = vld [vmem:[#allocation4 + $0x8] sm:$0xff]
        %v647 = vld [vmem:[#allocation4 + $0x10] sm:$0xff]
        %v648 = vld [vmem:[#allocation4 + $0x18] sm:$0xff]
        %v649 = vld [vmem:[#allocation4 + $0x20] sm:$0xff]
        %v650 = vld [vmem:[#allocation4 + $0x28] sm:$0xff]
        %v651 = vld [vmem:[#allocation4 + $0x30] sm:$0xff]
        %v652 = vld [vmem:[#allocation4 + $0x38] sm:$0xff]
        %v653 = vld [vmem:[#allocation4 + $0x40] sm:$0xff]
        %v654 = vld [vmem:[#allocation4 + $0x48] sm:$0xff]
        %v655 = vld [vmem:[#allocation4 + $0x50] sm:$0xff]
        %v656 = vld [vmem:[#allocation4 + $0x58] sm:$0xff]
        %v657 = vld [vmem:[#allocation4 + $0x60] sm:$0xff]
        %v658 = vld [vmem:[#allocation4 + $0x68] sm:$0xff]
        %v659 = vld [vmem:[#allocation4 + $0x70] sm:$0xff]
        %v660 = vld [vmem:[#allocation4 + $0x78] sm:$0xff]
        %v661 = vld [vmem:[#allocation4 + $0x80] sm:$0xff]
        %v662 = vld [vmem:[#allocation4 + $0x88] sm:$0xff]
        %v663 = vld [vmem:[#allocation4 + $0x90] sm:$0xff]
        %v664 = vld [vmem:[#allocation4 + $0x98] sm:$0xff]
        %v665 = vld [vmem:[#allocation4 + $0xa0] sm:$0xff]
        %v666 = vld [vmem:[#allocation4 + $0xa8] sm:$0xff]
        %v667 = vld [vmem:[#allocation4 + $0xb0] sm:$0xff]
        %v668 = vld [vmem:[#allocation4 + $0xb8] sm:$0xff]
        %v669 = vld [vmem:[#allocation4 + $0xc0] sm:$0xff]
        %v670 = vld [vmem:[#allocation4 + $0xc8] sm:$0xff]
        %v671 = vld [vmem:[#allocation4 + $0xd0] sm:$0xff]
        %v672 = vld [vmem:[#allocation4 + $0xd8] sm:$0xff]
        %v673 = vld [vmem:[#allocation4 + $0xe0] sm:$0xff]
        %v674 = vld [vmem:[#allocation4 + $0xe8] sm:$0xff]
        %v675 = vld [vmem:[%s637 + $0x4] sm:$0x1]
        %s676 = scalar_lea.vmem [#allocation4], 240
        %v677 = vld [vmem:[%s676] sm:$0xff]
        %v678 = vld [vmem:[%s676 + $0x8] sm:$0xff]
        %v679 = vld [vmem:[%s676 + $0x10] sm:$0xff]
        %v680 = vld [vmem:[%s676 + $0x18] sm:$0xff]
        %v681 = vld [vmem:[%s676 + $0x20] sm:$0xff]
        %v682 = vld [vmem:[%s676 + $0x28] sm:$0xff]
        %v683 = vld [vmem:[%s676 + $0x30] sm:$0xff]
        %v684 = vld [vmem:[%s676 + $0x38] sm:$0xff]
        %v685 = vld [vmem:[%s676 + $0x40] sm:$0xff]
        %v686 = vld [vmem:[%s676 + $0x48] sm:$0xff]
        %v687 = vld [vmem:[%s676 + $0x50] sm:$0xff]
        %v688 = vld [vmem:[%s676 + $0x58] sm:$0xff]
        %v689 = vld [vmem:[%s676 + $0x60] sm:$0xff]
        %v690 = vld [vmem:[%s676 + $0x68] sm:$0xff]
        %v691 = vld [vmem:[%s676 + $0x70] sm:$0xff]
        %v692 = vld [vmem:[%s676 + $0x78] sm:$0xff]
        %v693 = vld [vmem:[%s676 + $0x80] sm:$0xff]
        %v694 = vld [vmem:[%s676 + $0x88] sm:$0xff]
        %v695 = vld [vmem:[%s676 + $0x90] sm:$0xff]
        %v696 = vld [vmem:[%s676 + $0x98] sm:$0xff]
        %v697 = vld [vmem:[%s676 + $0xa0] sm:$0xff]
        %v698 = vld [vmem:[%s676 + $0xa8] sm:$0xff]
        %v699 = vld [vmem:[%s676 + $0xb0] sm:$0xff]
        %v700 = vld [vmem:[%s676 + $0xb8] sm:$0xff]
        %v701 = vld [vmem:[%s676 + $0xc0] sm:$0xff]
        %v702 = vld [vmem:[%s676 + $0xc8] sm:$0xff]
        %v703 = vld [vmem:[%s676 + $0xd0] sm:$0xff]
        %v704 = vld [vmem:[%s676 + $0xd8] sm:$0xff]
        %v705 = vld [vmem:[%s676 + $0xe0] sm:$0xff]
        %v706 = vld [vmem:[%s676 + $0xe8] sm:$0xff]
        %v709 = vunpack.c.l.b16 %v644
        %v710 = vunpack.c.l.b16 %v675
        %v711 = vpack.c.b16 %v710, %v709
        %v713 = vshrl.u32 %v711, 16
        %v715 = vshll.u32 %v711, 16
        %v717 = vrot.slane %v715, 1
        %v718 = vor.u32 %v713, %v717
        %v749 = vunpack.c.l.b16 %v677
        %v750 = vunpack.c.h.b16 %v677
        %v751 = vunpack.c.l.b16 %v678
        %v752 = vunpack.c.h.b16 %v678
        %v753 = vunpack.c.l.b16 %v679
        %v754 = vunpack.c.h.b16 %v679
        %v755 = vunpack.c.l.b16 %v680
        %v756 = vunpack.c.h.b16 %v680
        %v757 = vunpack.c.l.b16 %v681
        %v758 = vunpack.c.h.b16 %v681
        %v759 = vunpack.c.l.b16 %v682
        %v760 = vunpack.c.h.b16 %v682
        %v761 = vunpack.c.l.b16 %v683
        %v762 = vunpack.c.h.b16 %v683
        %v763 = vunpack.c.l.b16 %v684
        %v764 = vunpack.c.h.b16 %v684
        %v765 = vunpack.c.l.b16 %v685
        %v766 = vunpack.c.h.b16 %v685
        %v767 = vunpack.c.l.b16 %v686
        %v768 = vunpack.c.h.b16 %v686
        %v769 = vunpack.c.l.b16 %v687
        %v770 = vunpack.c.h.b16 %v687
        %v771 = vunpack.c.l.b16 %v688
        %v772 = vunpack.c.h.b16 %v688
        %v773 = vunpack.c.l.b16 %v689
        %v774 = vunpack.c.h.b16 %v689
        %v775 = vunpack.c.l.b16 %v690
        %v776 = vunpack.c.h.b16 %v690
        %v777 = vunpack.c.l.b16 %v691
        %v778 = vunpack.c.h.b16 %v691
        %v779 = vunpack.c.l.b16 %v692
        %v780 = vunpack.c.h.b16 %v692
        %v781 = vunpack.c.l.b16 %v693
        %v782 = vunpack.c.h.b16 %v693
        %v783 = vunpack.c.l.b16 %v694
        %v784 = vunpack.c.h.b16 %v694
        %v785 = vunpack.c.l.b16 %v695
        %v786 = vunpack.c.h.b16 %v695
        %v787 = vunpack.c.l.b16 %v696
        %v788 = vunpack.c.h.b16 %v696
        %v789 = vunpack.c.l.b16 %v697
        %v790 = vunpack.c.h.b16 %v697
        %v791 = vunpack.c.l.b16 %v698
        %v792 = vunpack.c.h.b16 %v698
        %v793 = vunpack.c.l.b16 %v699
        %v794 = vunpack.c.h.b16 %v699
        %v795 = vunpack.c.l.b16 %v700
        %v796 = vunpack.c.h.b16 %v700
        %v797 = vunpack.c.l.b16 %v701
        %v798 = vunpack.c.h.b16 %v701
        %v799 = vunpack.c.l.b16 %v702
        %v800 = vunpack.c.h.b16 %v702
        %v801 = vunpack.c.l.b16 %v703
        %v802 = vunpack.c.h.b16 %v703
        %v803 = vunpack.c.l.b16 %v704
        %v804 = vunpack.c.h.b16 %v704
        %v805 = vunpack.c.l.b16 %v705
        %v806 = vunpack.c.h.b16 %v705
        %v807 = vunpack.c.l.b16 %v706
        %v808 = vunpack.c.h.b16 %v706
        %v809 = vpack.c.b16 %v753, %v749
        %v810 = vpack.c.b16 %v754, %v750
        %v811 = vpack.c.b16 %v755, %v751
        %v812 = vpack.c.b16 %v756, %v752
        %v813 = vpack.c.b16 %v761, %v757
        %v814 = vpack.c.b16 %v762, %v758
        %v815 = vpack.c.b16 %v763, %v759
        %v816 = vpack.c.b16 %v764, %v760
        %v817 = vpack.c.b16 %v769, %v765
        %v818 = vpack.c.b16 %v770, %v766
        %v819 = vpack.c.b16 %v771, %v767
        %v820 = vpack.c.b16 %v772, %v768
        %v821 = vpack.c.b16 %v777, %v773
        %v822 = vpack.c.b16 %v778, %v774
        %v823 = vpack.c.b16 %v779, %v775
        %v824 = vpack.c.b16 %v780, %v776
        %v825 = vpack.c.b16 %v785, %v781
        %v826 = vpack.c.b16 %v786, %v782
        %v827 = vpack.c.b16 %v787, %v783
        %v828 = vpack.c.b16 %v788, %v784
        %v829 = vpack.c.b16 %v793, %v789
        %v830 = vpack.c.b16 %v794, %v790
        %v831 = vpack.c.b16 %v795, %v791
        %v832 = vpack.c.b16 %v796, %v792
        %v833 = vpack.c.b16 %v801, %v797
        %v834 = vpack.c.b16 %v802, %v798
        %v835 = vpack.c.b16 %v803, %v799
        %v836 = vpack.c.b16 %v804, %v800
        %v837 = vpack.c.b16 %v805, %v805
        %v838 = vpack.c.b16 %v806, %v806
        %v839 = vpack.c.b16 %v807, %v807
        %v840 = vpack.c.b16 %v808, %v808
        %vm869 = vcmask 982016
        %v871 = vsel %vm869, %v718, 0
        %vm873 = vcmask 1043456
        %v875 = vsel %vm873, %v837, 0
        %v878 = vsel %vm873, %v838, 0
        %v881 = vsel %vm873, %v839, 0
        %v884 = vsel %vm873, %v840, 0
        %886 = vmatprep.subr.bf16.mxu0 %v810
        %887 = vmatpush1.bf16.msra.mxu0 %v809
        %888 = vmatprep.subr.bf16.mxu0 %v814
        %889 = vmatpush1.bf16.msra.mxu0 %v813
        %890 = vmatprep.subr.bf16.mxu0 %v818
        %891 = vmatpush1.bf16.msra.mxu0 %v817
        %892 = vmatprep.subr.bf16.mxu0 %v822
        %893 = vmatpush1.bf16.msra.mxu0 %v821
        %894 = vmatprep.subr.bf16.mxu0 %v826
        %895 = vmatpush1.bf16.msra.mxu0 %v825
        %896 = vmatprep.subr.bf16.mxu0 %v830
        %897 = vmatpush1.bf16.msra.mxu0 %v829
        %898 = vmatprep.subr.bf16.mxu0 %v834
        %899 = vmatpush1.bf16.msra.mxu0 %v833
        %900 = vmatprep.subr.bf16.mxu0 %v878
        %901 = vmatpush1.bf16.msra.mxu0 %v875
        %902 = vmatprep.subr.bf16.mxu0 0
        %903 = vmatpush1.bf16.msra.mxu0 0
        %904 = vmatprep.subr.bf16.mxu0 0
        %905 = vmatpush1.bf16.msra.mxu0 0
        %906 = vmatprep.subr.bf16.mxu0 0
        %907 = vmatpush1.bf16.msra.mxu0 0
        %908 = vmatprep.subr.bf16.mxu0 0
        %909 = vmatpush1.bf16.msra.mxu0 0
        %910 = vmatprep.subr.bf16.mxu0 0
        %911 = vmatpush1.bf16.msra.mxu0 0
        %912 = vmatprep.subr.bf16.mxu0 0
        %913 = vmatpush1.bf16.msra.mxu0 0
        %914 = vmatprep.subr.bf16.mxu0 0
        %915 = vmatpush1.bf16.msra.mxu0 0
        %916 = vmatprep.subr.bf16.mxu0 0
        %917 = vmatpush1.bf16.msra.mxu0 0
        %918 = vmatprep.mubr.bf16.mxu0 0
        %919 = vmatmul.mubr.bf16.gmra.mrb[0].mxu0 %v871
        %v920 = vpop.f32.mrb[0].mxu0
        %v921 = vadd.f32 0.0, %v920
        %v922 = vpop.f32.mrb[0].mxu0
        %v923 = vadd.f32 0.0, %v922
        %v924 = vpop.f32.mrb[0].mxu0
        %v925 = vpop.f32.mrb[0].mxu0
        %926 = vdwg.mxu0
        %927 = vmatprep.subr.bf16.mxu0 %v812
        %928 = vmatpush1.bf16.msra.mxu0 %v811
        %929 = vmatprep.subr.bf16.mxu0 %v816
        %930 = vmatpush1.bf16.msra.mxu0 %v815
        %931 = vmatprep.subr.bf16.mxu0 %v820
        %932 = vmatpush1.bf16.msra.mxu0 %v819
        %933 = vmatprep.subr.bf16.mxu0 %v824
        %934 = vmatpush1.bf16.msra.mxu0 %v823
        %935 = vmatprep.subr.bf16.mxu0 %v828
        %936 = vmatpush1.bf16.msra.mxu0 %v827
        %937 = vmatprep.subr.bf16.mxu0 %v832
        %938 = vmatpush1.bf16.msra.mxu0 %v831
        %939 = vmatprep.subr.bf16.mxu0 %v836
        %940 = vmatpush1.bf16.msra.mxu0 %v835
        %941 = vmatprep.subr.bf16.mxu0 %v884
        %942 = vmatpush1.bf16.msra.mxu0 %v881
        %943 = vmatprep.subr.bf16.mxu0 0
        %944 = vmatpush1.bf16.msra.mxu0 0
        %945 = vmatprep.subr.bf16.mxu0 0
        %946 = vmatpush1.bf16.msra.mxu0 0
        %947 = vmatprep.subr.bf16.mxu0 0
        %948 = vmatpush1.bf16.msra.mxu0 0
        %949 = vmatprep.subr.bf16.mxu0 0
        %950 = vmatpush1.bf16.msra.mxu0 0
        %951 = vmatprep.subr.bf16.mxu0 0
        %952 = vmatpush1.bf16.msra.mxu0 0
        %953 = vmatprep.subr.bf16.mxu0 0
        %954 = vmatpush1.bf16.msra.mxu0 0
        %955 = vmatprep.subr.bf16.mxu0 0
        %956 = vmatpush1.bf16.msra.mxu0 0
        %957 = vmatprep.subr.bf16.mxu0 0
        %958 = vmatpush1.bf16.msra.mxu0 0
        %959 = vmatprep.mubr.bf16.mxu0 0
        %960 = vmatmul.mubr.bf16.gmra.mrb[0].mxu0 %v871
        %v961 = vpop.f32.mrb[0].mxu0
        %v962 = vadd.f32 0.0, %v961
        %v963 = vpop.f32.mrb[0].mxu0
        %v964 = vadd.f32 0.0, %v963
        %v965 = vpop.f32.mrb[0].mxu0
        %v966 = vpop.f32.mrb[0].mxu0
        %967 = vdwg.mxu0
        %v998 = vunpack.c.l.b16 %v645
        %v999 = vunpack.c.h.b16 %v645
        %v1000 = vunpack.c.l.b16 %v646
        %v1001 = vunpack.c.h.b16 %v646
        %v1002 = vunpack.c.l.b16 %v647
        %v1003 = vunpack.c.h.b16 %v647
        %v1004 = vunpack.c.l.b16 %v648
        %v1005 = vunpack.c.h.b16 %v648
        %v1006 = vunpack.c.l.b16 %v649
        %v1007 = vunpack.c.h.b16 %v649
        %v1008 = vunpack.c.l.b16 %v650
        %v1009 = vunpack.c.h.b16 %v650
        %v1010 = vunpack.c.l.b16 %v651
        %v1011 = vunpack.c.h.b16 %v651
        %v1012 = vunpack.c.l.b16 %v652
        %v1013 = vunpack.c.h.b16 %v652
        %v1014 = vunpack.c.l.b16 %v653
        %v1015 = vunpack.c.h.b16 %v653
        %v1016 = vunpack.c.l.b16 %v654
        %v1017 = vunpack.c.h.b16 %v654
        %v1018 = vunpack.c.l.b16 %v655
        %v1019 = vunpack.c.h.b16 %v655
        %v1020 = vunpack.c.l.b16 %v656
        %v1021 = vunpack.c.h.b16 %v656
        %v1022 = vunpack.c.l.b16 %v657
        %v1023 = vunpack.c.h.b16 %v657
        %v1024 = vunpack.c.l.b16 %v658
        %v1025 = vunpack.c.h.b16 %v658
        %v1026 = vunpack.c.l.b16 %v659
        %v1027 = vunpack.c.h.b16 %v659
        %v1028 = vunpack.c.l.b16 %v660
        %v1029 = vunpack.c.h.b16 %v660
        %v1030 = vunpack.c.l.b16 %v661
        %v1031 = vunpack.c.h.b16 %v661
        %v1032 = vunpack.c.l.b16 %v662
        %v1033 = vunpack.c.h.b16 %v662
        %v1034 = vunpack.c.l.b16 %v663
        %v1035 = vunpack.c.h.b16 %v663
        %v1036 = vunpack.c.l.b16 %v664
        %v1037 = vunpack.c.h.b16 %v664
        %v1038 = vunpack.c.l.b16 %v665
        %v1039 = vunpack.c.h.b16 %v665
        %v1040 = vunpack.c.l.b16 %v666
        %v1041 = vunpack.c.h.b16 %v666
        %v1042 = vunpack.c.l.b16 %v667
        %v1043 = vunpack.c.h.b16 %v667
        %v1044 = vunpack.c.l.b16 %v668
        %v1045 = vunpack.c.h.b16 %v668
        %v1046 = vunpack.c.l.b16 %v669
        %v1047 = vunpack.c.h.b16 %v669
        %v1048 = vunpack.c.l.b16 %v670
        %v1049 = vunpack.c.h.b16 %v670
        %v1050 = vunpack.c.l.b16 %v671
        %v1051 = vunpack.c.h.b16 %v671
        %v1052 = vunpack.c.l.b16 %v672
        %v1053 = vunpack.c.h.b16 %v672
        %v1054 = vunpack.c.l.b16 %v673
        %v1055 = vunpack.c.h.b16 %v673
        %v1056 = vunpack.c.l.b16 %v674
        %v1057 = vunpack.c.h.b16 %v674
        %v1058 = vpack.c.b16 %v1002, %v998
        %v1059 = vpack.c.b16 %v1003, %v999
        %v1060 = vpack.c.b16 %v1004, %v1000
        %v1061 = vpack.c.b16 %v1005, %v1001
        %v1062 = vpack.c.b16 %v1010, %v1006
        %v1063 = vpack.c.b16 %v1011, %v1007
        %v1064 = vpack.c.b16 %v1012, %v1008
        %v1065 = vpack.c.b16 %v1013, %v1009
        %v1066 = vpack.c.b16 %v1018, %v1014
        %v1067 = vpack.c.b16 %v1019, %v1015
        %v1068 = vpack.c.b16 %v1020, %v1016
        %v1069 = vpack.c.b16 %v1021, %v1017
        %v1070 = vpack.c.b16 %v1026, %v1022
        %v1071 = vpack.c.b16 %v1027, %v1023
        %v1072 = vpack.c.b16 %v1028, %v1024
        %v1073 = vpack.c.b16 %v1029, %v1025
        %v1074 = vpack.c.b16 %v1034, %v1030
        %v1075 = vpack.c.b16 %v1035, %v1031
        %v1076 = vpack.c.b16 %v1036, %v1032
        %v1077 = vpack.c.b16 %v1037, %v1033
        %v1078 = vpack.c.b16 %v1042, %v1038
        %v1079 = vpack.c.b16 %v1043, %v1039
        %v1080 = vpack.c.b16 %v1044, %v1040
        %v1081 = vpack.c.b16 %v1045, %v1041
        %v1082 = vpack.c.b16 %v1050, %v1046
        %v1083 = vpack.c.b16 %v1051, %v1047
        %v1084 = vpack.c.b16 %v1052, %v1048
        %v1085 = vpack.c.b16 %v1053, %v1049
        %v1086 = vpack.c.b16 %v1054, %v1054
        %v1087 = vpack.c.b16 %v1055, %v1055
        %v1088 = vpack.c.b16 %v1056, %v1056
        %v1089 = vpack.c.b16 %v1057, %v1057
        %v1119 = vsel %vm869, %v644, 0
        %v1122 = vsel %vm873, %v1086, 0
        %v1125 = vsel %vm873, %v1087, 0
        %v1128 = vsel %vm873, %v1088, 0
        %v1131 = vsel %vm873, %v1089, 0
        %1133 = vmatprep.subr.bf16.mxu0 %v1059
        %1134 = vmatpush1.bf16.msra.mxu0 %v1058
        %1135 = vmatprep.subr.bf16.mxu0 %v1063
        %1136 = vmatpush1.bf16.msra.mxu0 %v1062
        %1137 = vmatprep.subr.bf16.mxu0 %v1067
        %1138 = vmatpush1.bf16.msra.mxu0 %v1066
        %1139 = vmatprep.subr.bf16.mxu0 %v1071
        %1140 = vmatpush1.bf16.msra.mxu0 %v1070
        %1141 = vmatprep.subr.bf16.mxu0 %v1075
        %1142 = vmatpush1.bf16.msra.mxu0 %v1074
        %1143 = vmatprep.subr.bf16.mxu0 %v1079
        %1144 = vmatpush1.bf16.msra.mxu0 %v1078
        %1145 = vmatprep.subr.bf16.mxu0 %v1083
        %1146 = vmatpush1.bf16.msra.mxu0 %v1082
        %1147 = vmatprep.subr.bf16.mxu0 %v1125
        %1148 = vmatpush1.bf16.msra.mxu0 %v1122
        %1149 = vmatprep.subr.bf16.mxu0 0
        %1150 = vmatpush1.bf16.msra.mxu0 0
        %1151 = vmatprep.subr.bf16.mxu0 0
        %1152 = vmatpush1.bf16.msra.mxu0 0
        %1153 = vmatprep.subr.bf16.mxu0 0
        %1154 = vmatpush1.bf16.msra.mxu0 0
        %1155 = vmatprep.subr.bf16.mxu0 0
        %1156 = vmatpush1.bf16.msra.mxu0 0
        %1157 = vmatprep.subr.bf16.mxu0 0
        %1158 = vmatpush1.bf16.msra.mxu0 0
        %1159 = vmatprep.subr.bf16.mxu0 0
        %1160 = vmatpush1.bf16.msra.mxu0 0
        %1161 = vmatprep.subr.bf16.mxu0 0
        %1162 = vmatpush1.bf16.msra.mxu0 0
        %1163 = vmatprep.subr.bf16.mxu0 0
        %1164 = vmatpush1.bf16.msra.mxu0 0
        %1165 = vmatprep.mubr.bf16.mxu0 0
        %1166 = vmatmul.mubr.bf16.gmra.mrb[0].mxu0 %v1119
        %v1167 = vpop.f32.mrb[0].mxu0
        %v1168 = vadd.f32 %v921, %v1167
        %v1169 = vpop.f32.mrb[0].mxu0
        %v1170 = vadd.f32 %v923, %v1169
        %v1171 = vpop.f32.mrb[0].mxu0
        %v1172 = vpop.f32.mrb[0].mxu0
        %1173 = vdwg.mxu0
        %1174 = vmatprep.subr.bf16.mxu0 %v1061
        %1175 = vmatpush1.bf16.msra.mxu0 %v1060
        %1176 = vmatprep.subr.bf16.mxu0 %v1065
        %1177 = vmatpush1.bf16.msra.mxu0 %v1064
        %1178 = vmatprep.subr.bf16.mxu0 %v1069
        %1179 = vmatpush1.bf16.msra.mxu0 %v1068
        %1180 = vmatprep.subr.bf16.mxu0 %v1073
        %1181 = vmatpush1.bf16.msra.mxu0 %v1072
        %1182 = vmatprep.subr.bf16.mxu0 %v1077
        %1183 = vmatpush1.bf16.msra.mxu0 %v1076
        %1184 = vmatprep.subr.bf16.mxu0 %v1081
        %1185 = vmatpush1.bf16.msra.mxu0 %v1080
        %1186 = vmatprep.subr.bf16.mxu0 %v1085
        %1187 = vmatpush1.bf16.msra.mxu0 %v1084
        %1188 = vmatprep.subr.bf16.mxu0 %v1131
        %1189 = vmatpush1.bf16.msra.mxu0 %v1128
        %1190 = vmatprep.subr.bf16.mxu0 0
        %1191 = vmatpush1.bf16.msra.mxu0 0
        %1192 = vmatprep.subr.bf16.mxu0 0
        %1193 = vmatpush1.bf16.msra.mxu0 0
        %1194 = vmatprep.subr.bf16.mxu0 0
        %1195 = vmatpush1.bf16.msra.mxu0 0
        %1196 = vmatprep.subr.bf16.mxu0 0
        %1197 = vmatpush1.bf16.msra.mxu0 0
        %1198 = vmatprep.subr.bf16.mxu0 0
        %1199 = vmatpush1.bf16.msra.mxu0 0
        %1200 = vmatprep.subr.bf16.mxu0 0
        %1201 = vmatpush1.bf16.msra.mxu0 0
        %1202 = vmatprep.subr.bf16.mxu0 0
        %1203 = vmatpush1.bf16.msra.mxu0 0
        %1204 = vmatprep.subr.bf16.mxu0 0
        %1205 = vmatpush1.bf16.msra.mxu0 0
        %1206 = vmatprep.mubr.bf16.mxu0 0
        %1207 = vmatmul.mubr.bf16.gmra.mrb[0].mxu0 %v1119
        %v1208 = vpop.f32.mrb[0].mxu0
        %v1209 = vadd.f32 %v962, %v1208
        %v1210 = vpop.f32.mrb[0].mxu0
        %v1211 = vadd.f32 %v964, %v1210
        %v1212 = vpop.f32.mrb[0].mxu0
        %v1213 = vpop.f32.mrb[0].mxu0
        %1214 = vdwg.mxu0
        %v1215 = vld [vmem:[%s637] sm:$0xe]
        %s1216 = scalar_lea.vmem [#allocation4], 480
        %v1217 = vld [vmem:[%s1216] sm:$0xff]
        %v1218 = vld [vmem:[%s1216 + $0x8] sm:$0xff]
        %v1219 = vld [vmem:[%s1216 + $0x10] sm:$0xff]
        %v1220 = vld [vmem:[%s1216 + $0x18] sm:$0xff]
        %v1221 = vld [vmem:[%s1216 + $0x20] sm:$0xff]
        %v1222 = vld [vmem:[%s1216 + $0x28] sm:$0xff]
        %v1223 = vld [vmem:[%s1216 + $0x30] sm:$0xff]
        %v1224 = vld [vmem:[%s1216 + $0x38] sm:$0xff]
        %v1225 = vld [vmem:[%s1216 + $0x40] sm:$0xff]
        %v1226 = vld [vmem:[%s1216 + $0x48] sm:$0xff]
        %v1227 = vld [vmem:[%s1216 + $0x50] sm:$0xff]
        %v1228 = vld [vmem:[%s1216 + $0x58] sm:$0xff]
        %v1229 = vld [vmem:[%s1216 + $0x60] sm:$0xff]
        %v1230 = vld [vmem:[%s1216 + $0x68] sm:$0xff]
        %v1231 = vld [vmem:[%s1216 + $0x70] sm:$0xff]
        %v1232 = vld [vmem:[%s1216 + $0x78] sm:$0xff]
        %v1233 = vld [vmem:[%s1216 + $0x80] sm:$0xff]
        %v1234 = vld [vmem:[%s1216 + $0x88] sm:$0xff]
        %v1235 = vld [vmem:[%s1216 + $0x90] sm:$0xff]
        %v1236 = vld [vmem:[%s1216 + $0x98] sm:$0xff]
        %v1237 = vld [vmem:[%s1216 + $0xa0] sm:$0xff]
        %v1238 = vld [vmem:[%s1216 + $0xa8] sm:$0xff]
        %v1239 = vld [vmem:[%s1216 + $0xb0] sm:$0xff]
        %v1240 = vld [vmem:[%s1216 + $0xb8] sm:$0xff]
        %v1241 = vld [vmem:[%s1216 + $0xc0] sm:$0xff]
        %v1242 = vld [vmem:[%s1216 + $0xc8] sm:$0xff]
        %v1243 = vld [vmem:[%s1216 + $0xd0] sm:$0xff]
        %v1244 = vld [vmem:[%s1216 + $0xd8] sm:$0xff]
        %v1245 = vld [vmem:[%s1216 + $0xe0] sm:$0xff]
        %v1246 = vld [vmem:[%s1216 + $0xe8] sm:$0xff]
        %v1248 = vunpack.c.l.b16 %v1215
        %v1249 = vpack.c.b16 %v710, %v1248
        %v1250 = vrot.slane %v1249, 1
        %v1281 = vunpack.c.l.b16 %v1217
        %v1282 = vunpack.c.h.b16 %v1217
        %v1283 = vunpack.c.l.b16 %v1218
        %v1284 = vunpack.c.h.b16 %v1218
        %v1285 = vunpack.c.l.b16 %v1219
        %v1286 = vunpack.c.h.b16 %v1219
        %v1287 = vunpack.c.l.b16 %v1220
        %v1288 = vunpack.c.h.b16 %v1220
        %v1289 = vunpack.c.l.b16 %v1221
        %v1290 = vunpack.c.h.b16 %v1221
        %v1291 = vunpack.c.l.b16 %v1222
        %v1292 = vunpack.c.h.b16 %v1222
        %v1293 = vunpack.c.l.b16 %v1223
        %v1294 = vunpack.c.h.b16 %v1223
        %v1295 = vunpack.c.l.b16 %v1224
        %v1296 = vunpack.c.h.b16 %v1224
        %v1297 = vunpack.c.l.b16 %v1225
        %v1298 = vunpack.c.h.b16 %v1225
        %v1299 = vunpack.c.l.b16 %v1226
        %v1300 = vunpack.c.h.b16 %v1226
        %v1301 = vunpack.c.l.b16 %v1227
        %v1302 = vunpack.c.h.b16 %v1227
        %v1303 = vunpack.c.l.b16 %v1228
        %v1304 = vunpack.c.h.b16 %v1228
        %v1305 = vunpack.c.l.b16 %v1229
        %v1306 = vunpack.c.h.b16 %v1229
        %v1307 = vunpack.c.l.b16 %v1230
        %v1308 = vunpack.c.h.b16 %v1230
        %v1309 = vunpack.c.l.b16 %v1231
        %v1310 = vunpack.c.h.b16 %v1231
        %v1311 = vunpack.c.l.b16 %v1232
        %v1312 = vunpack.c.h.b16 %v1232
        %v1313 = vunpack.c.l.b16 %v1233
        %v1314 = vunpack.c.h.b16 %v1233
        %v1315 = vunpack.c.l.b16 %v1234
        %v1316 = vunpack.c.h.b16 %v1234
        %v1317 = vunpack.c.l.b16 %v1235
        %v1318 = vunpack.c.h.b16 %v1235
        %v1319 = vunpack.c.l.b16 %v1236
        %v1320 = vunpack.c.h.b16 %v1236
        %v1321 = vunpack.c.l.b16 %v1237
        %v1322 = vunpack.c.h.b16 %v1237
        %v1323 = vunpack.c.l.b16 %v1238
        %v1324 = vunpack.c.h.b16 %v1238
        %v1325 = vunpack.c.l.b16 %v1239
        %v1326 = vunpack.c.h.b16 %v1239
        %v1327 = vunpack.c.l.b16 %v1240
        %v1328 = vunpack.c.h.b16 %v1240
        %v1329 = vunpack.c.l.b16 %v1241
        %v1330 = vunpack.c.h.b16 %v1241
        %v1331 = vunpack.c.l.b16 %v1242
        %v1332 = vunpack.c.h.b16 %v1242
        %v1333 = vunpack.c.l.b16 %v1243
        %v1334 = vunpack.c.h.b16 %v1243
        %v1335 = vunpack.c.l.b16 %v1244
        %v1336 = vunpack.c.h.b16 %v1244
        %v1337 = vunpack.c.l.b16 %v1245
        %v1338 = vunpack.c.h.b16 %v1245
        %v1339 = vunpack.c.l.b16 %v1246
        %v1340 = vunpack.c.h.b16 %v1246
        %v1341 = vpack.c.b16 %v1285, %v1281
        %v1342 = vpack.c.b16 %v1286, %v1282
        %v1343 = vpack.c.b16 %v1287, %v1283
        %v1344 = vpack.c.b16 %v1288, %v1284
        %v1345 = vpack.c.b16 %v1293, %v1289
        %v1346 = vpack.c.b16 %v1294, %v1290
        %v1347 = vpack.c.b16 %v1295, %v1291
        %v1348 = vpack.c.b16 %v1296, %v1292
        %v1349 = vpack.c.b16 %v1301, %v1297
        %v1350 = vpack.c.b16 %v1302, %v1298
        %v1351 = vpack.c.b16 %v1303, %v1299
        %v1352 = vpack.c.b16 %v1304, %v1300
        %v1353 = vpack.c.b16 %v1309, %v1305
        %v1354 = vpack.c.b16 %v1310, %v1306
        %v1355 = vpack.c.b16 %v1311, %v1307
        %v1356 = vpack.c.b16 %v1312, %v1308
        %v1357 = vpack.c.b16 %v1317, %v1313
        %v1358 = vpack.c.b16 %v1318, %v1314
        %v1359 = vpack.c.b16 %v1319, %v1315
        %v1360 = vpack.c.b16 %v1320, %v1316
        %v1361 = vpack.c.b16 %v1325, %v1321
        %v1362 = vpack.c.b16 %v1326, %v1322
        %v1363 = vpack.c.b16 %v1327, %v1323
        %v1364 = vpack.c.b16 %v1328, %v1324
        %v1365 = vpack.c.b16 %v1333, %v1329
        %v1366 = vpack.c.b16 %v1334, %v1330
        %v1367 = vpack.c.b16 %v1335, %v1331
        %v1368 = vpack.c.b16 %v1336, %v1332
        %v1369 = vpack.c.b16 %v1337, %v1337
        %v1370 = vpack.c.b16 %v1338, %v1338
        %v1371 = vpack.c.b16 %v1339, %v1339
        %v1372 = vpack.c.b16 %v1340, %v1340
        %v1402 = vsel %vm869, %v1250, 0
        %v1405 = vsel %vm873, %v1369, 0
        %v1408 = vsel %vm873, %v1370, 0
        %v1411 = vsel %vm873, %v1371, 0
        %v1414 = vsel %vm873, %v1372, 0
        %1416 = vmatprep.subr.bf16.mxu0 %v1342
        %1417 = vmatpush1.bf16.msra.mxu0 %v1341
        %1418 = vmatprep.subr.bf16.mxu0 %v1346
        %1419 = vmatpush1.bf16.msra.mxu0 %v1345
        %1420 = vmatprep.subr.bf16.mxu0 %v1350
        %1421 = vmatpush1.bf16.msra.mxu0 %v1349
        %1422 = vmatprep.subr.bf16.mxu0 %v1354
        %1423 = vmatpush1.bf16.msra.mxu0 %v1353
        %1424 = vmatprep.subr.bf16.mxu0 %v1358
        %1425 = vmatpush1.bf16.msra.mxu0 %v1357
        %1426 = vmatprep.subr.bf16.mxu0 %v1362
        %1427 = vmatpush1.bf16.msra.mxu0 %v1361
        %1428 = vmatprep.subr.bf16.mxu0 %v1366
        %1429 = vmatpush1.bf16.msra.mxu0 %v1365
        %1430 = vmatprep.subr.bf16.mxu0 %v1408
        %1431 = vmatpush1.bf16.msra.mxu0 %v1405
        %1432 = vmatprep.subr.bf16.mxu0 0
        %1433 = vmatpush1.bf16.msra.mxu0 0
        %1434 = vmatprep.subr.bf16.mxu0 0
        %1435 = vmatpush1.bf16.msra.mxu0 0
        %1436 = vmatprep.subr.bf16.mxu0 0
        %1437 = vmatpush1.bf16.msra.mxu0 0
        %1438 = vmatprep.subr.bf16.mxu0 0
        %1439 = vmatpush1.bf16.msra.mxu0 0
        %1440 = vmatprep.subr.bf16.mxu0 0
        %1441 = vmatpush1.bf16.msra.mxu0 0
        %1442 = vmatprep.subr.bf16.mxu0 0
        %1443 = vmatpush1.bf16.msra.mxu0 0
        %1444 = vmatprep.subr.bf16.mxu0 0
        %1445 = vmatpush1.bf16.msra.mxu0 0
        %1446 = vmatprep.subr.bf16.mxu0 0
        %1447 = vmatpush1.bf16.msra.mxu0 0
        %1448 = vmatprep.mubr.bf16.mxu0 0
        %1449 = vmatmul.mubr.bf16.gmra.mrb[0].mxu0 %v1402
        %v1450 = vpop.f32.mrb[0].mxu0
        %v1451 = vadd.f32 0.0, %v1450
        %v1452 = vpop.f32.mrb[0].mxu0
        %v1453 = vadd.f32 0.0, %v1452
        %v1454 = vpop.f32.mrb[0].mxu0
        %v1455 = vpop.f32.mrb[0].mxu0
        %1456 = vdwg.mxu0
        %1457 = vmatprep.subr.bf16.mxu0 %v1344
        %1458 = vmatpush1.bf16.msra.mxu0 %v1343
        %1459 = vmatprep.subr.bf16.mxu0 %v1348
        %1460 = vmatpush1.bf16.msra.mxu0 %v1347
        %1461 = vmatprep.subr.bf16.mxu0 %v1352
        %1462 = vmatpush1.bf16.msra.mxu0 %v1351
        %1463 = vmatprep.subr.bf16.mxu0 %v1356
        %1464 = vmatpush1.bf16.msra.mxu0 %v1355
        %1465 = vmatprep.subr.bf16.mxu0 %v1360
        %1466 = vmatpush1.bf16.msra.mxu0 %v1359
        %1467 = vmatprep.subr.bf16.mxu0 %v1364
        %1468 = vmatpush1.bf16.msra.mxu0 %v1363
        %1469 = vmatprep.subr.bf16.mxu0 %v1368
        %1470 = vmatpush1.bf16.msra.mxu0 %v1367
        %1471 = vmatprep.subr.bf16.mxu0 %v1414
        %1472 = vmatpush1.bf16.msra.mxu0 %v1411
        %1473 = vmatprep.subr.bf16.mxu0 0
        %1474 = vmatpush1.bf16.msra.mxu0 0
        %1475 = vmatprep.subr.bf16.mxu0 0
        %1476 = vmatpush1.bf16.msra.mxu0 0
        %1477 = vmatprep.subr.bf16.mxu0 0
        %1478 = vmatpush1.bf16.msra.mxu0 0
        %1479 = vmatprep.subr.bf16.mxu0 0
        %1480 = vmatpush1.bf16.msra.mxu0 0
        %1481 = vmatprep.subr.bf16.mxu0 0
        %1482 = vmatpush1.bf16.msra.mxu0 0
        %1483 = vmatprep.subr.bf16.mxu0 0
        %1484 = vmatpush1.bf16.msra.mxu0 0
        %1485 = vmatprep.subr.bf16.mxu0 0
        %1486 = vmatpush1.bf16.msra.mxu0 0
        %1487 = vmatprep.subr.bf16.mxu0 0
        %1488 = vmatpush1.bf16.msra.mxu0 0
        %1489 = vmatprep.mubr.bf16.mxu0 0
        %1490 = vmatmul.mubr.bf16.gmra.mrb[0].mxu0 %v1402
        %v1491 = vpop.f32.mrb[0].mxu0
        %v1492 = vadd.f32 0.0, %v1491
        %v1493 = vpop.f32.mrb[0].mxu0
        %v1494 = vadd.f32 0.0, %v1493
        %v1495 = vpop.f32.mrb[0].mxu0
        %v1496 = vpop.f32.mrb[0].mxu0
        %1497 = vdwg.mxu0
        %v1498 = vadd.f32 %v1168, %v1451
        %v1499 = vadd.f32 %v1170, %v1453
        %v1500 = vadd.f32 %v1209, %v1492
        %v1501 = vadd.f32 %v1211, %v1494
        %v1502 = vld [vmem:[#allocation7] sm:$0xf]
        %v1504 = vlaneseq
        %v1505 = vshrl.u32 %v1504, 7
        %v1506 = vsub.s32 0, %v1505
        %v1507 = vrot.slane %v1502, %v1506
        %v1508 = vlaneseq
        %v1509 = vshrl.u32 %v1508, 7
        %v1510 = vsub.s32 1, %v1509
        %v1511 = vrot.slane %v1502, %v1510
        %v1512 = vlaneseq
        %v1513 = vshrl.u32 %v1512, 7
        %v1514 = vsub.s32 2, %v1513
        %v1515 = vrot.slane %v1502, %v1514
        %v1516 = vlaneseq
        %v1517 = vshrl.u32 %v1516, 7
        %v1518 = vsub.s32 3, %v1517
        %v1519 = vrot.slane %v1502, %v1518
        %v1524 = vadd.f32 %v1498, %v1507
        %v1525 = vadd.f32 %v1499, %v1511
        %v1526 = vadd.f32 %v1500, %v1515
        %v1527 = vadd.f32 %v1501, %v1519
        %v1528 = vmax.f32 %v1524, 0.0
        %v1529 = vmax.f32 %v1525, 0.0
        %v1530 = vmax.f32 %v1526, 0.0
        %v1531 = vmax.f32 %v1527, 0.0
        %v1532 = vmax.f32 %v1528, %v1529
        %v1533 = vmax.f32 %v1530, %v1531
        %v1534 = vmax.f32 %v1532, %v1533
        %1536 = vrot.lane.b32.xlu0 %v1534, 32
        %v1537 = vpop.permute.xlu0 %1536
        %vm1539 = vcmask 1040640
        %1540 = vst.msk [vmem:[#allocation2 + $0x1] sm:$0x1] %vm1539, %v1537
        %vm1541 = vcmask 253952
        %1542 = vst.msk [vmem:[#allocation2 + $0x9] sm:$0x1] %vm1541, %v1537
        %v1543 = vrot.slane %v1534, 1
        %1544 = vrot.lane.b32.xlu0 %v1543, 96
        %v1545 = vpop.permute.xlu0 %1544
        %vm1547 = vcmask 1041152
        %1548 = vst.msk [vmem:[#allocation2 + $0x9] sm:$0x1] %vm1547, %v1545
        %vm1549 = vcmask 778240
        %1550 = vst.msk [vmem:[#allocation2 + $0x11] sm:$0x1] %vm1549, %v1545
        %v1551 = vrot.slane %v1534, 2
        %1552 = vrot.lane.b32.xlu0 %v1551, 32
        %v1553 = vpop.permute.xlu0 %1552
        %1555 = vst.msk [vmem:[#allocation2 + $0x2] sm:$0x1] %vm1539, %v1553
        %1556 = vst.msk [vmem:[#allocation2 + $0xa] sm:$0x1] %vm1541, %v1553
        %v1557 = vrot.slane %v1534, 3
        %1558 = vrot.lane.b32.xlu0 %v1557, 96
        %v1559 = vpop.permute.xlu0 %1558
        %1561 = vst.msk [vmem:[#allocation2 + $0xa] sm:$0x1] %vm1547, %v1559
        %1562 = vst.msk [vmem:[#allocation2 + $0x12] sm:$0x1] %vm1549, %v1559
        %v1563 = vrot.slane %v1534, 4
        %1564 = vrot.lane.b32.xlu0 %v1563, 32
        %v1565 = vpop.permute.xlu0 %1564
        %1567 = vst.msk [vmem:[#allocation2 + $0x3] sm:$0x1] %vm1539, %v1565
        %1568 = vst.msk [vmem:[#allocation2 + $0xb] sm:$0x1] %vm1541, %v1565
        %v1569 = vrot.slane %v1534, 5
        %1570 = vrot.lane.b32.xlu0 %v1569, 96
        %v1571 = vpop.permute.xlu0 %1570
        %1573 = vst.msk [vmem:[#allocation2 + $0xb] sm:$0x1] %vm1547, %v1571
        %1574 = vst.msk [vmem:[#allocation2 + $0x13] sm:$0x1] %vm1549, %v1571
        %v1575 = vrot.slane %v1534, 6
        %1576 = vrot.lane.b32.xlu0 %v1575, 32
        %v1577 = vpop.permute.xlu0 %1576
        %1579 = vst.msk [vmem:[#allocation2 + $0x4] sm:$0x1] %vm1539, %v1577
        %1580 = vst.msk [vmem:[#allocation2 + $0xc] sm:$0x1] %vm1541, %v1577
        %v1581 = vrot.slane %v1534, 7
        %1582 = vrot.lane.b32.xlu0 %v1581, 96
        %v1583 = vpop.permute.xlu0 %1582
        %1585 = vst.msk [vmem:[#allocation2 + $0xc] sm:$0x1] %vm1547, %v1583
        %1586 = vst.msk [vmem:[#allocation2 + $0x14] sm:$0x1] %vm1549, %v1583
        %v1587 = vld [vmem:[#allocation2] sm:$0xf]
        %v1588 = vld [vmem:[#allocation2 + $0x8] sm:$0xf]
        %v1589 = vld [vmem:[#allocation2 + $0x10] sm:$0xf]
        %v1590 = vpack.c.bf16 %v1587, %v1587
        %v1591 = vpack.c.bf16 %v1588, %v1588
        %v1592 = vpack.c.bf16 %v1589, %v1589
        %v1593 = vld [vmem:[#allocation9] sm:$0xff]
        %v1594 = vld [vmem:[#allocation9 + $0x8] sm:$0xff]
        %v1595 = vld [vmem:[#allocation9 + $0x10] sm:$0xff]
        %v1596 = vld [vmem:[#allocation9 + $0x18] sm:$0xff]
        %v1597 = vld [vmem:[#allocation9 + $0x20] sm:$0xff]
        %v1598 = vld [vmem:[#allocation9 + $0x28] sm:$0xff]
        %v1599 = vld [vmem:[#allocation9 + $0x30] sm:$0xff]
        %v1600 = vld [vmem:[#allocation9 + $0x38] sm:$0xff]
        %v1601 = vld [vmem:[#allocation9 + $0x40] sm:$0xff]
        %v1602 = vld [vmem:[#allocation9 + $0x48] sm:$0xff]
        %v1603 = vld [vmem:[#allocation9 + $0x50] sm:$0xff]
        %v1604 = vld [vmem:[#allocation9 + $0x58] sm:$0xff]
        %v1605 = vld [vmem:[#allocation9 + $0x60] sm:$0xff]
        %v1606 = vld [vmem:[#allocation9 + $0x68] sm:$0xff]
        %v1607 = vld [vmem:[#allocation9 + $0x70] sm:$0xff]
        %v1608 = vld [vmem:[#allocation9 + $0x78] sm:$0xff]
        %v1609 = vld [vmem:[#allocation9 + $0x80] sm:$0xff]
        %v1610 = vld [vmem:[#allocation9 + $0x88] sm:$0xff]
        %v1611 = vld [vmem:[#allocation9 + $0x90] sm:$0xff]
        %v1612 = vld [vmem:[#allocation9 + $0x98] sm:$0xff]
        %v1613 = vld [vmem:[#allocation9 + $0xa0] sm:$0xff]
        %v1614 = vld [vmem:[#allocation9 + $0xa8] sm:$0xff]
        %v1615 = vld [vmem:[#allocation9 + $0xb0] sm:$0xff]
        %v1616 = vld [vmem:[#allocation9 + $0xb8] sm:$0xff]
        %v1617 = vld [vmem:[#allocation9 + $0xc0] sm:$0xff]
        %v1618 = vld [vmem:[#allocation9 + $0xc8] sm:$0xff]
        %v1619 = vld [vmem:[#allocation9 + $0xd0] sm:$0xff]
        %v1620 = vld [vmem:[#allocation9 + $0xd8] sm:$0xff]
        %v1621 = vld [vmem:[#allocation9 + $0xe0] sm:$0xff]
        %v1622 = vld [vmem:[#allocation9 + $0xe8] sm:$0xff]
        %v1623 = vld [vmem:[#allocation9 + $0xf0] sm:$0xff]
        %v1624 = vld [vmem:[#allocation9 + $0xf8] sm:$0xff]
        %v1625 = vld [vmem:[#allocation9 + $0x100] sm:$0xff]
        %v1626 = vld [vmem:[#allocation9 + $0x108] sm:$0xff]
        %v1627 = vld [vmem:[#allocation9 + $0x110] sm:$0xff]
        %v1628 = vld [vmem:[#allocation9 + $0x118] sm:$0xff]
        %v1629 = vld [vmem:[#allocation9 + $0x120] sm:$0xff]
        %v1630 = vld [vmem:[#allocation9 + $0x128] sm:$0xff]
        %v1631 = vld [vmem:[#allocation9 + $0x130] sm:$0xff]
        %v1632 = vld [vmem:[#allocation9 + $0x138] sm:$0xff]
        %v1633 = vld [vmem:[#allocation9 + $0x140] sm:$0xff]
        %v1634 = vld [vmem:[#allocation9 + $0x148] sm:$0xff]
        %v1635 = vld [vmem:[#allocation9 + $0x150] sm:$0xff]
        %v1636 = vld [vmem:[#allocation9 + $0x158] sm:$0xff]
        %v1637 = vld [vmem:[#allocation9 + $0x160] sm:$0xff]
        %v1638 = vld [vmem:[#allocation9 + $0x168] sm:$0xff]
        %v1639 = vld [vmem:[#allocation9 + $0x170] sm:$0xff]
        %v1640 = vld [vmem:[#allocation9 + $0x178] sm:$0xff]
        %v1641 = vld [vmem:[#allocation9 + $0x180] sm:$0xff]
        %v1642 = vld [vmem:[#allocation9 + $0x188] sm:$0xff]
        %v1643 = vld [vmem:[#allocation9 + $0x190] sm:$0xff]
        %v1644 = vld [vmem:[#allocation9 + $0x198] sm:$0xff]
        %v1645 = vld [vmem:[#allocation9 + $0x1a0] sm:$0xff]
        %v1646 = vld [vmem:[#allocation9 + $0x1a8] sm:$0xff]
        %v1647 = vld [vmem:[#allocation9 + $0x1b0] sm:$0xff]
        %v1648 = vld [vmem:[#allocation9 + $0x1b8] sm:$0xff]
        %v1649 = vld [vmem:[#allocation9 + $0x1c0] sm:$0xff]
        %v1650 = vld [vmem:[#allocation9 + $0x1c8] sm:$0xff]
        %v1651 = vld [vmem:[#allocation9 + $0x1d0] sm:$0xff]
        %v1652 = vld [vmem:[#allocation9 + $0x1d8] sm:$0xff]
        %v1653 = vld [vmem:[#allocation9 + $0x1e0] sm:$0xff]
        %v1654 = vld [vmem:[#allocation9 + $0x1e8] sm:$0xff]
        %v1655 = vld [vmem:[#allocation9 + $0x1f0] sm:$0xff]
        %v1656 = vld [vmem:[#allocation9 + $0x1f8] sm:$0xff]
        %v1657 = vld [vmem:[#allocation9 + $0x200] sm:$0xff]
        %v1658 = vld [vmem:[#allocation9 + $0x208] sm:$0xff]
        %v1659 = vld [vmem:[#allocation9 + $0x210] sm:$0xff]
        %v1660 = vld [vmem:[#allocation9 + $0x218] sm:$0xff]
        %v1661 = vld [vmem:[#allocation9 + $0x220] sm:$0xff]
        %v1662 = vld [vmem:[#allocation9 + $0x228] sm:$0xff]
        %v1663 = vld [vmem:[#allocation9 + $0x230] sm:$0xff]
        %v1664 = vld [vmem:[#allocation9 + $0x238] sm:$0xff]
        %v1665 = vld [vmem:[#allocation9 + $0x240] sm:$0xff]
        %v1666 = vld [vmem:[#allocation9 + $0x248] sm:$0xff]
        %v1667 = vld [vmem:[#allocation9 + $0x250] sm:$0xff]
        %v1668 = vld [vmem:[#allocation9 + $0x258] sm:$0xff]
        %v1669 = vld [vmem:[#allocation9 + $0x260] sm:$0xff]
        %v1670 = vld [vmem:[#allocation9 + $0x268] sm:$0xff]
        %v1671 = vld [vmem:[#allocation9 + $0x270] sm:$0xff]
        %v1672 = vld [vmem:[#allocation9 + $0x278] sm:$0xff]
        %v1673 = vld [vmem:[#allocation9 + $0x280] sm:$0xff]
        %v1674 = vld [vmem:[#allocation9 + $0x288] sm:$0xff]
        %v1675 = vld [vmem:[#allocation9 + $0x290] sm:$0xff]
        %v1676 = vld [vmem:[#allocation9 + $0x298] sm:$0xff]
        %v1677 = vld [vmem:[#allocation9 + $0x2a0] sm:$0xff]
        %v1678 = vld [vmem:[#allocation9 + $0x2a8] sm:$0xff]
        %v1679 = vld [vmem:[#allocation9 + $0x2b0] sm:$0xff]
        %v1680 = vld [vmem:[#allocation9 + $0x2b8] sm:$0xff]
        %v1681 = vld [vmem:[#allocation9 + $0x2c0] sm:$0xff]
        %v1682 = vld [vmem:[#allocation9 + $0x2c8] sm:$0xff]
        %v1683 = vld [vmem:[#allocation9 + $0x2d0] sm:$0xff]
        %v1684 = vld [vmem:[#allocation9 + $0x2d8] sm:$0xff]
        %v1685 = vld [vmem:[#allocation9 + $0x2e0] sm:$0xff]
        %v1686 = vld [vmem:[#allocation9 + $0x2e8] sm:$0xff]
        %v1687 = vld [vmem:[#allocation9 + $0x2f0] sm:$0xff]
        %v1688 = vld [vmem:[#allocation9 + $0x2f8] sm:$0xff]
        %v1689 = vld [vmem:[#allocation2] sm:$0x1e]
        %v1690 = vld [vmem:[#allocation2 + $0x8] sm:$0x1e]
        %v1691 = vld [vmem:[#allocation2 + $0x10] sm:$0x1e]
        %v1692 = vpack.c.bf16 %v1689, %v1689
        %v1693 = vpack.c.bf16 %v1690, %v1690
        %v1694 = vpack.c.bf16 %v1691, %v1691
        %s1695 = scalar_lea.vmem [#allocation9], 768
        %v1696 = vld [vmem:[%s1695] sm:$0xff]
        %v1697 = vld [vmem:[%s1695 + $0x8] sm:$0xff]
        %v1698 = vld [vmem:[%s1695 + $0x10] sm:$0xff]
        %v1699 = vld [vmem:[%s1695 + $0x18] sm:$0xff]
        %v1700 = vld [vmem:[%s1695 + $0x20] sm:$0xff]
        %v1701 = vld [vmem:[%s1695 + $0x28] sm:$0xff]
        %v1702 = vld [vmem:[%s1695 + $0x30] sm:$0xff]
        %v1703 = vld [vmem:[%s1695 + $0x38] sm:$0xff]
        %v1704 = vld [vmem:[%s1695 + $0x40] sm:$0xff]
        %v1705 = vld [vmem:[%s1695 + $0x48] sm:$0xff]
        %v1706 = vld [vmem:[%s1695 + $0x50] sm:$0xff]
        %v1707 = vld [vmem:[%s1695 + $0x58] sm:$0xff]
        %v1708 = vld [vmem:[%s1695 + $0x60] sm:$0xff]
        %v1709 = vld [vmem:[%s1695 + $0x68] sm:$0xff]
        %v1710 = vld [vmem:[%s1695 + $0x70] sm:$0xff]
        %v1711 = vld [vmem:[%s1695 + $0x78] sm:$0xff]
        %v1712 = vld [vmem:[%s1695 + $0x80] sm:$0xff]
        %v1713 = vld [vmem:[%s1695 + $0x88] sm:$0xff]
        %v1714 = vld [vmem:[%s1695 + $0x90] sm:$0xff]
        %v1715 = vld [vmem:[%s1695 + $0x98] sm:$0xff]
        %v1716 = vld [vmem:[%s1695 + $0xa0] sm:$0xff]
        %v1717 = vld [vmem:[%s1695 + $0xa8] sm:$0xff]
        %v1718 = vld [vmem:[%s1695 + $0xb0] sm:$0xff]
        %v1719 = vld [vmem:[%s1695 + $0xb8] sm:$0xff]
        %v1720 = vld [vmem:[%s1695 + $0xc0] sm:$0xff]
        %v1721 = vld [vmem:[%s1695 + $0xc8] sm:$0xff]
        %v1722 = vld [vmem:[%s1695 + $0xd0] sm:$0xff]
        %v1723 = vld [vmem:[%s1695 + $0xd8] sm:$0xff]
        %v1724 = vld [vmem:[%s1695 + $0xe0] sm:$0xff]
        %v1725 = vld [vmem:[%s1695 + $0xe8] sm:$0xff]
        %v1726 = vld [vmem:[%s1695 + $0xf0] sm:$0xff]
        %v1727 = vld [vmem:[%s1695 + $0xf8] sm:$0xff]
        %v1728 = vld [vmem:[%s1695 + $0x100] sm:$0xff]
        %v1729 = vld [vmem:[%s1695 + $0x108] sm:$0xff]
        %v1730 = vld [vmem:[%s1695 + $0x110] sm:$0xff]
        %v1731 = vld [vmem:[%s1695 + $0x118] sm:$0xff]
        %v1732 = vld [vmem:[%s1695 + $0x120] sm:$0xff]
        %v1733 = vld [vmem:[%s1695 + $0x128] sm:$0xff]
        %v1734 = vld [vmem:[%s1695 + $0x130] sm:$0xff]
        %v1735 = vld [vmem:[%s1695 + $0x138] sm:$0xff]
        %v1736 = vld [vmem:[%s1695 + $0x140] sm:$0xff]
        %v1737 = vld [vmem:[%s1695 + $0x148] sm:$0xff]
        %v1738 = vld [vmem:[%s1695 + $0x150] sm:$0xff]
        %v1739 = vld [vmem:[%s1695 + $0x158] sm:$0xff]
        %v1740 = vld [vmem:[%s1695 + $0x160] sm:$0xff]
        %v1741 = vld [vmem:[%s1695 + $0x168] sm:$0xff]
        %v1742 = vld [vmem:[%s1695 + $0x170] sm:$0xff]
        %v1743 = vld [vmem:[%s1695 + $0x178] sm:$0xff]
        %v1744 = vld [vmem:[%s1695 + $0x180] sm:$0xff]
        %v1745 = vld [vmem:[%s1695 + $0x188] sm:$0xff]
        %v1746 = vld [vmem:[%s1695 + $0x190] sm:$0xff]
        %v1747 = vld [vmem:[%s1695 + $0x198] sm:$0xff]
        %v1748 = vld [vmem:[%s1695 + $0x1a0] sm:$0xff]
        %v1749 = vld [vmem:[%s1695 + $0x1a8] sm:$0xff]
        %v1750 = vld [vmem:[%s1695 + $0x1b0] sm:$0xff]
        %v1751 = vld [vmem:[%s1695 + $0x1b8] sm:$0xff]
        %v1752 = vld [vmem:[%s1695 + $0x1c0] sm:$0xff]
        %v1753 = vld [vmem:[%s1695 + $0x1c8] sm:$0xff]
        %v1754 = vld [vmem:[%s1695 + $0x1d0] sm:$0xff]
        %v1755 = vld [vmem:[%s1695 + $0x1d8] sm:$0xff]
        %v1756 = vld [vmem:[%s1695 + $0x1e0] sm:$0xff]
        %v1757 = vld [vmem:[%s1695 + $0x1e8] sm:$0xff]
        %v1758 = vld [vmem:[%s1695 + $0x1f0] sm:$0xff]
        %v1759 = vld [vmem:[%s1695 + $0x1f8] sm:$0xff]
        %v1760 = vld [vmem:[%s1695 + $0x200] sm:$0xff]
        %v1761 = vld [vmem:[%s1695 + $0x208] sm:$0xff]
        %v1762 = vld [vmem:[%s1695 + $0x210] sm:$0xff]
        %v1763 = vld [vmem:[%s1695 + $0x218] sm:$0xff]
        %v1764 = vld [vmem:[%s1695 + $0x220] sm:$0xff]
        %v1765 = vld [vmem:[%s1695 + $0x228] sm:$0xff]
        %v1766 = vld [vmem:[%s1695 + $0x230] sm:$0xff]
        %v1767 = vld [vmem:[%s1695 + $0x238] sm:$0xff]
        %v1768 = vld [vmem:[%s1695 + $0x240] sm:$0xff]
        %v1769 = vld [vmem:[%s1695 + $0x248] sm:$0xff]
        %v1770 = vld [vmem:[%s1695 + $0x250] sm:$0xff]
        %v1771 = vld [vmem:[%s1695 + $0x258] sm:$0xff]
        %v1772 = vld [vmem:[%s1695 + $0x260] sm:$0xff]
        %v1773 = vld [vmem:[%s1695 + $0x268] sm:$0xff]
        %v1774 = vld [vmem:[%s1695 + $0x270] sm:$0xff]
        %v1775 = vld [vmem:[%s1695 + $0x278] sm:$0xff]
        %v1776 = vld [vmem:[%s1695 + $0x280] sm:$0xff]
        %v1777 = vld [vmem:[%s1695 + $0x288] sm:$0xff]
        %v1778 = vld [vmem:[%s1695 + $0x290] sm:$0xff]
        %v1779 = vld [vmem:[%s1695 + $0x298] sm:$0xff]
        %v1780 = vld [vmem:[%s1695 + $0x2a0] sm:$0xff]
        %v1781 = vld [vmem:[%s1695 + $0x2a8] sm:$0xff]
        %v1782 = vld [vmem:[%s1695 + $0x2b0] sm:$0xff]
        %v1783 = vld [vmem:[%s1695 + $0x2b8] sm:$0xff]
        %v1784 = vld [vmem:[%s1695 + $0x2c0] sm:$0xff]
        %v1785 = vld [vmem:[%s1695 + $0x2c8] sm:$0xff]
        %v1786 = vld [vmem:[%s1695 + $0x2d0] sm:$0xff]
        %v1787 = vld [vmem:[%s1695 + $0x2d8] sm:$0xff]
        %v1788 = vld [vmem:[%s1695 + $0x2e0] sm:$0xff]
        %v1789 = vld [vmem:[%s1695 + $0x2e8] sm:$0xff]
        %v1790 = vld [vmem:[%s1695 + $0x2f0] sm:$0xff]
        %v1791 = vld [vmem:[%s1695 + $0x2f8] sm:$0xff]
        %v1793 = vshrl.u32 %v1692, 16
        %v1795 = vshll.u32 %v1692, 16
        %v1797 = vrot.slane %v1795, 1
        %v1798 = vor.u32 %v1793, %v1797
        %v1800 = vshrl.u32 %v1693, 16
        %v1802 = vshll.u32 %v1693, 16
        %v1804 = vrot.slane %v1802, 1
        %v1805 = vor.u32 %v1800, %v1804
        %v1807 = vshrl.u32 %v1694, 16
        %v1809 = vshll.u32 %v1694, 16
        %v1811 = vrot.slane %v1809, 1
        %v1812 = vor.u32 %v1807, %v1811
        %v1912 = vunpack.c.l.b16 %v1696
        %v1913 = vunpack.c.h.b16 %v1696
        %v1914 = vunpack.c.l.b16 %v1697
        %v1915 = vunpack.c.h.b16 %v1697
        %v1916 = vunpack.c.l.b16 %v1698
        %v1917 = vunpack.c.h.b16 %v1698
        %v1918 = vunpack.c.l.b16 %v1699
        %v1919 = vunpack.c.h.b16 %v1699
        %v1920 = vunpack.c.l.b16 %v1700
        %v1921 = vunpack.c.h.b16 %v1700
        %v1922 = vunpack.c.l.b16 %v1701
        %v1923 = vunpack.c.h.b16 %v1701
        %v1924 = vunpack.c.l.b16 %v1702
        %v1925 = vunpack.c.h.b16 %v1702
        %v1926 = vunpack.c.l.b16 %v1703
        %v1927 = vunpack.c.h.b16 %v1703
        %v1928 = vunpack.c.l.b16 %v1704
        %v1929 = vunpack.c.h.b16 %v1704
        %v1930 = vunpack.c.l.b16 %v1705
        %v1931 = vunpack.c.h.b16 %v1705
        %v1932 = vunpack.c.l.b16 %v1706
        %v1933 = vunpack.c.h.b16 %v1706
        %v1934 = vunpack.c.l.b16 %v1707
        %v1935 = vunpack.c.h.b16 %v1707
        %v1936 = vunpack.c.l.b16 %v1708
        %v1937 = vunpack.c.h.b16 %v1708
        %v1938 = vunpack.c.l.b16 %v1709
        %v1939 = vunpack.c.h.b16 %v1709
        %v1940 = vunpack.c.l.b16 %v1710
        %v1941 = vunpack.c.h.b16 %v1710
        %v1942 = vunpack.c.l.b16 %v1711
        %v1943 = vunpack.c.h.b16 %v1711
        %v1944 = vunpack.c.l.b16 %v1712
        %v1945 = vunpack.c.h.b16 %v1712
        %v1946 = vunpack.c.l.b16 %v1713
        %v1947 = vunpack.c.h.b16 %v1713
        %v1948 = vunpack.c.l.b16 %v1714
        %v1949 = vunpack.c.h.b16 %v1714
        %v1950 = vunpack.c.l.b16 %v1715
        %v1951 = vunpack.c.h.b16 %v1715
        %v1952 = vunpack.c.l.b16 %v1716
        %v1953 = vunpack.c.h.b16 %v1716
        %v1954 = vunpack.c.l.b16 %v1717
        %v1955 = vunpack.c.h.b16 %v1717
        %v1956 = vunpack.c.l.b16 %v1718
        %v1957 = vunpack.c.h.b16 %v1718
        %v1958 = vunpack.c.l.b16 %v1719
        %v1959 = vunpack.c.h.b16 %v1719
        %v1960 = vunpack.c.l.b16 %v1720
        %v1961 = vunpack.c.h.b16 %v1720
        %v1962 = vunpack.c.l.b16 %v1721
        %v1963 = vunpack.c.h.b16 %v1721
        %v1964 = vunpack.c.l.b16 %v1722
        %v1965 = vunpack.c.h.b16 %v1722
        %v1966 = vunpack.c.l.b16 %v1723
        %v1967 = vunpack.c.h.b16 %v1723
        %v1968 = vunpack.c.l.b16 %v1724
        %v1969 = vunpack.c.h.b16 %v1724
        %v1970 = vunpack.c.l.b16 %v1725
        %v1971 = vunpack.c.h.b16 %v1725
        %v1972 = vunpack.c.l.b16 %v1726
        %v1973 = vunpack.c.h.b16 %v1726
        %v1974 = vunpack.c.l.b16 %v1727
        %v1975 = vunpack.c.h.b16 %v1727
        %v1976 = vunpack.c.l.b16 %v1728
        %v1977 = vunpack.c.h.b16 %v1728
        %v1978 = vunpack.c.l.b16 %v1729
        %v1979 = vunpack.c.h.b16 %v1729
        %v1980 = vunpack.c.l.b16 %v1730
        %v1981 = vunpack.c.h.b16 %v1730
        %v1982 = vunpack.c.l.b16 %v1731
        %v1983 = vunpack.c.h.b16 %v1731
        %v1984 = vunpack.c.l.b16 %v1732
        %v1985 = vunpack.c.h.b16 %v1732
        %v1986 = vunpack.c.l.b16 %v1733
        %v1987 = vunpack.c.h.b16 %v1733
        %v1988 = vunpack.c.l.b16 %v1734
        %v1989 = vunpack.c.h.b16 %v1734
        %v1990 = vunpack.c.l.b16 %v1735
        %v1991 = vunpack.c.h.b16 %v1735
        %v1992 = vunpack.c.l.b16 %v1736
        %v1993 = vunpack.c.h.b16 %v1736
        %v1994 = vunpack.c.l.b16 %v1737
        %v1995 = vunpack.c.h.b16 %v1737
        %v1996 = vunpack.c.l.b16 %v1738
        %v1997 = vunpack.c.h.b16 %v1738
        %v1998 = vunpack.c.l.b16 %v1739
        %v1999 = vunpack.c.h.b16 %v1739
        %v2000 = vunpack.c.l.b16 %v1740
        %v2001 = vunpack.c.h.b16 %v1740
        %v2002 = vunpack.c.l.b16 %v1741
        %v2003 = vunpack.c.h.b16 %v1741
        %v2004 = vunpack.c.l.b16 %v1742
        %v2005 = vunpack.c.h.b16 %v1742
        %v2006 = vunpack.c.l.b16 %v1743
        %v2007 = vunpack.c.h.b16 %v1743
        %v2008 = vunpack.c.l.b16 %v1744
        %v2009 = vunpack.c.h.b16 %v1744
        %v2010 = vunpack.c.l.b16 %v1745
        %v2011 = vunpack.c.h.b16 %v1745
        %v2012 = vunpack.c.l.b16 %v1746
        %v2013 = vunpack.c.h.b16 %v1746
        %v2014 = vunpack.c.l.b16 %v1747
        %v2015 = vunpack.c.h.b16 %v1747
        %v2016 = vunpack.c.l.b16 %v1748
        %v2017 = vunpack.c.h.b16 %v1748
        %v2018 = vunpack.c.l.b16 %v1749
        %v2019 = vunpack.c.h.b16 %v1749
        %v2020 = vunpack.c.l.b16 %v1750
        %v2021 = vunpack.c.h.b16 %v1750
        %v2022 = vunpack.c.l.b16 %v1751
        %v2023 = vunpack.c.h.b16 %v1751
        %v2024 = vunpack.c.l.b16 %v1752
        %v2025 = vunpack.c.h.b16 %v1752
        %v2026 = vunpack.c.l.b16 %v1753
        %v2027 = vunpack.c.h.b16 %v1753
        %v2028 = vunpack.c.l.b16 %v1754
        %v2029 = vunpack.c.h.b16 %v1754
        %v2030 = vunpack.c.l.b16 %v1755
        %v2031 = vunpack.c.h.b16 %v1755
        %v2032 = vunpack.c.l.b16 %v1756
        %v2033 = vunpack.c.h.b16 %v1756
        %v2034 = vunpack.c.l.b16 %v1757
        %v2035 = vunpack.c.h.b16 %v1757
        %v2036 = vunpack.c.l.b16 %v1758
        %v2037 = vunpack.c.h.b16 %v1758
        %v2038 = vunpack.c.l.b16 %v1759
        %v2039 = vunpack.c.h.b16 %v1759
        %v2040 = vunpack.c.l.b16 %v1760
        %v2041 = vunpack.c.h.b16 %v1760
        %v2042 = vunpack.c.l.b16 %v1761
        %v2043 = vunpack.c.h.b16 %v1761
        %v2044 = vunpack.c.l.b16 %v1762
        %v2045 = vunpack.c.h.b16 %v1762
        %v2046 = vunpack.c.l.b16 %v1763
        %v2047 = vunpack.c.h.b16 %v1763
        %v2048 = vunpack.c.l.b16 %v1764
        %v2049 = vunpack.c.h.b16 %v1764
        %v2050 = vunpack.c.l.b16 %v1765
        %v2051 = vunpack.c.h.b16 %v1765
        %v2052 = vunpack.c.l.b16 %v1766
        %v2053 = vunpack.c.h.b16 %v1766
        %v2054 = vunpack.c.l.b16 %v1767
        %v2055 = vunpack.c.h.b16 %v1767
        %v2056 = vunpack.c.l.b16 %v1768
        %v2057 = vunpack.c.h.b16 %v1768
        %v2058 = vunpack.c.l.b16 %v1769
        %v2059 = vunpack.c.h.b16 %v1769
        %v2060 = vunpack.c.l.b16 %v1770
        %v2061 = vunpack.c.h.b16 %v1770
        %v2062 = vunpack.c.l.b16 %v1771
        %v2063 = vunpack.c.h.b16 %v1771
        %v2064 = vunpack.c.l.b16 %v1772
        %v2065 = vunpack.c.h.b16 %v1772
        %v2066 = vunpack.c.l.b16 %v1773
        %v2067 = vunpack.c.h.b16 %v1773
        %v2068 = vunpack.c.l.b16 %v1774
        %v2069 = vunpack.c.h.b16 %v1774
        %v2070 = vunpack.c.l.b16 %v1775
        %v2071 = vunpack.c.h.b16 %v1775
        %v2072 = vunpack.c.l.b16 %v1776
        %v2073 = vunpack.c.h.b16 %v1776
        %v2074 = vunpack.c.l.b16 %v1777
        %v2075 = vunpack.c.h.b16 %v1777
        %v2076 = vunpack.c.l.b16 %v1778
        %v2077 = vunpack.c.h.b16 %v1778
        %v2078 = vunpack.c.l.b16 %v1779
        %v2079 = vunpack.c.h.b16 %v1779
        %v2080 = vunpack.c.l.b16 %v1780
        %v2081 = vunpack.c.h.b16 %v1780
        %v2082 = vunpack.c.l.b16 %v1781
        %v2083 = vunpack.c.h.b16 %v1781
        %v2084 = vunpack.c.l.b16 %v1782
        %v2085 = vunpack.c.h.b16 %v1782
        %v2086 = vunpack.c.l.b16 %v1783
        %v2087 = vunpack.c.h.b16 %v1783
        %v2088 = vunpack.c.l.b16 %v1784
        %v2089 = vunpack.c.h.b16 %v1784
        %v2090 = vunpack.c.l.b16 %v1785
        %v2091 = vunpack.c.h.b16 %v1785
        %v2092 = vunpack.c.l.b16 %v1786
        %v2093 = vunpack.c.h.b16 %v1786
        %v2094 = vunpack.c.l.b16 %v1787
        %v2095 = vunpack.c.h.b16 %v1787
        %v2096 = vunpack.c.l.b16 %v1788
        %v2097 = vunpack.c.h.b16 %v1788
        %v2098 = vunpack.c.l.b16 %v1789
        %v2099 = vunpack.c.h.b16 %v1789
        %v2100 = vunpack.c.l.b16 %v1790
        %v2101 = vunpack.c.h.b16 %v1790
        %v2102 = vunpack.c.l.b16 %v1791
        %v2103 = vunpack.c.h.b16 %v1791
        %v2104 = vpack.c.b16 %v1916, %v1912
        %v2105 = vpack.c.b16 %v1917, %v1913
        %v2106 = vpack.c.b16 %v1918, %v1914
        %v2107 = vpack.c.b16 %v1919, %v1915
        %v2108 = vpack.c.b16 %v1924, %v1920
        %v2109 = vpack.c.b16 %v1925, %v1921
        %v2110 = vpack.c.b16 %v1926, %v1922
        %v2111 = vpack.c.b16 %v1927, %v1923
        %v2112 = vpack.c.b16 %v1932, %v1928
        %v2113 = vpack.c.b16 %v1933, %v1929
        %v2114 = vpack.c.b16 %v1934, %v1930
        %v2115 = vpack.c.b16 %v1935, %v1931
        %v2116 = vpack.c.b16 %v1940, %v1936
        %v2117 = vpack.c.b16 %v1941, %v1937
        %v2118 = vpack.c.b16 %v1942, %v1938
        %v2119 = vpack.c.b16 %v1943, %v1939
        %v2120 = vpack.c.b16 %v1948, %v1944
        %v2121 = vpack.c.b16 %v1949, %v1945
        %v2122 = vpack.c.b16 %v1950, %v1946
        %v2123 = vpack.c.b16 %v1951, %v1947
        %v2124 = vpack.c.b16 %v1956, %v1952
        %v2125 = vpack.c.b16 %v1957, %v1953
        %v2126 = vpack.c.b16 %v1958, %v1954
        %v2127 = vpack.c.b16 %v1959, %v1955
        %v2128 = vpack.c.b16 %v1964, %v1960
        %v2129 = vpack.c.b16 %v1965, %v1961
        %v2130 = vpack.c.b16 %v1966, %v1962
        %v2131 = vpack.c.b16 %v1967, %v1963
        %v2132 = vpack.c.b16 %v1972, %v1968
        %v2133 = vpack.c.b16 %v1973, %v1969
        %v2134 = vpack.c.b16 %v1974, %v1970
        %v2135 = vpack.c.b16 %v1975, %v1971
        %v2136 = vpack.c.b16 %v1980, %v1976
        %v2137 = vpack.c.b16 %v1981, %v1977
        %v2138 = vpack.c.b16 %v1982, %v1978
        %v2139 = vpack.c.b16 %v1983, %v1979
        %v2140 = vpack.c.b16 %v1988, %v1984
        %v2141 = vpack.c.b16 %v1989, %v1985
        %v2142 = vpack.c.b16 %v1990, %v1986
        %v2143 = vpack.c.b16 %v1991, %v1987
        %v2144 = vpack.c.b16 %v1996, %v1992
        %v2145 = vpack.c.b16 %v1997, %v1993
        %v2146 = vpack.c.b16 %v1998, %v1994
        %v2147 = vpack.c.b16 %v1999, %v1995
        %v2148 = vpack.c.b16 %v2004, %v2000
        %v2149 = vpack.c.b16 %v2005, %v2001
        %v2150 = vpack.c.b16 %v2006, %v2002
        %v2151 = vpack.c.b16 %v2007, %v2003
        %v2152 = vpack.c.b16 %v2012, %v2008
        %v2153 = vpack.c.b16 %v2013, %v2009
        %v2154 = vpack.c.b16 %v2014, %v2010
        %v2155 = vpack.c.b16 %v2015, %v2011
        %v2156 = vpack.c.b16 %v2020, %v2016
        %v2157 = vpack.c.b16 %v2021, %v2017
        %v2158 = vpack.c.b16 %v2022, %v2018
        %v2159 = vpack.c.b16 %v2023, %v2019
        %v2160 = vpack.c.b16 %v2028, %v2024
        %v2161 = vpack.c.b16 %v2029, %v2025
        %v2162 = vpack.c.b16 %v2030, %v2026
        %v2163 = vpack.c.b16 %v2031, %v2027
        %v2164 = vpack.c.b16 %v2036, %v2032
        %v2165 = vpack.c.b16 %v2037, %v2033
        %v2166 = vpack.c.b16 %v2038, %v2034
        %v2167 = vpack.c.b16 %v2039, %v2035
        %v2168 = vpack.c.b16 %v2044, %v2040
        %v2169 = vpack.c.b16 %v2045, %v2041
        %v2170 = vpack.c.b16 %v2046, %v2042
        %v2171 = vpack.c.b16 %v2047, %v2043
        %v2172 = vpack.c.b16 %v2052, %v2048
        %v2173 = vpack.c.b16 %v2053, %v2049
        %v2174 = vpack.c.b16 %v2054, %v2050
        %v2175 = vpack.c.b16 %v2055, %v2051
        %v2176 = vpack.c.b16 %v2060, %v2056
        %v2177 = vpack.c.b16 %v2061, %v2057
        %v2178 = vpack.c.b16 %v2062, %v2058
        %v2179 = vpack.c.b16 %v2063, %v2059
        %v2180 = vpack.c.b16 %v2068, %v2064
        %v2181 = vpack.c.b16 %v2069, %v2065
        %v2182 = vpack.c.b16 %v2070, %v2066
        %v2183 = vpack.c.b16 %v2071, %v2067
        %v2184 = vpack.c.b16 %v2076, %v2072
        %v2185 = vpack.c.b16 %v2077, %v2073
        %v2186 = vpack.c.b16 %v2078, %v2074
        %v2187 = vpack.c.b16 %v2079, %v2075
        %v2188 = vpack.c.b16 %v2084, %v2080
        %v2189 = vpack.c.b16 %v2085, %v2081
        %v2190 = vpack.c.b16 %v2086, %v2082
        %v2191 = vpack.c.b16 %v2087, %v2083
        %v2192 = vpack.c.b16 %v2092, %v2088
        %v2193 = vpack.c.b16 %v2093, %v2089
        %v2194 = vpack.c.b16 %v2094, %v2090
        %v2195 = vpack.c.b16 %v2095, %v2091
        %v2196 = vpack.c.b16 %v2100, %v2096
        %v2197 = vpack.c.b16 %v2101, %v2097
        %v2198 = vpack.c.b16 %v2102, %v2098
        %v2199 = vpack.c.b16 %v2103, %v2099
        %2296 = vmatprep.subr.bf16.mxu0 %v2105
        %2297 = vmatpush1.bf16.msra.mxu0 %v2104
        %2298 = vmatprep.subr.bf16.mxu0 %v2109
        %2299 = vmatpush1.bf16.msra.mxu0 %v2108
        %2300 = vmatprep.subr.bf16.mxu0 %v2113
        %2301 = vmatpush1.bf16.msra.mxu0 %v2112
        %2302 = vmatprep.subr.bf16.mxu0 %v2117
        %2303 = vmatpush1.bf16.msra.mxu0 %v2116
        %2304 = vmatprep.subr.bf16.mxu0 %v2121
        %2305 = vmatpush1.bf16.msra.mxu0 %v2120
        %2306 = vmatprep.subr.bf16.mxu0 %v2125
        %2307 = vmatpush1.bf16.msra.mxu0 %v2124
        %2308 = vmatprep.subr.bf16.mxu0 %v2129
        %2309 = vmatpush1.bf16.msra.mxu0 %v2128
        %2310 = vmatprep.subr.bf16.mxu0 %v2133
        %2311 = vmatpush1.bf16.msra.mxu0 %v2132
        %2312 = vmatprep.subr.bf16.mxu0 %v2137
        %2313 = vmatpush1.bf16.msra.mxu0 %v2136
        %2314 = vmatprep.subr.bf16.mxu0 %v2141
        %2315 = vmatpush1.bf16.msra.mxu0 %v2140
        %2316 = vmatprep.subr.bf16.mxu0 %v2145
        %2317 = vmatpush1.bf16.msra.mxu0 %v2144
        %2318 = vmatprep.subr.bf16.mxu0 %v2149
        %2319 = vmatpush1.bf16.msra.mxu0 %v2148
        %2320 = vmatprep.subr.bf16.mxu0 %v2153
        %2321 = vmatpush1.bf16.msra.mxu0 %v2152
        %2322 = vmatprep.subr.bf16.mxu0 %v2157
        %2323 = vmatpush1.bf16.msra.mxu0 %v2156
        %2324 = vmatprep.subr.bf16.mxu0 %v2161
        %2325 = vmatpush1.bf16.msra.mxu0 %v2160
        %2326 = vmatprep.subr.bf16.mxu0 %v2165
        %2327 = vmatpush1.bf16.msra.mxu0 %v2164
        %2328 = vmatprep.mubr.bf16.mxu0 %v1805
        %2329 = vmatmul.mubr.bf16.gmra.mrb[0].mxu0 %v1798
        %v2330 = vpop.f32.mrb[0].mxu0
        %v2331 = vadd.f32 0.0, %v2330
        %v2332 = vpop.f32.mrb[0].mxu0
        %v2333 = vadd.f32 0.0, %v2332
        %v2334 = vpop.f32.mrb[0].mxu0
        %v2335 = vpop.f32.mrb[0].mxu0
        %2336 = vdwg.mxu0
        %2337 = vmatprep.subr.bf16.mxu0 %v2169
        %2338 = vmatpush1.bf16.msra.mxu0 %v2168
        %2339 = vmatprep.subr.bf16.mxu0 %v2173
        %2340 = vmatpush1.bf16.msra.mxu0 %v2172
        %2341 = vmatprep.subr.bf16.mxu0 %v2177
        %2342 = vmatpush1.bf16.msra.mxu0 %v2176
        %2343 = vmatprep.subr.bf16.mxu0 %v2181
        %2344 = vmatpush1.bf16.msra.mxu0 %v2180
        %2345 = vmatprep.subr.bf16.mxu0 %v2185
        %2346 = vmatpush1.bf16.msra.mxu0 %v2184
        %2347 = vmatprep.subr.bf16.mxu0 %v2189
        %2348 = vmatpush1.bf16.msra.mxu0 %v2188
        %2349 = vmatprep.subr.bf16.mxu0 %v2193
        %2350 = vmatpush1.bf16.msra.mxu0 %v2192
        %2351 = vmatprep.subr.bf16.mxu0 %v2197
        %2352 = vmatpush1.bf16.msra.mxu0 %v2196
        %2353 = vmatprep.subr.bf16.mxu0 0
        %2354 = vmatpush1.bf16.msra.mxu0 0
        %2355 = vmatprep.subr.bf16.mxu0 0
        %2356 = vmatpush1.bf16.msra.mxu0 0
        %2357 = vmatprep.subr.bf16.mxu0 0
        %2358 = vmatpush1.bf16.msra.mxu0 0
        %2359 = vmatprep.subr.bf16.mxu0 0
        %2360 = vmatpush1.bf16.msra.mxu0 0
        %2361 = vmatprep.subr.bf16.mxu0 0
        %2362 = vmatpush1.bf16.msra.mxu0 0
        %2363 = vmatprep.subr.bf16.mxu0 0
        %2364 = vmatpush1.bf16.msra.mxu0 0
        %2365 = vmatprep.subr.bf16.mxu0 0
        %2366 = vmatpush1.bf16.msra.mxu0 0
        %2367 = vmatprep.subr.bf16.mxu0 0
        %2368 = vmatpush1.bf16.msra.mxu0 0
        %2369 = vmatprep.mubr.bf16.mxu0 0
        %2370 = vmatmul.mubr.bf16.gmra.mrb[0].mxu0 %v1812
        %v2371 = vpop.f32.mrb[0].mxu0
        %v2372 = vadd.f32 %v2331, %v2371
        %v2373 = vpop.f32.mrb[0].mxu0
        %v2374 = vadd.f32 %v2333, %v2373
        %v2375 = vpop.f32.mrb[0].mxu0
        %v2376 = vpop.f32.mrb[0].mxu0
        %2377 = vdwg.mxu0
        %2378 = vmatprep.subr.bf16.mxu0 %v2107
        %2379 = vmatpush1.bf16.msra.mxu0 %v2106
        %2380 = vmatprep.subr.bf16.mxu0 %v2111
        %2381 = vmatpush1.bf16.msra.mxu0 %v2110
        %2382 = vmatprep.subr.bf16.mxu0 %v2115
        %2383 = vmatpush1.bf16.msra.mxu0 %v2114
        %2384 = vmatprep.subr.bf16.mxu0 %v2119
        %2385 = vmatpush1.bf16.msra.mxu0 %v2118
        %2386 = vmatprep.subr.bf16.mxu0 %v2123
        %2387 = vmatpush1.bf16.msra.mxu0 %v2122
        %2388 = vmatprep.subr.bf16.mxu0 %v2127
        %2389 = vmatpush1.bf16.msra.mxu0 %v2126
        %2390 = vmatprep.subr.bf16.mxu0 %v2131
        %2391 = vmatpush1.bf16.msra.mxu0 %v2130
        %2392 = vmatprep.subr.bf16.mxu0 %v2135
        %2393 = vmatpush1.bf16.msra.mxu0 %v2134
        %2394 = vmatprep.subr.bf16.mxu0 %v2139
        %2395 = vmatpush1.bf16.msra.mxu0 %v2138
        %2396 = vmatprep.subr.bf16.mxu0 %v2143
        %2397 = vmatpush1.bf16.msra.mxu0 %v2142
        %2398 = vmatprep.subr.bf16.mxu0 %v2147
        %2399 = vmatpush1.bf16.msra.mxu0 %v2146
        %2400 = vmatprep.subr.bf16.mxu0 %v2151
        %2401 = vmatpush1.bf16.msra.mxu0 %v2150
        %2402 = vmatprep.subr.bf16.mxu0 %v2155
        %2403 = vmatpush1.bf16.msra.mxu0 %v2154
        %2404 = vmatprep.subr.bf16.mxu0 %v2159
        %2405 = vmatpush1.bf16.msra.mxu0 %v2158
        %2406 = vmatprep.subr.bf16.mxu0 %v2163
        %2407 = vmatpush1.bf16.msra.mxu0 %v2162
        %2408 = vmatprep.subr.bf16.mxu0 %v2167
        %2409 = vmatpush1.bf16.msra.mxu0 %v2166
        %2410 = vmatprep.mubr.bf16.mxu0 %v1805
        %2411 = vmatmul.mubr.bf16.gmra.mrb[0].mxu0 %v1798
        %v2412 = vpop.f32.mrb[0].mxu0
        %v2413 = vadd.f32 0.0, %v2412
        %v2414 = vpop.f32.mrb[0].mxu0
        %v2415 = vadd.f32 0.0, %v2414
        %v2416 = vpop.f32.mrb[0].mxu0
        %v2417 = vpop.f32.mrb[0].mxu0
        %2418 = vdwg.mxu0
        %2419 = vmatprep.subr.bf16.mxu0 %v2171
        %2420 = vmatpush1.bf16.msra.mxu0 %v2170
        %2421 = vmatprep.subr.bf16.mxu0 %v2175
        %2422 = vmatpush1.bf16.msra.mxu0 %v2174
        %2423 = vmatprep.subr.bf16.mxu0 %v2179
        %2424 = vmatpush1.bf16.msra.mxu0 %v2178
        %2425 = vmatprep.subr.bf16.mxu0 %v2183
        %2426 = vmatpush1.bf16.msra.mxu0 %v2182
        %2427 = vmatprep.subr.bf16.mxu0 %v2187
        %2428 = vmatpush1.bf16.msra.mxu0 %v2186
        %2429 = vmatprep.subr.bf16.mxu0 %v2191
        %2430 = vmatpush1.bf16.msra.mxu0 %v2190
        %2431 = vmatprep.subr.bf16.mxu0 %v2195
        %2432 = vmatpush1.bf16.msra.mxu0 %v2194
        %2433 = vmatprep.subr.bf16.mxu0 %v2199
        %2434 = vmatpush1.bf16.msra.mxu0 %v2198
        %2435 = vmatprep.subr.bf16.mxu0 0
        %2436 = vmatpush1.bf16.msra.mxu0 0
        %2437 = vmatprep.subr.bf16.mxu0 0
        %2438 = vmatpush1.bf16.msra.mxu0 0
        %2439 = vmatprep.subr.bf16.mxu0 0
        %2440 = vmatpush1.bf16.msra.mxu0 0
        %2441 = vmatprep.subr.bf16.mxu0 0
        %2442 = vmatpush1.bf16.msra.mxu0 0
        %2443 = vmatprep.subr.bf16.mxu0 0
        %2444 = vmatpush1.bf16.msra.mxu0 0
        %2445 = vmatprep.subr.bf16.mxu0 0
        %2446 = vmatpush1.bf16.msra.mxu0 0
        %2447 = vmatprep.subr.bf16.mxu0 0
        %2448 = vmatpush1.bf16.msra.mxu0 0
        %2449 = vmatprep.subr.bf16.mxu0 0
        %2450 = vmatpush1.bf16.msra.mxu0 0
        %2451 = vmatprep.mubr.bf16.mxu0 0
        %2452 = vmatmul.mubr.bf16.gmra.mrb[0].mxu0 %v1812
        %v2453 = vpop.f32.mrb[0].mxu0
        %v2454 = vadd.f32 %v2413, %v2453
        %v2455 = vpop.f32.mrb[0].mxu0
        %v2456 = vadd.f32 %v2415, %v2455
        %v2457 = vpop.f32.mrb[0].mxu0
        %v2458 = vpop.f32.mrb[0].mxu0
        %2459 = vdwg.mxu0
        %v2556 = vunpack.c.l.b16 %v1593
        %v2557 = vunpack.c.h.b16 %v1593
        %v2558 = vunpack.c.l.b16 %v1594
        %v2559 = vunpack.c.h.b16 %v1594
        %v2560 = vunpack.c.l.b16 %v1595
        %v2561 = vunpack.c.h.b16 %v1595
        %v2562 = vunpack.c.l.b16 %v1596
        %v2563 = vunpack.c.h.b16 %v1596
        %v2564 = vunpack.c.l.b16 %v1597
        %v2565 = vunpack.c.h.b16 %v1597
        %v2566 = vunpack.c.l.b16 %v1598
        %v2567 = vunpack.c.h.b16 %v1598
        %v2568 = vunpack.c.l.b16 %v1599
        %v2569 = vunpack.c.h.b16 %v1599
        %v2570 = vunpack.c.l.b16 %v1600
        %v2571 = vunpack.c.h.b16 %v1600
        %v2572 = vunpack.c.l.b16 %v1601
        %v2573 = vunpack.c.h.b16 %v1601
        %v2574 = vunpack.c.l.b16 %v1602
        %v2575 = vunpack.c.h.b16 %v1602
        %v2576 = vunpack.c.l.b16 %v1603
        %v2577 = vunpack.c.h.b16 %v1603
        %v2578 = vunpack.c.l.b16 %v1604
        %v2579 = vunpack.c.h.b16 %v1604
        %v2580 = vunpack.c.l.b16 %v1605
        %v2581 = vunpack.c.h.b16 %v1605
        %v2582 = vunpack.c.l.b16 %v1606
        %v2583 = vunpack.c.h.b16 %v1606
        %v2584 = vunpack.c.l.b16 %v1607
        %v2585 = vunpack.c.h.b16 %v1607
        %v2586 = vunpack.c.l.b16 %v1608
        %v2587 = vunpack.c.h.b16 %v1608
        %v2588 = vunpack.c.l.b16 %v1609
        %v2589 = vunpack.c.h.b16 %v1609
        %v2590 = vunpack.c.l.b16 %v1610
        %v2591 = vunpack.c.h.b16 %v1610
        %v2592 = vunpack.c.l.b16 %v1611
        %v2593 = vunpack.c.h.b16 %v1611
        %v2594 = vunpack.c.l.b16 %v1612
        %v2595 = vunpack.c.h.b16 %v1612
        %v2596 = vunpack.c.l.b16 %v1613
        %v2597 = vunpack.c.h.b16 %v1613
        %v2598 = vunpack.c.l.b16 %v1614
        %v2599 = vunpack.c.h.b16 %v1614
        %v2600 = vunpack.c.l.b16 %v1615
        %v2601 = vunpack.c.h.b16 %v1615
        %v2602 = vunpack.c.l.b16 %v1616
        %v2603 = vunpack.c.h.b16 %v1616
        %v2604 = vunpack.c.l.b16 %v1617
        %v2605 = vunpack.c.h.b16 %v1617
        %v2606 = vunpack.c.l.b16 %v1618
        %v2607 = vunpack.c.h.b16 %v1618
        %v2608 = vunpack.c.l.b16 %v1619
        %v2609 = vunpack.c.h.b16 %v1619
        %v2610 = vunpack.c.l.b16 %v1620
        %v2611 = vunpack.c.h.b16 %v1620
        %v2612 = vunpack.c.l.b16 %v1621
        %v2613 = vunpack.c.h.b16 %v1621
        %v2614 = vunpack.c.l.b16 %v1622
        %v2615 = vunpack.c.h.b16 %v1622
        %v2616 = vunpack.c.l.b16 %v1623
        %v2617 = vunpack.c.h.b16 %v1623
        %v2618 = vunpack.c.l.b16 %v1624
        %v2619 = vunpack.c.h.b16 %v1624
        %v2620 = vunpack.c.l.b16 %v1625
        %v2621 = vunpack.c.h.b16 %v1625
        %v2622 = vunpack.c.l.b16 %v1626
        %v2623 = vunpack.c.h.b16 %v1626
        %v2624 = vunpack.c.l.b16 %v1627
        %v2625 = vunpack.c.h.b16 %v1627
        %v2626 = vunpack.c.l.b16 %v1628
        %v2627 = vunpack.c.h.b16 %v1628
        %v2628 = vunpack.c.l.b16 %v1629
        %v2629 = vunpack.c.h.b16 %v1629
        %v2630 = vunpack.c.l.b16 %v1630
        %v2631 = vunpack.c.h.b16 %v1630
        %v2632 = vunpack.c.l.b16 %v1631
        %v2633 = vunpack.c.h.b16 %v1631
        %v2634 = vunpack.c.l.b16 %v1632
        %v2635 = vunpack.c.h.b16 %v1632
        %v2636 = vunpack.c.l.b16 %v1633
        %v2637 = vunpack.c.h.b16 %v1633
        %v2638 = vunpack.c.l.b16 %v1634
        %v2639 = vunpack.c.h.b16 %v1634
        %v2640 = vunpack.c.l.b16 %v1635
        %v2641 = vunpack.c.h.b16 %v1635
        %v2642 = vunpack.c.l.b16 %v1636
        %v2643 = vunpack.c.h.b16 %v1636
        %v2644 = vunpack.c.l.b16 %v1637
        %v2645 = vunpack.c.h.b16 %v1637
        %v2646 = vunpack.c.l.b16 %v1638
        %v2647 = vunpack.c.h.b16 %v1638
        %v2648 = vunpack.c.l.b16 %v1639
        %v2649 = vunpack.c.h.b16 %v1639
        %v2650 = vunpack.c.l.b16 %v1640
        %v2651 = vunpack.c.h.b16 %v1640
        %v2652 = vunpack.c.l.b16 %v1641
        %v2653 = vunpack.c.h.b16 %v1641
        %v2654 = vunpack.c.l.b16 %v1642
        %v2655 = vunpack.c.h.b16 %v1642
        %v2656 = vunpack.c.l.b16 %v1643
        %v2657 = vunpack.c.h.b16 %v1643
        %v2658 = vunpack.c.l.b16 %v1644
        %v2659 = vunpack.c.h.b16 %v1644
        %v2660 = vunpack.c.l.b16 %v1645
        %v2661 = vunpack.c.h.b16 %v1645
        %v2662 = vunpack.c.l.b16 %v1646
        %v2663 = vunpack.c.h.b16 %v1646
        %v2664 = vunpack.c.l.b16 %v1647
        %v2665 = vunpack.c.h.b16 %v1647
        %v2666 = vunpack.c.l.b16 %v1648
        %v2667 = vunpack.c.h.b16 %v1648
        %v2668 = vunpack.c.l.b16 %v1649
        %v2669 = vunpack.c.h.b16 %v1649
        %v2670 = vunpack.c.l.b16 %v1650
        %v2671 = vunpack.c.h.b16 %v1650
        %v2672 = vunpack.c.l.b16 %v1651
        %v2673 = vunpack.c.h.b16 %v1651
        %v2674 = vunpack.c.l.b16 %v1652
        %v2675 = vunpack.c.h.b16 %v1652
        %v2676 = vunpack.c.l.b16 %v1653
        %v2677 = vunpack.c.h.b16 %v1653
        %v2678 = vunpack.c.l.b16 %v1654
        %v2679 = vunpack.c.h.b16 %v1654
        %v2680 = vunpack.c.l.b16 %v1655
        %v2681 = vunpack.c.h.b16 %v1655
        %v2682 = vunpack.c.l.b16 %v1656
        %v2683 = vunpack.c.h.b16 %v1656
        %v2684 = vunpack.c.l.b16 %v1657
        %v2685 = vunpack.c.h.b16 %v1657
        %v2686 = vunpack.c.l.b16 %v1658
        %v2687 = vunpack.c.h.b16 %v1658
        %v2688 = vunpack.c.l.b16 %v1659
        %v2689 = vunpack.c.h.b16 %v1659
        %v2690 = vunpack.c.l.b16 %v1660
        %v2691 = vunpack.c.h.b16 %v1660
        %v2692 = vunpack.c.l.b16 %v1661
        %v2693 = vunpack.c.h.b16 %v1661
        %v2694 = vunpack.c.l.b16 %v1662
        %v2695 = vunpack.c.h.b16 %v1662
        %v2696 = vunpack.c.l.b16 %v1663
        %v2697 = vunpack.c.h.b16 %v1663
        %v2698 = vunpack.c.l.b16 %v1664
        %v2699 = vunpack.c.h.b16 %v1664
        %v2700 = vunpack.c.l.b16 %v1665
        %v2701 = vunpack.c.h.b16 %v1665
        %v2702 = vunpack.c.l.b16 %v1666
        %v2703 = vunpack.c.h.b16 %v1666
        %v2704 = vunpack.c.l.b16 %v1667
        %v2705 = vunpack.c.h.b16 %v1667
        %v2706 = vunpack.c.l.b16 %v1668
        %v2707 = vunpack.c.h.b16 %v1668
        %v2708 = vunpack.c.l.b16 %v1669
        %v2709 = vunpack.c.h.b16 %v1669
        %v2710 = vunpack.c.l.b16 %v1670
        %v2711 = vunpack.c.h.b16 %v1670
        %v2712 = vunpack.c.l.b16 %v1671
        %v2713 = vunpack.c.h.b16 %v1671
        %v2714 = vunpack.c.l.b16 %v1672
        %v2715 = vunpack.c.h.b16 %v1672
        %v2716 = vunpack.c.l.b16 %v1673
        %v2717 = vunpack.c.h.b16 %v1673
        %v2718 = vunpack.c.l.b16 %v1674
        %v2719 = vunpack.c.h.b16 %v1674
        %v2720 = vunpack.c.l.b16 %v1675
        %v2721 = vunpack.c.h.b16 %v1675
        %v2722 = vunpack.c.l.b16 %v1676
        %v2723 = vunpack.c.h.b16 %v1676
        %v2724 = vunpack.c.l.b16 %v1677
        %v2725 = vunpack.c.h.b16 %v1677
        %v2726 = vunpack.c.l.b16 %v1678
        %v2727 = vunpack.c.h.b16 %v1678
        %v2728 = vunpack.c.l.b16 %v1679
        %v2729 = vunpack.c.h.b16 %v1679
        %v2730 = vunpack.c.l.b16 %v1680
        %v2731 = vunpack.c.h.b16 %v1680
        %v2732 = vunpack.c.l.b16 %v1681
        %v2733 = vunpack.c.h.b16 %v1681
        %v2734 = vunpack.c.l.b16 %v1682
        %v2735 = vunpack.c.h.b16 %v1682
        %v2736 = vunpack.c.l.b16 %v1683
        %v2737 = vunpack.c.h.b16 %v1683
        %v2738 = vunpack.c.l.b16 %v1684
        %v2739 = vunpack.c.h.b16 %v1684
        %v2740 = vunpack.c.l.b16 %v1685
        %v2741 = vunpack.c.h.b16 %v1685
        %v2742 = vunpack.c.l.b16 %v1686
        %v2743 = vunpack.c.h.b16 %v1686
        %v2744 = vunpack.c.l.b16 %v1687
        %v2745 = vunpack.c.h.b16 %v1687
        %v2746 = vunpack.c.l.b16 %v1688
        %v2747 = vunpack.c.h.b16 %v1688
        %v2748 = vpack.c.b16 %v2560, %v2556
        %v2749 = vpack.c.b16 %v2561, %v2557
        %v2750 = vpack.c.b16 %v2562, %v2558
        %v2751 = vpack.c.b16 %v2563, %v2559
        %v2752 = vpack.c.b16 %v2568, %v2564
        %v2753 = vpack.c.b16 %v2569, %v2565
        %v2754 = vpack.c.b16 %v2570, %v2566
        %v2755 = vpack.c.b16 %v2571, %v2567
        %v2756 = vpack.c.b16 %v2576, %v2572
        %v2757 = vpack.c.b16 %v2577, %v2573
        %v2758 = vpack.c.b16 %v2578, %v2574
        %v2759 = vpack.c.b16 %v2579, %v2575
        %v2760 = vpack.c.b16 %v2584, %v2580
        %v2761 = vpack.c.b16 %v2585, %v2581
        %v2762 = vpack.c.b16 %v2586, %v2582
        %v2763 = vpack.c.b16 %v2587, %v2583
        %v2764 = vpack.c.b16 %v2592, %v2588
        %v2765 = vpack.c.b16 %v2593, %v2589
        %v2766 = vpack.c.b16 %v2594, %v2590
        %v2767 = vpack.c.b16 %v2595, %v2591
        %v2768 = vpack.c.b16 %v2600, %v2596
        %v2769 = vpack.c.b16 %v2601, %v2597
        %v2770 = vpack.c.b16 %v2602, %v2598
        %v2771 = vpack.c.b16 %v2603, %v2599
        %v2772 = vpack.c.b16 %v2608, %v2604
        %v2773 = vpack.c.b16 %v2609, %v2605
        %v2774 = vpack.c.b16 %v2610, %v2606
        %v2775 = vpack.c.b16 %v2611, %v2607
        %v2776 = vpack.c.b16 %v2616, %v2612
        %v2777 = vpack.c.b16 %v2617, %v2613
        %v2778 = vpack.c.b16 %v2618, %v2614
        %v2779 = vpack.c.b16 %v2619, %v2615
        %v2780 = vpack.c.b16 %v2624, %v2620
        %v2781 = vpack.c.b16 %v2625, %v2621
        %v2782 = vpack.c.b16 %v2626, %v2622
        %v2783 = vpack.c.b16 %v2627, %v2623
        %v2784 = vpack.c.b16 %v2632, %v2628
        %v2785 = vpack.c.b16 %v2633, %v2629
        %v2786 = vpack.c.b16 %v2634, %v2630
        %v2787 = vpack.c.b16 %v2635, %v2631
        %v2788 = vpack.c.b16 %v2640, %v2636
        %v2789 = vpack.c.b16 %v2641, %v2637
        %v2790 = vpack.c.b16 %v2642, %v2638
        %v2791 = vpack.c.b16 %v2643, %v2639
        %v2792 = vpack.c.b16 %v2648, %v2644
        %v2793 = vpack.c.b16 %v2649, %v2645
        %v2794 = vpack.c.b16 %v2650, %v2646
        %v2795 = vpack.c.b16 %v2651, %v2647
        %v2796 = vpack.c.b16 %v2656, %v2652
        %v2797 = vpack.c.b16 %v2657, %v2653
        %v2798 = vpack.c.b16 %v2658, %v2654
        %v2799 = vpack.c.b16 %v2659, %v2655
        %v2800 = vpack.c.b16 %v2664, %v2660
        %v2801 = vpack.c.b16 %v2665, %v2661
        %v2802 = vpack.c.b16 %v2666, %v2662
        %v2803 = vpack.c.b16 %v2667, %v2663
        %v2804 = vpack.c.b16 %v2672, %v2668
        %v2805 = vpack.c.b16 %v2673, %v2669
        %v2806 = vpack.c.b16 %v2674, %v2670
        %v2807 = vpack.c.b16 %v2675, %v2671
        %v2808 = vpack.c.b16 %v2680, %v2676
        %v2809 = vpack.c.b16 %v2681, %v2677
        %v2810 = vpack.c.b16 %v2682, %v2678
        %v2811 = vpack.c.b16 %v2683, %v2679
        %v2812 = vpack.c.b16 %v2688, %v2684
        %v2813 = vpack.c.b16 %v2689, %v2685
        %v2814 = vpack.c.b16 %v2690, %v2686
        %v2815 = vpack.c.b16 %v2691, %v2687
        %v2816 = vpack.c.b16 %v2696, %v2692
        %v2817 = vpack.c.b16 %v2697, %v2693
        %v2818 = vpack.c.b16 %v2698, %v2694
        %v2819 = vpack.c.b16 %v2699, %v2695
        %v2820 = vpack.c.b16 %v2704, %v2700
        %v2821 = vpack.c.b16 %v2705, %v2701
        %v2822 = vpack.c.b16 %v2706, %v2702
        %v2823 = vpack.c.b16 %v2707, %v2703
        %v2824 = vpack.c.b16 %v2712, %v2708
        %v2825 = vpack.c.b16 %v2713, %v2709
        %v2826 = vpack.c.b16 %v2714, %v2710
        %v2827 = vpack.c.b16 %v2715, %v2711
        %v2828 = vpack.c.b16 %v2720, %v2716
        %v2829 = vpack.c.b16 %v2721, %v2717
        %v2830 = vpack.c.b16 %v2722, %v2718
        %v2831 = vpack.c.b16 %v2723, %v2719
        %v2832 = vpack.c.b16 %v2728, %v2724
        %v2833 = vpack.c.b16 %v2729, %v2725
        %v2834 = vpack.c.b16 %v2730, %v2726
        %v2835 = vpack.c.b16 %v2731, %v2727
        %v2836 = vpack.c.b16 %v2736, %v2732
        %v2837 = vpack.c.b16 %v2737, %v2733
        %v2838 = vpack.c.b16 %v2738, %v2734
        %v2839 = vpack.c.b16 %v2739, %v2735
        %v2840 = vpack.c.b16 %v2744, %v2740
        %v2841 = vpack.c.b16 %v2745, %v2741
        %v2842 = vpack.c.b16 %v2746, %v2742
        %v2843 = vpack.c.b16 %v2747, %v2743
        %2940 = vmatprep.subr.bf16.mxu0 %v2749
        %2941 = vmatpush1.bf16.msra.mxu0 %v2748
        %2942 = vmatprep.subr.bf16.mxu0 %v2753
        %2943 = vmatpush1.bf16.msra.mxu0 %v2752
        %2944 = vmatprep.subr.bf16.mxu0 %v2757
        %2945 = vmatpush1.bf16.msra.mxu0 %v2756
        %2946 = vmatprep.subr.bf16.mxu0 %v2761
        %2947 = vmatpush1.bf16.msra.mxu0 %v2760
        %2948 = vmatprep.subr.bf16.mxu0 %v2765
        %2949 = vmatpush1.bf16.msra.mxu0 %v2764
        %2950 = vmatprep.subr.bf16.mxu0 %v2769
        %2951 = vmatpush1.bf16.msra.mxu0 %v2768
        %2952 = vmatprep.subr.bf16.mxu0 %v2773
        %2953 = vmatpush1.bf16.msra.mxu0 %v2772
        %2954 = vmatprep.subr.bf16.mxu0 %v2777
        %2955 = vmatpush1.bf16.msra.mxu0 %v2776
        %2956 = vmatprep.subr.bf16.mxu0 %v2781
        %2957 = vmatpush1.bf16.msra.mxu0 %v2780
        %2958 = vmatprep.subr.bf16.mxu0 %v2785
        %2959 = vmatpush1.bf16.msra.mxu0 %v2784
        %2960 = vmatprep.subr.bf16.mxu0 %v2789
        %2961 = vmatpush1.bf16.msra.mxu0 %v2788
        %2962 = vmatprep.subr.bf16.mxu0 %v2793
        %2963 = vmatpush1.bf16.msra.mxu0 %v2792
        %2964 = vmatprep.subr.bf16.mxu0 %v2797
        %2965 = vmatpush1.bf16.msra.mxu0 %v2796
        %2966 = vmatprep.subr.bf16.mxu0 %v2801
        %2967 = vmatpush1.bf16.msra.mxu0 %v2800
        %2968 = vmatprep.subr.bf16.mxu0 %v2805
        %2969 = vmatpush1.bf16.msra.mxu0 %v2804
        %2970 = vmatprep.subr.bf16.mxu0 %v2809
        %2971 = vmatpush1.bf16.msra.mxu0 %v2808
        %2972 = vmatprep.mubr.bf16.mxu0 %v1591
        %2973 = vmatmul.mubr.bf16.gmra.mrb[0].mxu0 %v1590
        %v2974 = vpop.f32.mrb[0].mxu0
        %v2975 = vadd.f32 %v2372, %v2974
        %v2976 = vpop.f32.mrb[0].mxu0
        %v2977 = vadd.f32 %v2374, %v2976
        %v2978 = vpop.f32.mrb[0].mxu0
        %v2979 = vpop.f32.mrb[0].mxu0
        %2980 = vdwg.mxu0
        %2981 = vmatprep.subr.bf16.mxu0 %v2813
        %2982 = vmatpush1.bf16.msra.mxu0 %v2812
        %2983 = vmatprep.subr.bf16.mxu0 %v2817
        %2984 = vmatpush1.bf16.msra.mxu0 %v2816
        %2985 = vmatprep.subr.bf16.mxu0 %v2821
        %2986 = vmatpush1.bf16.msra.mxu0 %v2820
        %2987 = vmatprep.subr.bf16.mxu0 %v2825
        %2988 = vmatpush1.bf16.msra.mxu0 %v2824
        %2989 = vmatprep.subr.bf16.mxu0 %v2829
        %2990 = vmatpush1.bf16.msra.mxu0 %v2828
        %2991 = vmatprep.subr.bf16.mxu0 %v2833
        %2992 = vmatpush1.bf16.msra.mxu0 %v2832
        %2993 = vmatprep.subr.bf16.mxu0 %v2837
        %2994 = vmatpush1.bf16.msra.mxu0 %v2836
        %2995 = vmatprep.subr.bf16.mxu0 %v2841
        %2996 = vmatpush1.bf16.msra.mxu0 %v2840
        %2997 = vmatprep.subr.bf16.mxu0 0
        %2998 = vmatpush1.bf16.msra.mxu0 0
        %2999 = vmatprep.subr.bf16.mxu0 0
        %3000 = vmatpush1.bf16.msra.mxu0 0
        %3001 = vmatprep.subr.bf16.mxu0 0
        %3002 = vmatpush1.bf16.msra.mxu0 0
        %3003 = vmatprep.subr.bf16.mxu0 0
        %3004 = vmatpush1.bf16.msra.mxu0 0
        %3005 = vmatprep.subr.bf16.mxu0 0
        %3006 = vmatpush1.bf16.msra.mxu0 0
        %3007 = vmatprep.subr.bf16.mxu0 0
        %3008 = vmatpush1.bf16.msra.mxu0 0
        %3009 = vmatprep.subr.bf16.mxu0 0
        %3010 = vmatpush1.bf16.msra.mxu0 0
        %3011 = vmatprep.subr.bf16.mxu0 0
        %3012 = vmatpush1.bf16.msra.mxu0 0
        %3013 = vmatprep.mubr.bf16.mxu0 0
        %3014 = vmatmul.mubr.bf16.gmra.mrb[0].mxu0 %v1592
        %v3015 = vpop.f32.mrb[0].mxu0
        %v3016 = vadd.f32 %v2975, %v3015
        %v3017 = vpop.f32.mrb[0].mxu0
        %v3018 = vadd.f32 %v2977, %v3017
        %v3019 = vpop.f32.mrb[0].mxu0
        %v3020 = vpop.f32.mrb[0].mxu0
        %3021 = vdwg.mxu0
        %3022 = vmatprep.subr.bf16.mxu0 %v2751
        %3023 = vmatpush1.bf16.msra.mxu0 %v2750
        %3024 = vmatprep.subr.bf16.mxu0 %v2755
        %3025 = vmatpush1.bf16.msra.mxu0 %v2754
        %3026 = vmatprep.subr.bf16.mxu0 %v2759
        %3027 = vmatpush1.bf16.msra.mxu0 %v2758
        %3028 = vmatprep.subr.bf16.mxu0 %v2763
        %3029 = vmatpush1.bf16.msra.mxu0 %v2762
        %3030 = vmatprep.subr.bf16.mxu0 %v2767
        %3031 = vmatpush1.bf16.msra.mxu0 %v2766
        %3032 = vmatprep.subr.bf16.mxu0 %v2771
        %3033 = vmatpush1.bf16.msra.mxu0 %v2770
        %3034 = vmatprep.subr.bf16.mxu0 %v2775
        %3035 = vmatpush1.bf16.msra.mxu0 %v2774
        %3036 = vmatprep.subr.bf16.mxu0 %v2779
        %3037 = vmatpush1.bf16.msra.mxu0 %v2778
        %3038 = vmatprep.subr.bf16.mxu0 %v2783
        %3039 = vmatpush1.bf16.msra.mxu0 %v2782
        %3040 = vmatprep.subr.bf16.mxu0 %v2787
        %3041 = vmatpush1.bf16.msra.mxu0 %v2786
        %3042 = vmatprep.subr.bf16.mxu0 %v2791
        %3043 = vmatpush1.bf16.msra.mxu0 %v2790
        %3044 = vmatprep.subr.bf16.mxu0 %v2795
        %3045 = vmatpush1.bf16.msra.mxu0 %v2794
        %3046 = vmatprep.subr.bf16.mxu0 %v2799
        %3047 = vmatpush1.bf16.msra.mxu0 %v2798
        %3048 = vmatprep.subr.bf16.mxu0 %v2803
        %3049 = vmatpush1.bf16.msra.mxu0 %v2802
        %3050 = vmatprep.subr.bf16.mxu0 %v2807
        %3051 = vmatpush1.bf16.msra.mxu0 %v2806
        %3052 = vmatprep.subr.bf16.mxu0 %v2811
        %3053 = vmatpush1.bf16.msra.mxu0 %v2810
        %3054 = vmatprep.mubr.bf16.mxu0 %v1591
        %3055 = vmatmul.mubr.bf16.gmra.mrb[0].mxu0 %v1590
        %v3056 = vpop.f32.mrb[0].mxu0
        %v3057 = vadd.f32 %v2454, %v3056
        %v3058 = vpop.f32.mrb[0].mxu0
        %v3059 = vadd.f32 %v2456, %v3058
        %v3060 = vpop.f32.mrb[0].mxu0
        %v3061 = vpop.f32.mrb[0].mxu0
        %3062 = vdwg.mxu0
        %3063 = vmatprep.subr.bf16.mxu0 %v2815
        %3064 = vmatpush1.bf16.msra.mxu0 %v2814
        %3065 = vmatprep.subr.bf16.mxu0 %v2819
        %3066 = vmatpush1.bf16.msra.mxu0 %v2818
        %3067 = vmatprep.subr.bf16.mxu0 %v2823
        %3068 = vmatpush1.bf16.msra.mxu0 %v2822
        %3069 = vmatprep.subr.bf16.mxu0 %v2827
        %3070 = vmatpush1.bf16.msra.mxu0 %v2826
        %3071 = vmatprep.subr.bf16.mxu0 %v2831
        %3072 = vmatpush1.bf16.msra.mxu0 %v2830
        %3073 = vmatprep.subr.bf16.mxu0 %v2835
        %3074 = vmatpush1.bf16.msra.mxu0 %v2834
        %3075 = vmatprep.subr.bf16.mxu0 %v2839
        %3076 = vmatpush1.bf16.msra.mxu0 %v2838
        %3077 = vmatprep.subr.bf16.mxu0 %v2843
        %3078 = vmatpush1.bf16.msra.mxu0 %v2842
        %3079 = vmatprep.subr.bf16.mxu0 0
        %3080 = vmatpush1.bf16.msra.mxu0 0
        %3081 = vmatprep.subr.bf16.mxu0 0
        %3082 = vmatpush1.bf16.msra.mxu0 0
        %3083 = vmatprep.subr.bf16.mxu0 0
        %3084 = vmatpush1.bf16.msra.mxu0 0
        %3085 = vmatprep.subr.bf16.mxu0 0
        %3086 = vmatpush1.bf16.msra.mxu0 0
        %3087 = vmatprep.subr.bf16.mxu0 0
        %3088 = vmatpush1.bf16.msra.mxu0 0
        %3089 = vmatprep.subr.bf16.mxu0 0
        %3090 = vmatpush1.bf16.msra.mxu0 0
        %3091 = vmatprep.subr.bf16.mxu0 0
        %3092 = vmatpush1.bf16.msra.mxu0 0
        %3093 = vmatprep.subr.bf16.mxu0 0
        %3094 = vmatpush1.bf16.msra.mxu0 0
        %3095 = vmatprep.mubr.bf16.mxu0 0
        %3096 = vmatmul.mubr.bf16.gmra.mrb[0].mxu0 %v1592
        %v3097 = vpop.f32.mrb[0].mxu0
        %v3098 = vadd.f32 %v3057, %v3097
        %v3099 = vpop.f32.mrb[0].mxu0
        %v3100 = vadd.f32 %v3059, %v3099
        %v3101 = vpop.f32.mrb[0].mxu0
        %v3102 = vpop.f32.mrb[0].mxu0
        %3103 = vdwg.mxu0
        %v3104 = vld [vmem:[#allocation2] sm:$0x3c]
        %v3105 = vld [vmem:[#allocation2 + $0x8] sm:$0x3c]
        %v3106 = vld [vmem:[#allocation2 + $0x10] sm:$0x3c]
        %v3107 = vpack.c.bf16 %v3104, %v3104
        %v3108 = vpack.c.bf16 %v3105, %v3105
        %v3109 = vpack.c.bf16 %v3106, %v3106
        %s3110 = scalar_lea.vmem [#allocation9], 1536
        %v3111 = vld [vmem:[%s3110] sm:$0xff]
        %v3112 = vld [vmem:[%s3110 + $0x8] sm:$0xff]
        %v3113 = vld [vmem:[%s3110 + $0x10] sm:$0xff]
        %v3114 = vld [vmem:[%s3110 + $0x18] sm:$0xff]
        %v3115 = vld [vmem:[%s3110 + $0x20] sm:$0xff]
        %v3116 = vld [vmem:[%s3110 + $0x28] sm:$0xff]
        %v3117 = vld [vmem:[%s3110 + $0x30] sm:$0xff]
        %v3118 = vld [vmem:[%s3110 + $0x38] sm:$0xff]
        %v3119 = vld [vmem:[%s3110 + $0x40] sm:$0xff]
        %v3120 = vld [vmem:[%s3110 + $0x48] sm:$0xff]
        %v3121 = vld [vmem:[%s3110 + $0x50] sm:$0xff]
        %v3122 = vld [vmem:[%s3110 + $0x58] sm:$0xff]
        %v3123 = vld [vmem:[%s3110 + $0x60] sm:$0xff]
        %v3124 = vld [vmem:[%s3110 + $0x68] sm:$0xff]
        %v3125 = vld [vmem:[%s3110 + $0x70] sm:$0xff]
        %v3126 = vld [vmem:[%s3110 + $0x78] sm:$0xff]
        %v3127 = vld [vmem:[%s3110 + $0x80] sm:$0xff]
        %v3128 = vld [vmem:[%s3110 + $0x88] sm:$0xff]
        %v3129 = vld [vmem:[%s3110 + $0x90] sm:$0xff]
        %v3130 = vld [vmem:[%s3110 + $0x98] sm:$0xff]
        %v3131 = vld [vmem:[%s3110 + $0xa0] sm:$0xff]
        %v3132 = vld [vmem:[%s3110 + $0xa8] sm:$0xff]
        %v3133 = vld [vmem:[%s3110 + $0xb0] sm:$0xff]
        %v3134 = vld [vmem:[%s3110 + $0xb8] sm:$0xff]
        %v3135 = vld [vmem:[%s3110 + $0xc0] sm:$0xff]
        %v3136 = vld [vmem:[%s3110 + $0xc8] sm:$0xff]
        %v3137 = vld [vmem:[%s3110 + $0xd0] sm:$0xff]
        %v3138 = vld [vmem:[%s3110 + $0xd8] sm:$0xff]
        %v3139 = vld [vmem:[%s3110 + $0xe0] sm:$0xff]
        %v3140 = vld [vmem:[%s3110 + $0xe8] sm:$0xff]
        %v3141 = vld [vmem:[%s3110 + $0xf0] sm:$0xff]
        %v3142 = vld [vmem:[%s3110 + $0xf8] sm:$0xff]
        %v3143 = vld [vmem:[%s3110 + $0x100] sm:$0xff]
        %v3144 = vld [vmem:[%s3110 + $0x108] sm:$0xff]
        %v3145 = vld [vmem:[%s3110 + $0x110] sm:$0xff]
        %v3146 = vld [vmem:[%s3110 + $0x118] sm:$0xff]
        %v3147 = vld [vmem:[%s3110 + $0x120] sm:$0xff]
        %v3148 = vld [vmem:[%s3110 + $0x128] sm:$0xff]
        %v3149 = vld [vmem:[%s3110 + $0x130] sm:$0xff]
        %v3150 = vld [vmem:[%s3110 + $0x138] sm:$0xff]
        %v3151 = vld [vmem:[%s3110 + $0x140] sm:$0xff]
        %v3152 = vld [vmem:[%s3110 + $0x148] sm:$0xff]
        %v3153 = vld [vmem:[%s3110 + $0x150] sm:$0xff]
        %v3154 = vld [vmem:[%s3110 + $0x158] sm:$0xff]
        %v3155 = vld [vmem:[%s3110 + $0x160] sm:$0xff]
        %v3156 = vld [vmem:[%s3110 + $0x168] sm:$0xff]
        %v3157 = vld [vmem:[%s3110 + $0x170] sm:$0xff]
        %v3158 = vld [vmem:[%s3110 + $0x178] sm:$0xff]
        %v3159 = vld [vmem:[%s3110 + $0x180] sm:$0xff]
        %v3160 = vld [vmem:[%s3110 + $0x188] sm:$0xff]
        %v3161 = vld [vmem:[%s3110 + $0x190] sm:$0xff]
        %v3162 = vld [vmem:[%s3110 + $0x198] sm:$0xff]
        %v3163 = vld [vmem:[%s3110 + $0x1a0] sm:$0xff]
        %v3164 = vld [vmem:[%s3110 + $0x1a8] sm:$0xff]
        %v3165 = vld [vmem:[%s3110 + $0x1b0] sm:$0xff]
        %v3166 = vld [vmem:[%s3110 + $0x1b8] sm:$0xff]
        %v3167 = vld [vmem:[%s3110 + $0x1c0] sm:$0xff]
        %v3168 = vld [vmem:[%s3110 + $0x1c8] sm:$0xff]
        %v3169 = vld [vmem:[%s3110 + $0x1d0] sm:$0xff]
        %v3170 = vld [vmem:[%s3110 + $0x1d8] sm:$0xff]
        %v3171 = vld [vmem:[%s3110 + $0x1e0] sm:$0xff]
        %v3172 = vld [vmem:[%s3110 + $0x1e8] sm:$0xff]
        %v3173 = vld [vmem:[%s3110 + $0x1f0] sm:$0xff]
        %v3174 = vld [vmem:[%s3110 + $0x1f8] sm:$0xff]
        %v3175 = vld [vmem:[%s3110 + $0x200] sm:$0xff]
        %v3176 = vld [vmem:[%s3110 + $0x208] sm:$0xff]
        %v3177 = vld [vmem:[%s3110 + $0x210] sm:$0xff]
        %v3178 = vld [vmem:[%s3110 + $0x218] sm:$0xff]
        %v3179 = vld [vmem:[%s3110 + $0x220] sm:$0xff]
        %v3180 = vld [vmem:[%s3110 + $0x228] sm:$0xff]
        %v3181 = vld [vmem:[%s3110 + $0x230] sm:$0xff]
        %v3182 = vld [vmem:[%s3110 + $0x238] sm:$0xff]
        %v3183 = vld [vmem:[%s3110 + $0x240] sm:$0xff]
        %v3184 = vld [vmem:[%s3110 + $0x248] sm:$0xff]
        %v3185 = vld [vmem:[%s3110 + $0x250] sm:$0xff]
        %v3186 = vld [vmem:[%s3110 + $0x258] sm:$0xff]
        %v3187 = vld [vmem:[%s3110 + $0x260] sm:$0xff]
        %v3188 = vld [vmem:[%s3110 + $0x268] sm:$0xff]
        %v3189 = vld [vmem:[%s3110 + $0x270] sm:$0xff]
        %v3190 = vld [vmem:[%s3110 + $0x278] sm:$0xff]
        %v3191 = vld [vmem:[%s3110 + $0x280] sm:$0xff]
        %v3192 = vld [vmem:[%s3110 + $0x288] sm:$0xff]
        %v3193 = vld [vmem:[%s3110 + $0x290] sm:$0xff]
        %v3194 = vld [vmem:[%s3110 + $0x298] sm:$0xff]
        %v3195 = vld [vmem:[%s3110 + $0x2a0] sm:$0xff]
        %v3196 = vld [vmem:[%s3110 + $0x2a8] sm:$0xff]
        %v3197 = vld [vmem:[%s3110 + $0x2b0] sm:$0xff]
        %v3198 = vld [vmem:[%s3110 + $0x2b8] sm:$0xff]
        %v3199 = vld [vmem:[%s3110 + $0x2c0] sm:$0xff]
        %v3200 = vld [vmem:[%s3110 + $0x2c8] sm:$0xff]
        %v3201 = vld [vmem:[%s3110 + $0x2d0] sm:$0xff]
        %v3202 = vld [vmem:[%s3110 + $0x2d8] sm:$0xff]
        %v3203 = vld [vmem:[%s3110 + $0x2e0] sm:$0xff]
        %v3204 = vld [vmem:[%s3110 + $0x2e8] sm:$0xff]
        %v3205 = vld [vmem:[%s3110 + $0x2f0] sm:$0xff]
        %v3206 = vld [vmem:[%s3110 + $0x2f8] sm:$0xff]
        %v3210 = vrot.slane %v3107, 1
        %v3211 = vrot.slane %v3108, 1
        %v3212 = vrot.slane %v3109, 1
        %v3312 = vunpack.c.l.b16 %v3111
        %v3313 = vunpack.c.h.b16 %v3111
        %v3314 = vunpack.c.l.b16 %v3112
        %v3315 = vunpack.c.h.b16 %v3112
        %v3316 = vunpack.c.l.b16 %v3113
        %v3317 = vunpack.c.h.b16 %v3113
        %v3318 = vunpack.c.l.b16 %v3114
        %v3319 = vunpack.c.h.b16 %v3114
        %v3320 = vunpack.c.l.b16 %v3115
        %v3321 = vunpack.c.h.b16 %v3115
        %v3322 = vunpack.c.l.b16 %v3116
        %v3323 = vunpack.c.h.b16 %v3116
        %v3324 = vunpack.c.l.b16 %v3117
        %v3325 = vunpack.c.h.b16 %v3117
        %v3326 = vunpack.c.l.b16 %v3118
        %v3327 = vunpack.c.h.b16 %v3118
        %v3328 = vunpack.c.l.b16 %v3119
        %v3329 = vunpack.c.h.b16 %v3119
        %v3330 = vunpack.c.l.b16 %v3120
        %v3331 = vunpack.c.h.b16 %v3120
        %v3332 = vunpack.c.l.b16 %v3121
        %v3333 = vunpack.c.h.b16 %v3121
        %v3334 = vunpack.c.l.b16 %v3122
        %v3335 = vunpack.c.h.b16 %v3122
        %v3336 = vunpack.c.l.b16 %v3123
        %v3337 = vunpack.c.h.b16 %v3123
        %v3338 = vunpack.c.l.b16 %v3124
        %v3339 = vunpack.c.h.b16 %v3124
        %v3340 = vunpack.c.l.b16 %v3125
        %v3341 = vunpack.c.h.b16 %v3125
        %v3342 = vunpack.c.l.b16 %v3126
        %v3343 = vunpack.c.h.b16 %v3126
        %v3344 = vunpack.c.l.b16 %v3127
        %v3345 = vunpack.c.h.b16 %v3127
        %v3346 = vunpack.c.l.b16 %v3128
        %v3347 = vunpack.c.h.b16 %v3128
        %v3348 = vunpack.c.l.b16 %v3129
        %v3349 = vunpack.c.h.b16 %v3129
        %v3350 = vunpack.c.l.b16 %v3130
        %v3351 = vunpack.c.h.b16 %v3130
        %v3352 = vunpack.c.l.b16 %v3131
        %v3353 = vunpack.c.h.b16 %v3131
        %v3354 = vunpack.c.l.b16 %v3132
        %v3355 = vunpack.c.h.b16 %v3132
        %v3356 = vunpack.c.l.b16 %v3133
        %v3357 = vunpack.c.h.b16 %v3133
        %v3358 = vunpack.c.l.b16 %v3134
        %v3359 = vunpack.c.h.b16 %v3134
        %v3360 = vunpack.c.l.b16 %v3135
        %v3361 = vunpack.c.h.b16 %v3135
        %v3362 = vunpack.c.l.b16 %v3136
        %v3363 = vunpack.c.h.b16 %v3136
        %v3364 = vunpack.c.l.b16 %v3137
        %v3365 = vunpack.c.h.b16 %v3137
        %v3366 = vunpack.c.l.b16 %v3138
        %v3367 = vunpack.c.h.b16 %v3138
        %v3368 = vunpack.c.l.b16 %v3139
        %v3369 = vunpack.c.h.b16 %v3139
        %v3370 = vunpack.c.l.b16 %v3140
        %v3371 = vunpack.c.h.b16 %v3140
        %v3372 = vunpack.c.l.b16 %v3141
        %v3373 = vunpack.c.h.b16 %v3141
        %v3374 = vunpack.c.l.b16 %v3142
        %v3375 = vunpack.c.h.b16 %v3142
        %v3376 = vunpack.c.l.b16 %v3143
        %v3377 = vunpack.c.h.b16 %v3143
        %v3378 = vunpack.c.l.b16 %v3144
        %v3379 = vunpack.c.h.b16 %v3144
        %v3380 = vunpack.c.l.b16 %v3145
        %v3381 = vunpack.c.h.b16 %v3145
        %v3382 = vunpack.c.l.b16 %v3146
        %v3383 = vunpack.c.h.b16 %v3146
        %v3384 = vunpack.c.l.b16 %v3147
        %v3385 = vunpack.c.h.b16 %v3147
        %v3386 = vunpack.c.l.b16 %v3148
        %v3387 = vunpack.c.h.b16 %v3148
        %v3388 = vunpack.c.l.b16 %v3149
        %v3389 = vunpack.c.h.b16 %v3149
        %v3390 = vunpack.c.l.b16 %v3150
        %v3391 = vunpack.c.h.b16 %v3150
        %v3392 = vunpack.c.l.b16 %v3151
        %v3393 = vunpack.c.h.b16 %v3151
        %v3394 = vunpack.c.l.b16 %v3152
        %v3395 = vunpack.c.h.b16 %v3152
        %v3396 = vunpack.c.l.b16 %v3153
        %v3397 = vunpack.c.h.b16 %v3153
        %v3398 = vunpack.c.l.b16 %v3154
        %v3399 = vunpack.c.h.b16 %v3154
        %v3400 = vunpack.c.l.b16 %v3155
        %v3401 = vunpack.c.h.b16 %v3155
        %v3402 = vunpack.c.l.b16 %v3156
        %v3403 = vunpack.c.h.b16 %v3156
        %v3404 = vunpack.c.l.b16 %v3157
        %v3405 = vunpack.c.h.b16 %v3157
        %v3406 = vunpack.c.l.b16 %v3158
        %v3407 = vunpack.c.h.b16 %v3158
        %v3408 = vunpack.c.l.b16 %v3159
        %v3409 = vunpack.c.h.b16 %v3159
        %v3410 = vunpack.c.l.b16 %v3160
        %v3411 = vunpack.c.h.b16 %v3160
        %v3412 = vunpack.c.l.b16 %v3161
        %v3413 = vunpack.c.h.b16 %v3161
        %v3414 = vunpack.c.l.b16 %v3162
        %v3415 = vunpack.c.h.b16 %v3162
        %v3416 = vunpack.c.l.b16 %v3163
        %v3417 = vunpack.c.h.b16 %v3163
        %v3418 = vunpack.c.l.b16 %v3164
        %v3419 = vunpack.c.h.b16 %v3164
        %v3420 = vunpack.c.l.b16 %v3165
        %v3421 = vunpack.c.h.b16 %v3165
        %v3422 = vunpack.c.l.b16 %v3166
        %v3423 = vunpack.c.h.b16 %v3166
        %v3424 = vunpack.c.l.b16 %v3167
        %v3425 = vunpack.c.h.b16 %v3167
        %v3426 = vunpack.c.l.b16 %v3168
        %v3427 = vunpack.c.h.b16 %v3168
        %v3428 = vunpack.c.l.b16 %v3169
        %v3429 = vunpack.c.h.b16 %v3169
        %v3430 = vunpack.c.l.b16 %v3170
        %v3431 = vunpack.c.h.b16 %v3170
        %v3432 = vunpack.c.l.b16 %v3171
        %v3433 = vunpack.c.h.b16 %v3171
        %v3434 = vunpack.c.l.b16 %v3172
        %v3435 = vunpack.c.h.b16 %v3172
        %v3436 = vunpack.c.l.b16 %v3173
        %v3437 = vunpack.c.h.b16 %v3173
        %v3438 = vunpack.c.l.b16 %v3174
        %v3439 = vunpack.c.h.b16 %v3174
        %v3440 = vunpack.c.l.b16 %v3175
        %v3441 = vunpack.c.h.b16 %v3175
        %v3442 = vunpack.c.l.b16 %v3176
        %v3443 = vunpack.c.h.b16 %v3176
        %v3444 = vunpack.c.l.b16 %v3177
        %v3445 = vunpack.c.h.b16 %v3177
        %v3446 = vunpack.c.l.b16 %v3178
        %v3447 = vunpack.c.h.b16 %v3178
        %v3448 = vunpack.c.l.b16 %v3179
        %v3449 = vunpack.c.h.b16 %v3179
        %v3450 = vunpack.c.l.b16 %v3180
        %v3451 = vunpack.c.h.b16 %v3180
        %v3452 = vunpack.c.l.b16 %v3181
        %v3453 = vunpack.c.h.b16 %v3181
        %v3454 = vunpack.c.l.b16 %v3182
        %v3455 = vunpack.c.h.b16 %v3182
        %v3456 = vunpack.c.l.b16 %v3183
        %v3457 = vunpack.c.h.b16 %v3183
        %v3458 = vunpack.c.l.b16 %v3184
        %v3459 = vunpack.c.h.b16 %v3184
        %v3460 = vunpack.c.l.b16 %v3185
        %v3461 = vunpack.c.h.b16 %v3185
        %v3462 = vunpack.c.l.b16 %v3186
        %v3463 = vunpack.c.h.b16 %v3186
        %v3464 = vunpack.c.l.b16 %v3187
        %v3465 = vunpack.c.h.b16 %v3187
        %v3466 = vunpack.c.l.b16 %v3188
        %v3467 = vunpack.c.h.b16 %v3188
        %v3468 = vunpack.c.l.b16 %v3189
        %v3469 = vunpack.c.h.b16 %v3189
        %v3470 = vunpack.c.l.b16 %v3190
        %v3471 = vunpack.c.h.b16 %v3190
        %v3472 = vunpack.c.l.b16 %v3191
        %v3473 = vunpack.c.h.b16 %v3191
        %v3474 = vunpack.c.l.b16 %v3192
        %v3475 = vunpack.c.h.b16 %v3192
        %v3476 = vunpack.c.l.b16 %v3193
        %v3477 = vunpack.c.h.b16 %v3193
        %v3478 = vunpack.c.l.b16 %v3194
        %v3479 = vunpack.c.h.b16 %v3194
        %v3480 = vunpack.c.l.b16 %v3195
        %v3481 = vunpack.c.h.b16 %v3195
        %v3482 = vunpack.c.l.b16 %v3196
        %v3483 = vunpack.c.h.b16 %v3196
        %v3484 = vunpack.c.l.b16 %v3197
        %v3485 = vunpack.c.h.b16 %v3197
        %v3486 = vunpack.c.l.b16 %v3198
        %v3487 = vunpack.c.h.b16 %v3198
        %v3488 = vunpack.c.l.b16 %v3199
        %v3489 = vunpack.c.h.b16 %v3199
        %v3490 = vunpack.c.l.b16 %v3200
        %v3491 = vunpack.c.h.b16 %v3200
        %v3492 = vunpack.c.l.b16 %v3201
        %v3493 = vunpack.c.h.b16 %v3201
        %v3494 = vunpack.c.l.b16 %v3202
        %v3495 = vunpack.c.h.b16 %v3202
        %v3496 = vunpack.c.l.b16 %v3203
        %v3497 = vunpack.c.h.b16 %v3203
        %v3498 = vunpack.c.l.b16 %v3204
        %v3499 = vunpack.c.h.b16 %v3204
        %v3500 = vunpack.c.l.b16 %v3205
        %v3501 = vunpack.c.h.b16 %v3205
        %v3502 = vunpack.c.l.b16 %v3206
        %v3503 = vunpack.c.h.b16 %v3206
        %v3504 = vpack.c.b16 %v3316, %v3312
        %v3505 = vpack.c.b16 %v3317, %v3313
        %v3506 = vpack.c.b16 %v3318, %v3314
        %v3507 = vpack.c.b16 %v3319, %v3315
        %v3508 = vpack.c.b16 %v3324, %v3320
        %v3509 = vpack.c.b16 %v3325, %v3321
        %v3510 = vpack.c.b16 %v3326, %v3322
        %v3511 = vpack.c.b16 %v3327, %v3323
        %v3512 = vpack.c.b16 %v3332, %v3328
        %v3513 = vpack.c.b16 %v3333, %v3329
        %v3514 = vpack.c.b16 %v3334, %v3330
        %v3515 = vpack.c.b16 %v3335, %v3331
        %v3516 = vpack.c.b16 %v3340, %v3336
        %v3517 = vpack.c.b16 %v3341, %v3337
        %v3518 = vpack.c.b16 %v3342, %v3338
        %v3519 = vpack.c.b16 %v3343, %v3339
        %v3520 = vpack.c.b16 %v3348, %v3344
        %v3521 = vpack.c.b16 %v3349, %v3345
        %v3522 = vpack.c.b16 %v3350, %v3346
        %v3523 = vpack.c.b16 %v3351, %v3347
        %v3524 = vpack.c.b16 %v3356, %v3352
        %v3525 = vpack.c.b16 %v3357, %v3353
        %v3526 = vpack.c.b16 %v3358, %v3354
        %v3527 = vpack.c.b16 %v3359, %v3355
        %v3528 = vpack.c.b16 %v3364, %v3360
        %v3529 = vpack.c.b16 %v3365, %v3361
        %v3530 = vpack.c.b16 %v3366, %v3362
        %v3531 = vpack.c.b16 %v3367, %v3363
        %v3532 = vpack.c.b16 %v3372, %v3368
        %v3533 = vpack.c.b16 %v3373, %v3369
        %v3534 = vpack.c.b16 %v3374, %v3370
        %v3535 = vpack.c.b16 %v3375, %v3371
        %v3536 = vpack.c.b16 %v3380, %v3376
        %v3537 = vpack.c.b16 %v3381, %v3377
        %v3538 = vpack.c.b16 %v3382, %v3378
        %v3539 = vpack.c.b16 %v3383, %v3379
        %v3540 = vpack.c.b16 %v3388, %v3384
        %v3541 = vpack.c.b16 %v3389, %v3385
        %v3542 = vpack.c.b16 %v3390, %v3386
        %v3543 = vpack.c.b16 %v3391, %v3387
        %v3544 = vpack.c.b16 %v3396, %v3392
        %v3545 = vpack.c.b16 %v3397, %v3393
        %v3546 = vpack.c.b16 %v3398, %v3394
        %v3547 = vpack.c.b16 %v3399, %v3395
        %v3548 = vpack.c.b16 %v3404, %v3400
        %v3549 = vpack.c.b16 %v3405, %v3401
        %v3550 = vpack.c.b16 %v3406, %v3402
        %v3551 = vpack.c.b16 %v3407, %v3403
        %v3552 = vpack.c.b16 %v3412, %v3408
        %v3553 = vpack.c.b16 %v3413, %v3409
        %v3554 = vpack.c.b16 %v3414, %v3410
        %v3555 = vpack.c.b16 %v3415, %v3411
        %v3556 = vpack.c.b16 %v3420, %v3416
        %v3557 = vpack.c.b16 %v3421, %v3417
        %v3558 = vpack.c.b16 %v3422, %v3418
        %v3559 = vpack.c.b16 %v3423, %v3419
        %v3560 = vpack.c.b16 %v3428, %v3424
        %v3561 = vpack.c.b16 %v3429, %v3425
        %v3562 = vpack.c.b16 %v3430, %v3426
        %v3563 = vpack.c.b16 %v3431, %v3427
        %v3564 = vpack.c.b16 %v3436, %v3432
        %v3565 = vpack.c.b16 %v3437, %v3433
        %v3566 = vpack.c.b16 %v3438, %v3434
        %v3567 = vpack.c.b16 %v3439, %v3435
        %v3568 = vpack.c.b16 %v3444, %v3440
        %v3569 = vpack.c.b16 %v3445, %v3441
        %v3570 = vpack.c.b16 %v3446, %v3442
        %v3571 = vpack.c.b16 %v3447, %v3443
        %v3572 = vpack.c.b16 %v3452, %v3448
        %v3573 = vpack.c.b16 %v3453, %v3449
        %v3574 = vpack.c.b16 %v3454, %v3450
        %v3575 = vpack.c.b16 %v3455, %v3451
        %v3576 = vpack.c.b16 %v3460, %v3456
        %v3577 = vpack.c.b16 %v3461, %v3457
        %v3578 = vpack.c.b16 %v3462, %v3458
        %v3579 = vpack.c.b16 %v3463, %v3459
        %v3580 = vpack.c.b16 %v3468, %v3464
        %v3581 = vpack.c.b16 %v3469, %v3465
        %v3582 = vpack.c.b16 %v3470, %v3466
        %v3583 = vpack.c.b16 %v3471, %v3467
        %v3584 = vpack.c.b16 %v3476, %v3472
        %v3585 = vpack.c.b16 %v3477, %v3473
        %v3586 = vpack.c.b16 %v3478, %v3474
        %v3587 = vpack.c.b16 %v3479, %v3475
        %v3588 = vpack.c.b16 %v3484, %v3480
        %v3589 = vpack.c.b16 %v3485, %v3481
        %v3590 = vpack.c.b16 %v3486, %v3482
        %v3591 = vpack.c.b16 %v3487, %v3483
        %v3592 = vpack.c.b16 %v3492, %v3488
        %v3593 = vpack.c.b16 %v3493, %v3489
        %v3594 = vpack.c.b16 %v3494, %v3490
        %v3595 = vpack.c.b16 %v3495, %v3491
        %v3596 = vpack.c.b16 %v3500, %v3496
        %v3597 = vpack.c.b16 %v3501, %v3497
        %v3598 = vpack.c.b16 %v3502, %v3498
        %v3599 = vpack.c.b16 %v3503, %v3499
        %3696 = vmatprep.subr.bf16.mxu0 %v3505
        %3697 = vmatpush1.bf16.msra.mxu0 %v3504
        %3698 = vmatprep.subr.bf16.mxu0 %v3509
        %3699 = vmatpush1.bf16.msra.mxu0 %v3508
        %3700 = vmatprep.subr.bf16.mxu0 %v3513
        %3701 = vmatpush1.bf16.msra.mxu0 %v3512
        %3702 = vmatprep.subr.bf16.mxu0 %v3517
        %3703 = vmatpush1.bf16.msra.mxu0 %v3516
        %3704 = vmatprep.subr.bf16.mxu0 %v3521
        %3705 = vmatpush1.bf16.msra.mxu0 %v3520
        %3706 = vmatprep.subr.bf16.mxu0 %v3525
        %3707 = vmatpush1.bf16.msra.mxu0 %v3524
        %3708 = vmatprep.subr.bf16.mxu0 %v3529
        %3709 = vmatpush1.bf16.msra.mxu0 %v3528
        %3710 = vmatprep.subr.bf16.mxu0 %v3533
        %3711 = vmatpush1.bf16.msra.mxu0 %v3532
        %3712 = vmatprep.subr.bf16.mxu0 %v3537
        %3713 = vmatpush1.bf16.msra.mxu0 %v3536
        %3714 = vmatprep.subr.bf16.mxu0 %v3541
        %3715 = vmatpush1.bf16.msra.mxu0 %v3540
        %3716 = vmatprep.subr.bf16.mxu0 %v3545
        %3717 = vmatpush1.bf16.msra.mxu0 %v3544
        %3718 = vmatprep.subr.bf16.mxu0 %v3549
        %3719 = vmatpush1.bf16.msra.mxu0 %v3548
        %3720 = vmatprep.subr.bf16.mxu0 %v3553
        %3721 = vmatpush1.bf16.msra.mxu0 %v3552
        %3722 = vmatprep.subr.bf16.mxu0 %v3557
        %3723 = vmatpush1.bf16.msra.mxu0 %v3556
        %3724 = vmatprep.subr.bf16.mxu0 %v3561
        %3725 = vmatpush1.bf16.msra.mxu0 %v3560
        %3726 = vmatprep.subr.bf16.mxu0 %v3565
        %3727 = vmatpush1.bf16.msra.mxu0 %v3564
        %3728 = vmatprep.mubr.bf16.mxu0 %v3211
        %3729 = vmatmul.mubr.bf16.gmra.mrb[0].mxu0 %v3210
        %v3730 = vpop.f32.mrb[0].mxu0
        %v3731 = vadd.f32 0.0, %v3730
        %v3732 = vpop.f32.mrb[0].mxu0
        %v3733 = vadd.f32 0.0, %v3732
        %v3734 = vpop.f32.mrb[0].mxu0
        %v3735 = vpop.f32.mrb[0].mxu0
        %3736 = vdwg.mxu0
        %3737 = vmatprep.subr.bf16.mxu0 %v3569
        %3738 = vmatpush1.bf16.msra.mxu0 %v3568
        %3739 = vmatprep.subr.bf16.mxu0 %v3573
        %3740 = vmatpush1.bf16.msra.mxu0 %v3572
        %3741 = vmatprep.subr.bf16.mxu0 %v3577
        %3742 = vmatpush1.bf16.msra.mxu0 %v3576
        %3743 = vmatprep.subr.bf16.mxu0 %v3581
        %3744 = vmatpush1.bf16.msra.mxu0 %v3580
        %3745 = vmatprep.subr.bf16.mxu0 %v3585
        %3746 = vmatpush1.bf16.msra.mxu0 %v3584
        %3747 = vmatprep.subr.bf16.mxu0 %v3589
        %3748 = vmatpush1.bf16.msra.mxu0 %v3588
        %3749 = vmatprep.subr.bf16.mxu0 %v3593
        %3750 = vmatpush1.bf16.msra.mxu0 %v3592
        %3751 = vmatprep.subr.bf16.mxu0 %v3597
        %3752 = vmatpush1.bf16.msra.mxu0 %v3596
        %3753 = vmatprep.subr.bf16.mxu0 0
        %3754 = vmatpush1.bf16.msra.mxu0 0
        %3755 = vmatprep.subr.bf16.mxu0 0
        %3756 = vmatpush1.bf16.msra.mxu0 0
        %3757 = vmatprep.subr.bf16.mxu0 0
        %3758 = vmatpush1.bf16.msra.mxu0 0
        %3759 = vmatprep.subr.bf16.mxu0 0
        %3760 = vmatpush1.bf16.msra.mxu0 0
        %3761 = vmatprep.subr.bf16.mxu0 0
        %3762 = vmatpush1.bf16.msra.mxu0 0
        %3763 = vmatprep.subr.bf16.mxu0 0
        %3764 = vmatpush1.bf16.msra.mxu0 0
        %3765 = vmatprep.subr.bf16.mxu0 0
        %3766 = vmatpush1.bf16.msra.mxu0 0
        %3767 = vmatprep.subr.bf16.mxu0 0
        %3768 = vmatpush1.bf16.msra.mxu0 0
        %3769 = vmatprep.mubr.bf16.mxu0 0
        %3770 = vmatmul.mubr.bf16.gmra.mrb[0].mxu0 %v3212
        %v3771 = vpop.f32.mrb[0].mxu0
        %v3772 = vadd.f32 %v3731, %v3771
        %v3773 = vpop.f32.mrb[0].mxu0
        %v3774 = vadd.f32 %v3733, %v3773
        %v3775 = vpop.f32.mrb[0].mxu0
        %v3776 = vpop.f32.mrb[0].mxu0
        %3777 = vdwg.mxu0
        %3778 = vmatprep.subr.bf16.mxu0 %v3507
        %3779 = vmatpush1.bf16.msra.mxu0 %v3506
        %3780 = vmatprep.subr.bf16.mxu0 %v3511
        %3781 = vmatpush1.bf16.msra.mxu0 %v3510
        %3782 = vmatprep.subr.bf16.mxu0 %v3515
        %3783 = vmatpush1.bf16.msra.mxu0 %v3514
        %3784 = vmatprep.subr.bf16.mxu0 %v3519
        %3785 = vmatpush1.bf16.msra.mxu0 %v3518
        %3786 = vmatprep.subr.bf16.mxu0 %v3523
        %3787 = vmatpush1.bf16.msra.mxu0 %v3522
        %3788 = vmatprep.subr.bf16.mxu0 %v3527
        %3789 = vmatpush1.bf16.msra.mxu0 %v3526
        %3790 = vmatprep.subr.bf16.mxu0 %v3531
        %3791 = vmatpush1.bf16.msra.mxu0 %v3530
        %3792 = vmatprep.subr.bf16.mxu0 %v3535
        %3793 = vmatpush1.bf16.msra.mxu0 %v3534
        %3794 = vmatprep.subr.bf16.mxu0 %v3539
        %3795 = vmatpush1.bf16.msra.mxu0 %v3538
        %3796 = vmatprep.subr.bf16.mxu0 %v3543
        %3797 = vmatpush1.bf16.msra.mxu0 %v3542
        %3798 = vmatprep.subr.bf16.mxu0 %v3547
        %3799 = vmatpush1.bf16.msra.mxu0 %v3546
        %3800 = vmatprep.subr.bf16.mxu0 %v3551
        %3801 = vmatpush1.bf16.msra.mxu0 %v3550
        %3802 = vmatprep.subr.bf16.mxu0 %v3555
        %3803 = vmatpush1.bf16.msra.mxu0 %v3554
        %3804 = vmatprep.subr.bf16.mxu0 %v3559
        %3805 = vmatpush1.bf16.msra.mxu0 %v3558
        %3806 = vmatprep.subr.bf16.mxu0 %v3563
        %3807 = vmatpush1.bf16.msra.mxu0 %v3562
        %3808 = vmatprep.subr.bf16.mxu0 %v3567
        %3809 = vmatpush1.bf16.msra.mxu0 %v3566
        %3810 = vmatprep.mubr.bf16.mxu0 %v3211
        %3811 = vmatmul.mubr.bf16.gmra.mrb[0].mxu0 %v3210
        %v3812 = vpop.f32.mrb[0].mxu0
        %v3813 = vadd.f32 0.0, %v3812
        %v3814 = vpop.f32.mrb[0].mxu0
        %v3815 = vadd.f32 0.0, %v3814
        %v3816 = vpop.f32.mrb[0].mxu0
        %v3817 = vpop.f32.mrb[0].mxu0
        %3818 = vdwg.mxu0
        %3819 = vmatprep.subr.bf16.mxu0 %v3571
        %3820 = vmatpush1.bf16.msra.mxu0 %v3570
        %3821 = vmatprep.subr.bf16.mxu0 %v3575
        %3822 = vmatpush1.bf16.msra.mxu0 %v3574
        %3823 = vmatprep.subr.bf16.mxu0 %v3579
        %3824 = vmatpush1.bf16.msra.mxu0 %v3578
        %3825 = vmatprep.subr.bf16.mxu0 %v3583
        %3826 = vmatpush1.bf16.msra.mxu0 %v3582
        %3827 = vmatprep.subr.bf16.mxu0 %v3587
        %3828 = vmatpush1.bf16.msra.mxu0 %v3586
        %3829 = vmatprep.subr.bf16.mxu0 %v3591
        %3830 = vmatpush1.bf16.msra.mxu0 %v3590
        %3831 = vmatprep.subr.bf16.mxu0 %v3595
        %3832 = vmatpush1.bf16.msra.mxu0 %v3594
        %3833 = vmatprep.subr.bf16.mxu0 %v3599
        %3834 = vmatpush1.bf16.msra.mxu0 %v3598
        %3835 = vmatprep.subr.bf16.mxu0 0
        %3836 = vmatpush1.bf16.msra.mxu0 0
        %3837 = vmatprep.subr.bf16.mxu0 0
        %3838 = vmatpush1.bf16.msra.mxu0 0
        %3839 = vmatprep.subr.bf16.mxu0 0
        %3840 = vmatpush1.bf16.msra.mxu0 0
        %3841 = vmatprep.subr.bf16.mxu0 0
        %3842 = vmatpush1.bf16.msra.mxu0 0
        %3843 = vmatprep.subr.bf16.mxu0 0
        %3844 = vmatpush1.bf16.msra.mxu0 0
        %3845 = vmatprep.subr.bf16.mxu0 0
        %3846 = vmatpush1.bf16.msra.mxu0 0
        %3847 = vmatprep.subr.bf16.mxu0 0
        %3848 = vmatpush1.bf16.msra.mxu0 0
        %3849 = vmatprep.subr.bf16.mxu0 0
        %3850 = vmatpush1.bf16.msra.mxu0 0
        %3851 = vmatprep.mubr.bf16.mxu0 0
        %3852 = vmatmul.mubr.bf16.gmra.mrb[0].mxu0 %v3212
        %v3853 = vpop.f32.mrb[0].mxu0
        %v3854 = vadd.f32 %v3813, %v3853
        %v3855 = vpop.f32.mrb[0].mxu0
        %v3856 = vadd.f32 %v3815, %v3855
        %v3857 = vpop.f32.mrb[0].mxu0
        %v3858 = vpop.f32.mrb[0].mxu0
        %3859 = vdwg.mxu0
        %v3860 = vadd.f32 %v3016, %v3772
        %v3861 = vadd.f32 %v3018, %v3774
        %v3862 = vadd.f32 %v3098, %v3854
        %v3863 = vadd.f32 %v3100, %v3856
        %v3864 = vld [vmem:[#allocation10] sm:$0xf]
        %v3866 = vlaneseq
        %v3867 = vshrl.u32 %v3866, 7
        %v3868 = vsub.s32 0, %v3867
        %v3869 = vrot.slane %v3864, %v3868
        %v3870 = vlaneseq
        %v3871 = vshrl.u32 %v3870, 7
        %v3872 = vsub.s32 1, %v3871
        %v3873 = vrot.slane %v3864, %v3872
        %v3874 = vlaneseq
        %v3875 = vshrl.u32 %v3874, 7
        %v3876 = vsub.s32 2, %v3875
        %v3877 = vrot.slane %v3864, %v3876
        %v3878 = vlaneseq
        %v3879 = vshrl.u32 %v3878, 7
        %v3880 = vsub.s32 3, %v3879
        %v3881 = vrot.slane %v3864, %v3880
        %v3886 = vadd.f32 %v3860, %v3869
        %v3887 = vadd.f32 %v3861, %v3873
        %v3888 = vadd.f32 %v3862, %v3877
        %v3889 = vadd.f32 %v3863, %v3881
        %v3890 = vmax.f32 %v3886, 0.0
        %v3891 = vmax.f32 %v3887, 0.0
        %v3892 = vmax.f32 %v3888, 0.0
        %v3893 = vmax.f32 %v3889, 0.0
        %v3894 = vmax.f32 %v3890, %v3891
        %v3895 = vmax.f32 %v3892, %v3893
        %v3896 = vmax.f32 %v3894, %v3895
        %3898 = vrot.lane.b32.xlu0 %v3896, 96
        %v3899 = vpop.permute.xlu0 %3898
        %v3900 = vrot.slane %v3899, 4
        %vm3901 = vcmask 785408
        %v3902 = vsel %vm3901, %v3900, %v3899
        %vm3904 = vcmask 782340
        %vm3905 = vmor %vm3904, %vm1547
        %3906 = vst.msk [vmem:[#allocation3 + $0x4] sm:$0x11] %vm3905, %v3902
        %v3907 = vrot.slane %v3896, 5
        %v3908 = vrot.slane %v3907, 4
        %3909 = vrot.lane.b32.xlu0 %v3908, 32
        %v3910 = vpop.permute.xlu0 %3909
        %v3911 = vrot.slane %v3910, 4
        %vm3912 = vcmask 261120
        %v3913 = vsel %vm3912, %v3911, %v3910
        %vm3915 = vcmask 258052
        %vm3916 = vmor %vm3915, %vm1539
        %3917 = vst.msk [vmem:[#allocation3 + $0x1] sm:$0x11] %vm3916, %v3913
        %v3918 = vrot.slane %v3896, 6
        %v3919 = vrot.slane %v3918, 4
        %3920 = vrot.lane.b32.xlu0 %v3919, 96
        %v3921 = vpop.permute.xlu0 %3920
        %v3922 = vrot.slane %v3921, 4
        %v3923 = vsel %vm3901, %v3922, %v3921
        %3925 = vst.msk [vmem:[#allocation3 + $0x5] sm:$0x11] %vm3905, %v3923
        %v3926 = vrot.slane %v3896, 7
        %v3927 = vrot.slane %v3926, 4
        %3928 = vrot.lane.b32.xlu0 %v3927, 32
        %v3929 = vpop.permute.xlu0 %3928
        %v3930 = vrot.slane %v3929, 4
        %v3931 = vsel %vm3912, %v3930, %v3929
        %3933 = vst.msk [vmem:[#allocation3 + $0x2] sm:$0x11] %vm3916, %v3931
        %v3934 = vld [vmem:[#allocation3] sm:$0x33]
        %v3935 = vld [vmem:[#allocation3 + $0x8] sm:$0x3]
        %v3937 = vcombine.high %v3934, %v3934
        %v3939 = vpack.c.bf16 %v3934, %v3934
        %v3940 = vpack.c.bf16 %v3937, %v3937
        %v3941 = vpack.c.bf16 %v3935, %v3935
        %v3942 = vld [vmem:[%s5] sm:$0xff]
        %v3943 = vld [vmem:[%s5 + $0x8] sm:$0xff]
        %v3944 = vld [vmem:[%s5 + $0x10] sm:$0xff]
        %v3945 = vld [vmem:[%s5 + $0x18] sm:$0xff]
        %v3946 = vld [vmem:[%s5 + $0x20] sm:$0xff]
        %v3947 = vld [vmem:[%s5 + $0x28] sm:$0xff]
        %v3948 = vld [vmem:[%s5 + $0x30] sm:$0xff]
        %v3949 = vld [vmem:[%s5 + $0x38] sm:$0xff]
        %v3950 = vld [vmem:[%s5 + $0x40] sm:$0xff]
        %v3951 = vld [vmem:[%s5 + $0x48] sm:$0xff]
        %v3952 = vld [vmem:[%s5 + $0x50] sm:$0xff]
        %v3953 = vld [vmem:[%s5 + $0x58] sm:$0xff]
        %v3954 = vld [vmem:[%s5 + $0x60] sm:$0xff]
        %v3955 = vld [vmem:[%s5 + $0x68] sm:$0xff]
        %v3956 = vld [vmem:[%s5 + $0x70] sm:$0xff]
        %v3957 = vld [vmem:[%s5 + $0x78] sm:$0xff]
        %v3958 = vld [vmem:[%s5 + $0x80] sm:$0xff]
        %v3959 = vld [vmem:[%s5 + $0x88] sm:$0xff]
        %v3960 = vld [vmem:[%s5 + $0x90] sm:$0xff]
        %v3961 = vld [vmem:[%s5 + $0x98] sm:$0xff]
        %v3962 = vld [vmem:[%s5 + $0xa0] sm:$0xff]
        %v3963 = vld [vmem:[%s5 + $0xa8] sm:$0xff]
        %v3964 = vld [vmem:[%s5 + $0xb0] sm:$0xff]
        %v3965 = vld [vmem:[%s5 + $0xb8] sm:$0xff]
        %v3966 = vld [vmem:[%s5 + $0xc0] sm:$0xff]
        %v3967 = vld [vmem:[%s5 + $0xc8] sm:$0xff]
        %v3968 = vld [vmem:[%s5 + $0xd0] sm:$0xff]
        %v3969 = vld [vmem:[%s5 + $0xd8] sm:$0xff]
        %v3970 = vld [vmem:[%s5 + $0xe0] sm:$0xff]
        %v3971 = vld [vmem:[%s5 + $0xe8] sm:$0xff]
        %v3972 = vld [vmem:[%s5 + $0xf0] sm:$0xff]
        %v3973 = vld [vmem:[%s5 + $0xf8] sm:$0xff]
        %v3974 = vld [vmem:[%s5 + $0x100] sm:$0xff]
        %v3975 = vld [vmem:[%s5 + $0x108] sm:$0xff]
        %v3976 = vld [vmem:[%s5 + $0x110] sm:$0xff]
        %v3977 = vld [vmem:[%s5 + $0x118] sm:$0xff]
        %v3978 = vld [vmem:[%s5 + $0x120] sm:$0xff]
        %v3979 = vld [vmem:[%s5 + $0x128] sm:$0xff]
        %v3980 = vld [vmem:[%s5 + $0x130] sm:$0xff]
        %v3981 = vld [vmem:[%s5 + $0x138] sm:$0xff]
        %v3982 = vld [vmem:[%s5 + $0x140] sm:$0xff]
        %v3983 = vld [vmem:[%s5 + $0x148] sm:$0xff]
        %v3984 = vld [vmem:[%s5 + $0x150] sm:$0xff]
        %v3985 = vld [vmem:[%s5 + $0x158] sm:$0xff]
        %v3986 = vld [vmem:[%s5 + $0x160] sm:$0xff]
        %v3987 = vld [vmem:[%s5 + $0x168] sm:$0xff]
        %v3988 = vld [vmem:[%s5 + $0x170] sm:$0xff]
        %v3989 = vld [vmem:[%s5 + $0x178] sm:$0xff]
        %v3990 = vld [vmem:[%s5 + $0x180] sm:$0xff]
        %v3991 = vld [vmem:[%s5 + $0x188] sm:$0xff]
        %v3992 = vld [vmem:[%s5 + $0x190] sm:$0xff]
        %v3993 = vld [vmem:[%s5 + $0x198] sm:$0xff]
        %v3994 = vld [vmem:[%s5 + $0x1a0] sm:$0xff]
        %v3995 = vld [vmem:[%s5 + $0x1a8] sm:$0xff]
        %v3996 = vld [vmem:[%s5 + $0x1b0] sm:$0xff]
        %v3997 = vld [vmem:[%s5 + $0x1b8] sm:$0xff]
        %v3998 = vld [vmem:[%s5 + $0x1c0] sm:$0xff]
        %v3999 = vld [vmem:[%s5 + $0x1c8] sm:$0xff]
        %v4000 = vld [vmem:[%s5 + $0x1d0] sm:$0xff]
        %v4001 = vld [vmem:[%s5 + $0x1d8] sm:$0xff]
        %v4002 = vld [vmem:[%s5 + $0x1e0] sm:$0xff]
        %v4003 = vld [vmem:[%s5 + $0x1e8] sm:$0xff]
        %v4004 = vld [vmem:[%s5 + $0x1f0] sm:$0xff]
        %v4005 = vld [vmem:[%s5 + $0x1f8] sm:$0xff]
        %v4006 = vld [vmem:[%s5 + $0x200] sm:$0xff]
        %v4007 = vld [vmem:[%s5 + $0x208] sm:$0xff]
        %v4008 = vld [vmem:[%s5 + $0x210] sm:$0xff]
        %v4009 = vld [vmem:[%s5 + $0x218] sm:$0xff]
        %v4010 = vld [vmem:[%s5 + $0x220] sm:$0xff]
        %v4011 = vld [vmem:[%s5 + $0x228] sm:$0xff]
        %v4012 = vld [vmem:[%s5 + $0x230] sm:$0xff]
        %v4013 = vld [vmem:[%s5 + $0x238] sm:$0xff]
        %v4014 = vld [vmem:[%s5 + $0x240] sm:$0xff]
        %v4015 = vld [vmem:[%s5 + $0x248] sm:$0xff]
        %v4016 = vld [vmem:[%s5 + $0x250] sm:$0xff]
        %v4017 = vld [vmem:[%s5 + $0x258] sm:$0xff]
        %v4018 = vld [vmem:[%s5 + $0x260] sm:$0xff]
        %v4019 = vld [vmem:[%s5 + $0x268] sm:$0xff]
        %v4020 = vld [vmem:[%s5 + $0x270] sm:$0xff]
        %v4021 = vld [vmem:[%s5 + $0x278] sm:$0xff]
        %v4022 = vld [vmem:[%s5 + $0x280] sm:$0xff]
        %v4023 = vld [vmem:[%s5 + $0x288] sm:$0xff]
        %v4024 = vld [vmem:[%s5 + $0x290] sm:$0xff]
        %v4025 = vld [vmem:[%s5 + $0x298] sm:$0xff]
        %v4026 = vld [vmem:[%s5 + $0x2a0] sm:$0xff]
        %v4027 = vld [vmem:[%s5 + $0x2a8] sm:$0xff]
        %v4028 = vld [vmem:[%s5 + $0x2b0] sm:$0xff]
        %v4029 = vld [vmem:[%s5 + $0x2b8] sm:$0xff]
        %v4030 = vld [vmem:[%s5 + $0x2c0] sm:$0xff]
        %v4031 = vld [vmem:[%s5 + $0x2c8] sm:$0xff]
        %v4032 = vld [vmem:[%s5 + $0x2d0] sm:$0xff]
        %v4033 = vld [vmem:[%s5 + $0x2d8] sm:$0xff]
        %v4034 = vld [vmem:[%s5 + $0x2e0] sm:$0xff]
        %v4035 = vld [vmem:[%s5 + $0x2e8] sm:$0xff]
        %v4036 = vld [vmem:[%s5 + $0x2f0] sm:$0xff]
        %v4037 = vld [vmem:[%s5 + $0x2f8] sm:$0xff]
        %v4038 = vld [vmem:[#allocation3] sm:$0x66]
        %v4039 = vld [vmem:[#allocation3 + $0x8] sm:$0x6]
        %v4041 = vcombine.high %v4038, %v4038
        %v4043 = vpack.c.bf16 %v4038, %v4038
        %v4044 = vpack.c.bf16 %v4041, %v4041
        %v4045 = vpack.c.bf16 %v4039, %v4039
        %s4046 = scalar_lea.vmem %s5, 768
        %v4047 = vld [vmem:[%s4046] sm:$0xff]
        %v4048 = vld [vmem:[%s4046 + $0x8] sm:$0xff]
        %v4049 = vld [vmem:[%s4046 + $0x10] sm:$0xff]
        %v4050 = vld [vmem:[%s4046 + $0x18] sm:$0xff]
        %v4051 = vld [vmem:[%s4046 + $0x20] sm:$0xff]
        %v4052 = vld [vmem:[%s4046 + $0x28] sm:$0xff]
        %v4053 = vld [vmem:[%s4046 + $0x30] sm:$0xff]
        %v4054 = vld [vmem:[%s4046 + $0x38] sm:$0xff]
        %v4055 = vld [vmem:[%s4046 + $0x40] sm:$0xff]
        %v4056 = vld [vmem:[%s4046 + $0x48] sm:$0xff]
        %v4057 = vld [vmem:[%s4046 + $0x50] sm:$0xff]
        %v4058 = vld [vmem:[%s4046 + $0x58] sm:$0xff]
        %v4059 = vld [vmem:[%s4046 + $0x60] sm:$0xff]
        %v4060 = vld [vmem:[%s4046 + $0x68] sm:$0xff]
        %v4061 = vld [vmem:[%s4046 + $0x70] sm:$0xff]
        %v4062 = vld [vmem:[%s4046 + $0x78] sm:$0xff]
        %v4063 = vld [vmem:[%s4046 + $0x80] sm:$0xff]
        %v4064 = vld [vmem:[%s4046 + $0x88] sm:$0xff]
        %v4065 = vld [vmem:[%s4046 + $0x90] sm:$0xff]
        %v4066 = vld [vmem:[%s4046 + $0x98] sm:$0xff]
        %v4067 = vld [vmem:[%s4046 + $0xa0] sm:$0xff]
        %v4068 = vld [vmem:[%s4046 + $0xa8] sm:$0xff]
        %v4069 = vld [vmem:[%s4046 + $0xb0] sm:$0xff]
        %v4070 = vld [vmem:[%s4046 + $0xb8] sm:$0xff]
        %v4071 = vld [vmem:[%s4046 + $0xc0] sm:$0xff]
        %v4072 = vld [vmem:[%s4046 + $0xc8] sm:$0xff]
        %v4073 = vld [vmem:[%s4046 + $0xd0] sm:$0xff]
        %v4074 = vld [vmem:[%s4046 + $0xd8] sm:$0xff]
        %v4075 = vld [vmem:[%s4046 + $0xe0] sm:$0xff]
        %v4076 = vld [vmem:[%s4046 + $0xe8] sm:$0xff]
        %v4077 = vld [vmem:[%s4046 + $0xf0] sm:$0xff]
        %v4078 = vld [vmem:[%s4046 + $0xf8] sm:$0xff]
        %v4079 = vld [vmem:[%s4046 + $0x100] sm:$0xff]
        %v4080 = vld [vmem:[%s4046 + $0x108] sm:$0xff]
        %v4081 = vld [vmem:[%s4046 + $0x110] sm:$0xff]
        %v4082 = vld [vmem:[%s4046 + $0x118] sm:$0xff]
        %v4083 = vld [vmem:[%s4046 + $0x120] sm:$0xff]
        %v4084 = vld [vmem:[%s4046 + $0x128] sm:$0xff]
        %v4085 = vld [vmem:[%s4046 + $0x130] sm:$0xff]
        %v4086 = vld [vmem:[%s4046 + $0x138] sm:$0xff]
        %v4087 = vld [vmem:[%s4046 + $0x140] sm:$0xff]
        %v4088 = vld [vmem:[%s4046 + $0x148] sm:$0xff]
        %v4089 = vld [vmem:[%s4046 + $0x150] sm:$0xff]
        %v4090 = vld [vmem:[%s4046 + $0x158] sm:$0xff]
        %v4091 = vld [vmem:[%s4046 + $0x160] sm:$0xff]
        %v4092 = vld [vmem:[%s4046 + $0x168] sm:$0xff]
        %v4093 = vld [vmem:[%s4046 + $0x170] sm:$0xff]
        %v4094 = vld [vmem:[%s4046 + $0x178] sm:$0xff]
        %v4095 = vld [vmem:[%s4046 + $0x180] sm:$0xff]
        %v4096 = vld [vmem:[%s4046 + $0x188] sm:$0xff]
        %v4097 = vld [vmem:[%s4046 + $0x190] sm:$0xff]
        %v4098 = vld [vmem:[%s4046 + $0x198] sm:$0xff]
        %v4099 = vld [vmem:[%s4046 + $0x1a0] sm:$0xff]
        %v4100 = vld [vmem:[%s4046 + $0x1a8] sm:$0xff]
        %v4101 = vld [vmem:[%s4046 + $0x1b0] sm:$0xff]
        %v4102 = vld [vmem:[%s4046 + $0x1b8] sm:$0xff]
        %v4103 = vld [vmem:[%s4046 + $0x1c0] sm:$0xff]
        %v4104 = vld [vmem:[%s4046 + $0x1c8] sm:$0xff]
        %v4105 = vld [vmem:[%s4046 + $0x1d0] sm:$0xff]
        %v4106 = vld [vmem:[%s4046 + $0x1d8] sm:$0xff]
        %v4107 = vld [vmem:[%s4046 + $0x1e0] sm:$0xff]
        %v4108 = vld [vmem:[%s4046 + $0x1e8] sm:$0xff]
        %v4109 = vld [vmem:[%s4046 + $0x1f0] sm:$0xff]
        %v4110 = vld [vmem:[%s4046 + $0x1f8] sm:$0xff]
        %v4111 = vld [vmem:[%s4046 + $0x200] sm:$0xff]
        %v4112 = vld [vmem:[%s4046 + $0x208] sm:$0xff]
        %v4113 = vld [vmem:[%s4046 + $0x210] sm:$0xff]
        %v4114 = vld [vmem:[%s4046 + $0x218] sm:$0xff]
        %v4115 = vld [vmem:[%s4046 + $0x220] sm:$0xff]
        %v4116 = vld [vmem:[%s4046 + $0x228] sm:$0xff]
        %v4117 = vld [vmem:[%s4046 + $0x230] sm:$0xff]
        %v4118 = vld [vmem:[%s4046 + $0x238] sm:$0xff]
        %v4119 = vld [vmem:[%s4046 + $0x240] sm:$0xff]
        %v4120 = vld [vmem:[%s4046 + $0x248] sm:$0xff]
        %v4121 = vld [vmem:[%s4046 + $0x250] sm:$0xff]
        %v4122 = vld [vmem:[%s4046 + $0x258] sm:$0xff]
        %v4123 = vld [vmem:[%s4046 + $0x260] sm:$0xff]
        %v4124 = vld [vmem:[%s4046 + $0x268] sm:$0xff]
        %v4125 = vld [vmem:[%s4046 + $0x270] sm:$0xff]
        %v4126 = vld [vmem:[%s4046 + $0x278] sm:$0xff]
        %v4127 = vld [vmem:[%s4046 + $0x280] sm:$0xff]
        %v4128 = vld [vmem:[%s4046 + $0x288] sm:$0xff]
        %v4129 = vld [vmem:[%s4046 + $0x290] sm:$0xff]
        %v4130 = vld [vmem:[%s4046 + $0x298] sm:$0xff]
        %v4131 = vld [vmem:[%s4046 + $0x2a0] sm:$0xff]
        %v4132 = vld [vmem:[%s4046 + $0x2a8] sm:$0xff]
        %v4133 = vld [vmem:[%s4046 + $0x2b0] sm:$0xff]
        %v4134 = vld [vmem:[%s4046 + $0x2b8] sm:$0xff]
        %v4135 = vld [vmem:[%s4046 + $0x2c0] sm:$0xff]
        %v4136 = vld [vmem:[%s4046 + $0x2c8] sm:$0xff]
        %v4137 = vld [vmem:[%s4046 + $0x2d0] sm:$0xff]
        %v4138 = vld [vmem:[%s4046 + $0x2d8] sm:$0xff]
        %v4139 = vld [vmem:[%s4046 + $0x2e0] sm:$0xff]
        %v4140 = vld [vmem:[%s4046 + $0x2e8] sm:$0xff]
        %v4141 = vld [vmem:[%s4046 + $0x2f0] sm:$0xff]
        %v4142 = vld [vmem:[%s4046 + $0x2f8] sm:$0xff]
        %v4144 = vshrl.u32 %v4043, 16
        %v4146 = vshll.u32 %v4043, 16
        %v4148 = vrot.slane %v4146, 1
        %v4149 = vor.u32 %v4144, %v4148
        %v4151 = vshrl.u32 %v4044, 16
        %v4153 = vshll.u32 %v4044, 16
        %v4155 = vrot.slane %v4153, 1
        %v4156 = vor.u32 %v4151, %v4155
        %v4158 = vshrl.u32 %v4045, 16
        %v4160 = vshll.u32 %v4045, 16
        %v4162 = vrot.slane %v4160, 1
        %v4163 = vor.u32 %v4158, %v4162
        %v4263 = vunpack.c.l.b16 %v4047
        %v4264 = vunpack.c.h.b16 %v4047
        %v4265 = vunpack.c.l.b16 %v4048
        %v4266 = vunpack.c.h.b16 %v4048
        %v4267 = vunpack.c.l.b16 %v4049
        %v4268 = vunpack.c.h.b16 %v4049
        %v4269 = vunpack.c.l.b16 %v4050
        %v4270 = vunpack.c.h.b16 %v4050
        %v4271 = vunpack.c.l.b16 %v4051
        %v4272 = vunpack.c.h.b16 %v4051
        %v4273 = vunpack.c.l.b16 %v4052
        %v4274 = vunpack.c.h.b16 %v4052
        %v4275 = vunpack.c.l.b16 %v4053
        %v4276 = vunpack.c.h.b16 %v4053
        %v4277 = vunpack.c.l.b16 %v4054
        %v4278 = vunpack.c.h.b16 %v4054
        %v4279 = vunpack.c.l.b16 %v4055
        %v4280 = vunpack.c.h.b16 %v4055
        %v4281 = vunpack.c.l.b16 %v4056
        %v4282 = vunpack.c.h.b16 %v4056
        %v4283 = vunpack.c.l.b16 %v4057
        %v4284 = vunpack.c.h.b16 %v4057
        %v4285 = vunpack.c.l.b16 %v4058
        %v4286 = vunpack.c.h.b16 %v4058
        %v4287 = vunpack.c.l.b16 %v4059
        %v4288 = vunpack.c.h.b16 %v4059
        %v4289 = vunpack.c.l.b16 %v4060
        %v4290 = vunpack.c.h.b16 %v4060
        %v4291 = vunpack.c.l.b16 %v4061
        %v4292 = vunpack.c.h.b16 %v4061
        %v4293 = vunpack.c.l.b16 %v4062
        %v4294 = vunpack.c.h.b16 %v4062
        %v4295 = vunpack.c.l.b16 %v4063
        %v4296 = vunpack.c.h.b16 %v4063
        %v4297 = vunpack.c.l.b16 %v4064
        %v4298 = vunpack.c.h.b16 %v4064
        %v4299 = vunpack.c.l.b16 %v4065
        %v4300 = vunpack.c.h.b16 %v4065
        %v4301 = vunpack.c.l.b16 %v4066
        %v4302 = vunpack.c.h.b16 %v4066
        %v4303 = vunpack.c.l.b16 %v4067
        %v4304 = vunpack.c.h.b16 %v4067
        %v4305 = vunpack.c.l.b16 %v4068
        %v4306 = vunpack.c.h.b16 %v4068
        %v4307 = vunpack.c.l.b16 %v4069
        %v4308 = vunpack.c.h.b16 %v4069
        %v4309 = vunpack.c.l.b16 %v4070
        %v4310 = vunpack.c.h.b16 %v4070
        %v4311 = vunpack.c.l.b16 %v4071
        %v4312 = vunpack.c.h.b16 %v4071
        %v4313 = vunpack.c.l.b16 %v4072
        %v4314 = vunpack.c.h.b16 %v4072
        %v4315 = vunpack.c.l.b16 %v4073
        %v4316 = vunpack.c.h.b16 %v4073
        %v4317 = vunpack.c.l.b16 %v4074
        %v4318 = vunpack.c.h.b16 %v4074
        %v4319 = vunpack.c.l.b16 %v4075
        %v4320 = vunpack.c.h.b16 %v4075
        %v4321 = vunpack.c.l.b16 %v4076
        %v4322 = vunpack.c.h.b16 %v4076
        %v4323 = vunpack.c.l.b16 %v4077
        %v4324 = vunpack.c.h.b16 %v4077
        %v4325 = vunpack.c.l.b16 %v4078
        %v4326 = vunpack.c.h.b16 %v4078
        %v4327 = vunpack.c.l.b16 %v4079
        %v4328 = vunpack.c.h.b16 %v4079
        %v4329 = vunpack.c.l.b16 %v4080
        %v4330 = vunpack.c.h.b16 %v4080
        %v4331 = vunpack.c.l.b16 %v4081
        %v4332 = vunpack.c.h.b16 %v4081
        %v4333 = vunpack.c.l.b16 %v4082
        %v4334 = vunpack.c.h.b16 %v4082
        %v4335 = vunpack.c.l.b16 %v4083
        %v4336 = vunpack.c.h.b16 %v4083
        %v4337 = vunpack.c.l.b16 %v4084
        %v4338 = vunpack.c.h.b16 %v4084
        %v4339 = vunpack.c.l.b16 %v4085
        %v4340 = vunpack.c.h.b16 %v4085
        %v4341 = vunpack.c.l.b16 %v4086
        %v4342 = vunpack.c.h.b16 %v4086
        %v4343 = vunpack.c.l.b16 %v4087
        %v4344 = vunpack.c.h.b16 %v4087
        %v4345 = vunpack.c.l.b16 %v4088
        %v4346 = vunpack.c.h.b16 %v4088
        %v4347 = vunpack.c.l.b16 %v4089
        %v4348 = vunpack.c.h.b16 %v4089
        %v4349 = vunpack.c.l.b16 %v4090
        %v4350 = vunpack.c.h.b16 %v4090
        %v4351 = vunpack.c.l.b16 %v4091
        %v4352 = vunpack.c.h.b16 %v4091
        %v4353 = vunpack.c.l.b16 %v4092
        %v4354 = vunpack.c.h.b16 %v4092
        %v4355 = vunpack.c.l.b16 %v4093
        %v4356 = vunpack.c.h.b16 %v4093
        %v4357 = vunpack.c.l.b16 %v4094
        %v4358 = vunpack.c.h.b16 %v4094
        %v4359 = vunpack.c.l.b16 %v4095
        %v4360 = vunpack.c.h.b16 %v4095
        %v4361 = vunpack.c.l.b16 %v4096
        %v4362 = vunpack.c.h.b16 %v4096
        %v4363 = vunpack.c.l.b16 %v4097
        %v4364 = vunpack.c.h.b16 %v4097
        %v4365 = vunpack.c.l.b16 %v4098
        %v4366 = vunpack.c.h.b16 %v4098
        %v4367 = vunpack.c.l.b16 %v4099
        %v4368 = vunpack.c.h.b16 %v4099
        %v4369 = vunpack.c.l.b16 %v4100
        %v4370 = vunpack.c.h.b16 %v4100
        %v4371 = vunpack.c.l.b16 %v4101
        %v4372 = vunpack.c.h.b16 %v4101
        %v4373 = vunpack.c.l.b16 %v4102
        %v4374 = vunpack.c.h.b16 %v4102
        %v4375 = vunpack.c.l.b16 %v4103
        %v4376 = vunpack.c.h.b16 %v4103
        %v4377 = vunpack.c.l.b16 %v4104
        %v4378 = vunpack.c.h.b16 %v4104
        %v4379 = vunpack.c.l.b16 %v4105
        %v4380 = vunpack.c.h.b16 %v4105
        %v4381 = vunpack.c.l.b16 %v4106
        %v4382 = vunpack.c.h.b16 %v4106
        %v4383 = vunpack.c.l.b16 %v4107
        %v4384 = vunpack.c.h.b16 %v4107
        %v4385 = vunpack.c.l.b16 %v4108
        %v4386 = vunpack.c.h.b16 %v4108
        %v4387 = vunpack.c.l.b16 %v4109
        %v4388 = vunpack.c.h.b16 %v4109
        %v4389 = vunpack.c.l.b16 %v4110
        %v4390 = vunpack.c.h.b16 %v4110
        %v4391 = vunpack.c.l.b16 %v4111
        %v4392 = vunpack.c.h.b16 %v4111
        %v4393 = vunpack.c.l.b16 %v4112
        %v4394 = vunpack.c.h.b16 %v4112
        %v4395 = vunpack.c.l.b16 %v4113
        %v4396 = vunpack.c.h.b16 %v4113
        %v4397 = vunpack.c.l.b16 %v4114
        %v4398 = vunpack.c.h.b16 %v4114
        %v4399 = vunpack.c.l.b16 %v4115
        %v4400 = vunpack.c.h.b16 %v4115
        %v4401 = vunpack.c.l.b16 %v4116
        %v4402 = vunpack.c.h.b16 %v4116
        %v4403 = vunpack.c.l.b16 %v4117
        %v4404 = vunpack.c.h.b16 %v4117
        %v4405 = vunpack.c.l.b16 %v4118
        %v4406 = vunpack.c.h.b16 %v4118
        %v4407 = vunpack.c.l.b16 %v4119
        %v4408 = vunpack.c.h.b16 %v4119
        %v4409 = vunpack.c.l.b16 %v4120
        %v4410 = vunpack.c.h.b16 %v4120
        %v4411 = vunpack.c.l.b16 %v4121
        %v4412 = vunpack.c.h.b16 %v4121
        %v4413 = vunpack.c.l.b16 %v4122
        %v4414 = vunpack.c.h.b16 %v4122
        %v4415 = vunpack.c.l.b16 %v4123
        %v4416 = vunpack.c.h.b16 %v4123
        %v4417 = vunpack.c.l.b16 %v4124
        %v4418 = vunpack.c.h.b16 %v4124
        %v4419 = vunpack.c.l.b16 %v4125
        %v4420 = vunpack.c.h.b16 %v4125
        %v4421 = vunpack.c.l.b16 %v4126
        %v4422 = vunpack.c.h.b16 %v4126
        %v4423 = vunpack.c.l.b16 %v4127
        %v4424 = vunpack.c.h.b16 %v4127
        %v4425 = vunpack.c.l.b16 %v4128
        %v4426 = vunpack.c.h.b16 %v4128
        %v4427 = vunpack.c.l.b16 %v4129
        %v4428 = vunpack.c.h.b16 %v4129
        %v4429 = vunpack.c.l.b16 %v4130
        %v4430 = vunpack.c.h.b16 %v4130
        %v4431 = vunpack.c.l.b16 %v4131
        %v4432 = vunpack.c.h.b16 %v4131
        %v4433 = vunpack.c.l.b16 %v4132
        %v4434 = vunpack.c.h.b16 %v4132
        %v4435 = vunpack.c.l.b16 %v4133
        %v4436 = vunpack.c.h.b16 %v4133
        %v4437 = vunpack.c.l.b16 %v4134
        %v4438 = vunpack.c.h.b16 %v4134
        %v4439 = vunpack.c.l.b16 %v4135
        %v4440 = vunpack.c.h.b16 %v4135
        %v4441 = vunpack.c.l.b16 %v4136
        %v4442 = vunpack.c.h.b16 %v4136
        %v4443 = vunpack.c.l.b16 %v4137
        %v4444 = vunpack.c.h.b16 %v4137
        %v4445 = vunpack.c.l.b16 %v4138
        %v4446 = vunpack.c.h.b16 %v4138
        %v4447 = vunpack.c.l.b16 %v4139
        %v4448 = vunpack.c.h.b16 %v4139
        %v4449 = vunpack.c.l.b16 %v4140
        %v4450 = vunpack.c.h.b16 %v4140
        %v4451 = vunpack.c.l.b16 %v4141
        %v4452 = vunpack.c.h.b16 %v4141
        %v4453 = vunpack.c.l.b16 %v4142
        %v4454 = vunpack.c.h.b16 %v4142
        %v4455 = vpack.c.b16 %v4267, %v4263
        %v4456 = vpack.c.b16 %v4268, %v4264
        %v4457 = vpack.c.b16 %v4269, %v4265
        %v4458 = vpack.c.b16 %v4270, %v4266
        %v4459 = vpack.c.b16 %v4275, %v4271
        %v4460 = vpack.c.b16 %v4276, %v4272
        %v4461 = vpack.c.b16 %v4277, %v4273
        %v4462 = vpack.c.b16 %v4278, %v4274
        %v4463 = vpack.c.b16 %v4283, %v4279
        %v4464 = vpack.c.b16 %v4284, %v4280
        %v4465 = vpack.c.b16 %v4285, %v4281
        %v4466 = vpack.c.b16 %v4286, %v4282
        %v4467 = vpack.c.b16 %v4291, %v4287
        %v4468 = vpack.c.b16 %v4292, %v4288
        %v4469 = vpack.c.b16 %v4293, %v4289
        %v4470 = vpack.c.b16 %v4294, %v4290
        %v4471 = vpack.c.b16 %v4299, %v4295
        %v4472 = vpack.c.b16 %v4300, %v4296
        %v4473 = vpack.c.b16 %v4301, %v4297
        %v4474 = vpack.c.b16 %v4302, %v4298
        %v4475 = vpack.c.b16 %v4307, %v4303
        %v4476 = vpack.c.b16 %v4308, %v4304
        %v4477 = vpack.c.b16 %v4309, %v4305
        %v4478 = vpack.c.b16 %v4310, %v4306
        %v4479 = vpack.c.b16 %v4315, %v4311
        %v4480 = vpack.c.b16 %v4316, %v4312
        %v4481 = vpack.c.b16 %v4317, %v4313
        %v4482 = vpack.c.b16 %v4318, %v4314
        %v4483 = vpack.c.b16 %v4323, %v4319
        %v4484 = vpack.c.b16 %v4324, %v4320
        %v4485 = vpack.c.b16 %v4325, %v4321
        %v4486 = vpack.c.b16 %v4326, %v4322
        %v4487 = vpack.c.b16 %v4331, %v4327
        %v4488 = vpack.c.b16 %v4332, %v4328
        %v4489 = vpack.c.b16 %v4333, %v4329
        %v4490 = vpack.c.b16 %v4334, %v4330
        %v4491 = vpack.c.b16 %v4339, %v4335
        %v4492 = vpack.c.b16 %v4340, %v4336
        %v4493 = vpack.c.b16 %v4341, %v4337
        %v4494 = vpack.c.b16 %v4342, %v4338
        %v4495 = vpack.c.b16 %v4347, %v4343
        %v4496 = vpack.c.b16 %v4348, %v4344
        %v4497 = vpack.c.b16 %v4349, %v4345
        %v4498 = vpack.c.b16 %v4350, %v4346
        %v4499 = vpack.c.b16 %v4355, %v4351
        %v4500 = vpack.c.b16 %v4356, %v4352
        %v4501 = vpack.c.b16 %v4357, %v4353
        %v4502 = vpack.c.b16 %v4358, %v4354
        %v4503 = vpack.c.b16 %v4363, %v4359
        %v4504 = vpack.c.b16 %v4364, %v4360
        %v4505 = vpack.c.b16 %v4365, %v4361
        %v4506 = vpack.c.b16 %v4366, %v4362
        %v4507 = vpack.c.b16 %v4371, %v4367
        %v4508 = vpack.c.b16 %v4372, %v4368
        %v4509 = vpack.c.b16 %v4373, %v4369
        %v4510 = vpack.c.b16 %v4374, %v4370
        %v4511 = vpack.c.b16 %v4379, %v4375
        %v4512 = vpack.c.b16 %v4380, %v4376
        %v4513 = vpack.c.b16 %v4381, %v4377
        %v4514 = vpack.c.b16 %v4382, %v4378
        %v4515 = vpack.c.b16 %v4387, %v4383
        %v4516 = vpack.c.b16 %v4388, %v4384
        %v4517 = vpack.c.b16 %v4389, %v4385
        %v4518 = vpack.c.b16 %v4390, %v4386
        %v4519 = vpack.c.b16 %v4395, %v4391
        %v4520 = vpack.c.b16 %v4396, %v4392
        %v4521 = vpack.c.b16 %v4397, %v4393
        %v4522 = vpack.c.b16 %v4398, %v4394
        %v4523 = vpack.c.b16 %v4403, %v4399
        %v4524 = vpack.c.b16 %v4404, %v4400
        %v4525 = vpack.c.b16 %v4405, %v4401
        %v4526 = vpack.c.b16 %v4406, %v4402
        %v4527 = vpack.c.b16 %v4411, %v4407
        %v4528 = vpack.c.b16 %v4412, %v4408
        %v4529 = vpack.c.b16 %v4413, %v4409
        %v4530 = vpack.c.b16 %v4414, %v4410
        %v4531 = vpack.c.b16 %v4419, %v4415
        %v4532 = vpack.c.b16 %v4420, %v4416
        %v4533 = vpack.c.b16 %v4421, %v4417
        %v4534 = vpack.c.b16 %v4422, %v4418
        %v4535 = vpack.c.b16 %v4427, %v4423
        %v4536 = vpack.c.b16 %v4428, %v4424
        %v4537 = vpack.c.b16 %v4429, %v4425
        %v4538 = vpack.c.b16 %v4430, %v4426
        %v4539 = vpack.c.b16 %v4435, %v4431
        %v4540 = vpack.c.b16 %v4436, %v4432
        %v4541 = vpack.c.b16 %v4437, %v4433
        %v4542 = vpack.c.b16 %v4438, %v4434
        %v4543 = vpack.c.b16 %v4443, %v4439
        %v4544 = vpack.c.b16 %v4444, %v4440
        %v4545 = vpack.c.b16 %v4445, %v4441
        %v4546 = vpack.c.b16 %v4446, %v4442
        %v4547 = vpack.c.b16 %v4451, %v4447
        %v4548 = vpack.c.b16 %v4452, %v4448
        %v4549 = vpack.c.b16 %v4453, %v4449
        %v4550 = vpack.c.b16 %v4454, %v4450
        %4647 = vmatprep.subr.bf16.mxu0 %v4456
        %4648 = vmatpush1.bf16.msra.mxu0 %v4455
        %4649 = vmatprep.subr.bf16.mxu0 %v4460
        %4650 = vmatpush1.bf16.msra.mxu0 %v4459
        %4651 = vmatprep.subr.bf16.mxu0 %v4464
        %4652 = vmatpush1.bf16.msra.mxu0 %v4463
        %4653 = vmatprep.subr.bf16.mxu0 %v4468
        %4654 = vmatpush1.bf16.msra.mxu0 %v4467
        %4655 = vmatprep.subr.bf16.mxu0 %v4472
        %4656 = vmatpush1.bf16.msra.mxu0 %v4471
        %4657 = vmatprep.subr.bf16.mxu0 %v4476
        %4658 = vmatpush1.bf16.msra.mxu0 %v4475
        %4659 = vmatprep.subr.bf16.mxu0 %v4480
        %4660 = vmatpush1.bf16.msra.mxu0 %v4479
        %4661 = vmatprep.subr.bf16.mxu0 %v4484
        %4662 = vmatpush1.bf16.msra.mxu0 %v4483
        %4663 = vmatprep.subr.bf16.mxu0 %v4488
        %4664 = vmatpush1.bf16.msra.mxu0 %v4487
        %4665 = vmatprep.subr.bf16.mxu0 %v4492
        %4666 = vmatpush1.bf16.msra.mxu0 %v4491
        %4667 = vmatprep.subr.bf16.mxu0 %v4496
        %4668 = vmatpush1.bf16.msra.mxu0 %v4495
        %4669 = vmatprep.subr.bf16.mxu0 %v4500
        %4670 = vmatpush1.bf16.msra.mxu0 %v4499
        %4671 = vmatprep.subr.bf16.mxu0 %v4504
        %4672 = vmatpush1.bf16.msra.mxu0 %v4503
        %4673 = vmatprep.subr.bf16.mxu0 %v4508
        %4674 = vmatpush1.bf16.msra.mxu0 %v4507
        %4675 = vmatprep.subr.bf16.mxu0 %v4512
        %4676 = vmatpush1.bf16.msra.mxu0 %v4511
        %4677 = vmatprep.subr.bf16.mxu0 %v4516
        %4678 = vmatpush1.bf16.msra.mxu0 %v4515
        %4679 = vmatprep.mubr.bf16.mxu0 %v4156
        %4680 = vmatmul.mubr.bf16.gmra.mrb[0].mxu0 %v4149
        %v4681 = vpop.f32.mrb[0].mxu0
        %v4682 = vadd.f32 0.0, %v4681
        %v4683 = vpop.f32.mrb[0].mxu0
        %v4684 = vadd.f32 0.0, %v4683
        %v4685 = vpop.f32.mrb[0].mxu0
        %v4686 = vpop.f32.mrb[0].mxu0
        %4687 = vdwg.mxu0
        %4688 = vmatprep.subr.bf16.mxu0 %v4520
        %4689 = vmatpush1.bf16.msra.mxu0 %v4519
        %4690 = vmatprep.subr.bf16.mxu0 %v4524
        %4691 = vmatpush1.bf16.msra.mxu0 %v4523
        %4692 = vmatprep.subr.bf16.mxu0 %v4528
        %4693 = vmatpush1.bf16.msra.mxu0 %v4527
        %4694 = vmatprep.subr.bf16.mxu0 %v4532
        %4695 = vmatpush1.bf16.msra.mxu0 %v4531
        %4696 = vmatprep.subr.bf16.mxu0 %v4536
        %4697 = vmatpush1.bf16.msra.mxu0 %v4535
        %4698 = vmatprep.subr.bf16.mxu0 %v4540
        %4699 = vmatpush1.bf16.msra.mxu0 %v4539
        %4700 = vmatprep.subr.bf16.mxu0 %v4544
        %4701 = vmatpush1.bf16.msra.mxu0 %v4543
        %4702 = vmatprep.subr.bf16.mxu0 %v4548
        %4703 = vmatpush1.bf16.msra.mxu0 %v4547
        %4704 = vmatprep.subr.bf16.mxu0 0
        %4705 = vmatpush1.bf16.msra.mxu0 0
        %4706 = vmatprep.subr.bf16.mxu0 0
        %4707 = vmatpush1.bf16.msra.mxu0 0
        %4708 = vmatprep.subr.bf16.mxu0 0
        %4709 = vmatpush1.bf16.msra.mxu0 0
        %4710 = vmatprep.subr.bf16.mxu0 0
        %4711 = vmatpush1.bf16.msra.mxu0 0
        %4712 = vmatprep.subr.bf16.mxu0 0
        %4713 = vmatpush1.bf16.msra.mxu0 0
        %4714 = vmatprep.subr.bf16.mxu0 0
        %4715 = vmatpush1.bf16.msra.mxu0 0
        %4716 = vmatprep.subr.bf16.mxu0 0
        %4717 = vmatpush1.bf16.msra.mxu0 0
        %4718 = vmatprep.subr.bf16.mxu0 0
        %4719 = vmatpush1.bf16.msra.mxu0 0
        %4720 = vmatprep.mubr.bf16.mxu0 0
        %4721 = vmatmul.mubr.bf16.gmra.mrb[0].mxu0 %v4163
        %v4722 = vpop.f32.mrb[0].mxu0
        %v4723 = vadd.f32 %v4682, %v4722
        %v4724 = vpop.f32.mrb[0].mxu0
        %v4725 = vadd.f32 %v4684, %v4724
        %v4726 = vpop.f32.mrb[0].mxu0
        %v4727 = vpop.f32.mrb[0].mxu0
        %4728 = vdwg.mxu0
        %4729 = vmatprep.subr.bf16.mxu0 %v4458
        %4730 = vmatpush1.bf16.msra.mxu0 %v4457
        %4731 = vmatprep.subr.bf16.mxu0 %v4462
        %4732 = vmatpush1.bf16.msra.mxu0 %v4461
        %4733 = vmatprep.subr.bf16.mxu0 %v4466
        %4734 = vmatpush1.bf16.msra.mxu0 %v4465
        %4735 = vmatprep.subr.bf16.mxu0 %v4470
        %4736 = vmatpush1.bf16.msra.mxu0 %v4469
        %4737 = vmatprep.subr.bf16.mxu0 %v4474
        %4738 = vmatpush1.bf16.msra.mxu0 %v4473
        %4739 = vmatprep.subr.bf16.mxu0 %v4478
        %4740 = vmatpush1.bf16.msra.mxu0 %v4477
        %4741 = vmatprep.subr.bf16.mxu0 %v4482
        %4742 = vmatpush1.bf16.msra.mxu0 %v4481
        %4743 = vmatprep.subr.bf16.mxu0 %v4486
        %4744 = vmatpush1.bf16.msra.mxu0 %v4485
        %4745 = vmatprep.subr.bf16.mxu0 %v4490
        %4746 = vmatpush1.bf16.msra.mxu0 %v4489
        %4747 = vmatprep.subr.bf16.mxu0 %v4494
        %4748 = vmatpush1.bf16.msra.mxu0 %v4493
        %4749 = vmatprep.subr.bf16.mxu0 %v4498
        %4750 = vmatpush1.bf16.msra.mxu0 %v4497
        %4751 = vmatprep.subr.bf16.mxu0 %v4502
        %4752 = vmatpush1.bf16.msra.mxu0 %v4501
        %4753 = vmatprep.subr.bf16.mxu0 %v4506
        %4754 = vmatpush1.bf16.msra.mxu0 %v4505
        %4755 = vmatprep.subr.bf16.mxu0 %v4510
        %4756 = vmatpush1.bf16.msra.mxu0 %v4509
        %4757 = vmatprep.subr.bf16.mxu0 %v4514
        %4758 = vmatpush1.bf16.msra.mxu0 %v4513
        %4759 = vmatprep.subr.bf16.mxu0 %v4518
        %4760 = vmatpush1.bf16.msra.mxu0 %v4517
        %4761 = vmatprep.mubr.bf16.mxu0 %v4156
        %4762 = vmatmul.mubr.bf16.gmra.mrb[0].mxu0 %v4149
        %v4763 = vpop.f32.mrb[0].mxu0
        %v4764 = vadd.f32 0.0, %v4763
        %v4765 = vpop.f32.mrb[0].mxu0
        %v4766 = vadd.f32 0.0, %v4765
        %v4767 = vpop.f32.mrb[0].mxu0
        %v4768 = vpop.f32.mrb[0].mxu0
        %4769 = vdwg.mxu0
        %4770 = vmatprep.subr.bf16.mxu0 %v4522
        %4771 = vmatpush1.bf16.msra.mxu0 %v4521
        %4772 = vmatprep.subr.bf16.mxu0 %v4526
        %4773 = vmatpush1.bf16.msra.mxu0 %v4525
        %4774 = vmatprep.subr.bf16.mxu0 %v4530
        %4775 = vmatpush1.bf16.msra.mxu0 %v4529
        %4776 = vmatprep.subr.bf16.mxu0 %v4534
        %4777 = vmatpush1.bf16.msra.mxu0 %v4533
        %4778 = vmatprep.subr.bf16.mxu0 %v4538
        %4779 = vmatpush1.bf16.msra.mxu0 %v4537
        %4780 = vmatprep.subr.bf16.mxu0 %v4542
        %4781 = vmatpush1.bf16.msra.mxu0 %v4541
        %4782 = vmatprep.subr.bf16.mxu0 %v4546
        %4783 = vmatpush1.bf16.msra.mxu0 %v4545
        %4784 = vmatprep.subr.bf16.mxu0 %v4550
        %4785 = vmatpush1.bf16.msra.mxu0 %v4549
        %4786 = vmatprep.subr.bf16.mxu0 0
        %4787 = vmatpush1.bf16.msra.mxu0 0
        %4788 = vmatprep.subr.bf16.mxu0 0
        %4789 = vmatpush1.bf16.msra.mxu0 0
        %4790 = vmatprep.subr.bf16.mxu0 0
        %4791 = vmatpush1.bf16.msra.mxu0 0
        %4792 = vmatprep.subr.bf16.mxu0 0
        %4793 = vmatpush1.bf16.msra.mxu0 0
        %4794 = vmatprep.subr.bf16.mxu0 0
        %4795 = vmatpush1.bf16.msra.mxu0 0
        %4796 = vmatprep.subr.bf16.mxu0 0
        %4797 = vmatpush1.bf16.msra.mxu0 0
        %4798 = vmatprep.subr.bf16.mxu0 0
        %4799 = vmatpush1.bf16.msra.mxu0 0
        %4800 = vmatprep.subr.bf16.mxu0 0
        %4801 = vmatpush1.bf16.msra.mxu0 0
        %4802 = vmatprep.mubr.bf16.mxu0 0
        %4803 = vmatmul.mubr.bf16.gmra.mrb[0].mxu0 %v4163
        %v4804 = vpop.f32.mrb[0].mxu0
        %v4805 = vadd.f32 %v4764, %v4804
        %v4806 = vpop.f32.mrb[0].mxu0
        %v4807 = vadd.f32 %v4766, %v4806
        %v4808 = vpop.f32.mrb[0].mxu0
        %v4809 = vpop.f32.mrb[0].mxu0
        %4810 = vdwg.mxu0
        %v4907 = vunpack.c.l.b16 %v3942
        %v4908 = vunpack.c.h.b16 %v3942
        %v4909 = vunpack.c.l.b16 %v3943
        %v4910 = vunpack.c.h.b16 %v3943
        %v4911 = vunpack.c.l.b16 %v3944
        %v4912 = vunpack.c.h.b16 %v3944
        %v4913 = vunpack.c.l.b16 %v3945
        %v4914 = vunpack.c.h.b16 %v3945
        %v4915 = vunpack.c.l.b16 %v3946
        %v4916 = vunpack.c.h.b16 %v3946
        %v4917 = vunpack.c.l.b16 %v3947
        %v4918 = vunpack.c.h.b16 %v3947
        %v4919 = vunpack.c.l.b16 %v3948
        %v4920 = vunpack.c.h.b16 %v3948
        %v4921 = vunpack.c.l.b16 %v3949
        %v4922 = vunpack.c.h.b16 %v3949
        %v4923 = vunpack.c.l.b16 %v3950
        %v4924 = vunpack.c.h.b16 %v3950
        %v4925 = vunpack.c.l.b16 %v3951
        %v4926 = vunpack.c.h.b16 %v3951
        %v4927 = vunpack.c.l.b16 %v3952
        %v4928 = vunpack.c.h.b16 %v3952
        %v4929 = vunpack.c.l.b16 %v3953
        %v4930 = vunpack.c.h.b16 %v3953
        %v4931 = vunpack.c.l.b16 %v3954
        %v4932 = vunpack.c.h.b16 %v3954
        %v4933 = vunpack.c.l.b16 %v3955
        %v4934 = vunpack.c.h.b16 %v3955
        %v4935 = vunpack.c.l.b16 %v3956
        %v4936 = vunpack.c.h.b16 %v3956
        %v4937 = vunpack.c.l.b16 %v3957
        %v4938 = vunpack.c.h.b16 %v3957
        %v4939 = vunpack.c.l.b16 %v3958
        %v4940 = vunpack.c.h.b16 %v3958
        %v4941 = vunpack.c.l.b16 %v3959
        %v4942 = vunpack.c.h.b16 %v3959
        %v4943 = vunpack.c.l.b16 %v3960
        %v4944 = vunpack.c.h.b16 %v3960
        %v4945 = vunpack.c.l.b16 %v3961
        %v4946 = vunpack.c.h.b16 %v3961
        %v4947 = vunpack.c.l.b16 %v3962
        %v4948 = vunpack.c.h.b16 %v3962
        %v4949 = vunpack.c.l.b16 %v3963
        %v4950 = vunpack.c.h.b16 %v3963
        %v4951 = vunpack.c.l.b16 %v3964
        %v4952 = vunpack.c.h.b16 %v3964
        %v4953 = vunpack.c.l.b16 %v3965
        %v4954 = vunpack.c.h.b16 %v3965
        %v4955 = vunpack.c.l.b16 %v3966
        %v4956 = vunpack.c.h.b16 %v3966
        %v4957 = vunpack.c.l.b16 %v3967
        %v4958 = vunpack.c.h.b16 %v3967
        %v4959 = vunpack.c.l.b16 %v3968
        %v4960 = vunpack.c.h.b16 %v3968
        %v4961 = vunpack.c.l.b16 %v3969
        %v4962 = vunpack.c.h.b16 %v3969
        %v4963 = vunpack.c.l.b16 %v3970
        %v4964 = vunpack.c.h.b16 %v3970
        %v4965 = vunpack.c.l.b16 %v3971
        %v4966 = vunpack.c.h.b16 %v3971
        %v4967 = vunpack.c.l.b16 %v3972
        %v4968 = vunpack.c.h.b16 %v3972
        %v4969 = vunpack.c.l.b16 %v3973
        %v4970 = vunpack.c.h.b16 %v3973
        %v4971 = vunpack.c.l.b16 %v3974
        %v4972 = vunpack.c.h.b16 %v3974
        %v4973 = vunpack.c.l.b16 %v3975
        %v4974 = vunpack.c.h.b16 %v3975
        %v4975 = vunpack.c.l.b16 %v3976
        %v4976 = vunpack.c.h.b16 %v3976
        %v4977 = vunpack.c.l.b16 %v3977
        %v4978 = vunpack.c.h.b16 %v3977
        %v4979 = vunpack.c.l.b16 %v3978
        %v4980 = vunpack.c.h.b16 %v3978
        %v4981 = vunpack.c.l.b16 %v3979
        %v4982 = vunpack.c.h.b16 %v3979
        %v4983 = vunpack.c.l.b16 %v3980
        %v4984 = vunpack.c.h.b16 %v3980
        %v4985 = vunpack.c.l.b16 %v3981
        %v4986 = vunpack.c.h.b16 %v3981
        %v4987 = vunpack.c.l.b16 %v3982
        %v4988 = vunpack.c.h.b16 %v3982
        %v4989 = vunpack.c.l.b16 %v3983
        %v4990 = vunpack.c.h.b16 %v3983
        %v4991 = vunpack.c.l.b16 %v3984
        %v4992 = vunpack.c.h.b16 %v3984
        %v4993 = vunpack.c.l.b16 %v3985
        %v4994 = vunpack.c.h.b16 %v3985
        %v4995 = vunpack.c.l.b16 %v3986
        %v4996 = vunpack.c.h.b16 %v3986
        %v4997 = vunpack.c.l.b16 %v3987
        %v4998 = vunpack.c.h.b16 %v3987
        %v4999 = vunpack.c.l.b16 %v3988
        %v5000 = vunpack.c.h.b16 %v3988
        %v5001 = vunpack.c.l.b16 %v3989
        %v5002 = vunpack.c.h.b16 %v3989
        %v5003 = vunpack.c.l.b16 %v3990
        %v5004 = vunpack.c.h.b16 %v3990
        %v5005 = vunpack.c.l.b16 %v3991
        %v5006 = vunpack.c.h.b16 %v3991
        %v5007 = vunpack.c.l.b16 %v3992
        %v5008 = vunpack.c.h.b16 %v3992
        %v5009 = vunpack.c.l.b16 %v3993
        %v5010 = vunpack.c.h.b16 %v3993
        %v5011 = vunpack.c.l.b16 %v3994
        %v5012 = vunpack.c.h.b16 %v3994
        %v5013 = vunpack.c.l.b16 %v3995
        %v5014 = vunpack.c.h.b16 %v3995
        %v5015 = vunpack.c.l.b16 %v3996
        %v5016 = vunpack.c.h.b16 %v3996
        %v5017 = vunpack.c.l.b16 %v3997
        %v5018 = vunpack.c.h.b16 %v3997
        %v5019 = vunpack.c.l.b16 %v3998
        %v5020 = vunpack.c.h.b16 %v3998
        %v5021 = vunpack.c.l.b16 %v3999
        %v5022 = vunpack.c.h.b16 %v3999
        %v5023 = vunpack.c.l.b16 %v4000
        %v5024 = vunpack.c.h.b16 %v4000
        %v5025 = vunpack.c.l.b16 %v4001
        %v5026 = vunpack.c.h.b16 %v4001
        %v5027 = vunpack.c.l.b16 %v4002
        %v5028 = vunpack.c.h.b16 %v4002
        %v5029 = vunpack.c.l.b16 %v4003
        %v5030 = vunpack.c.h.b16 %v4003
        %v5031 = vunpack.c.l.b16 %v4004
        %v5032 = vunpack.c.h.b16 %v4004
        %v5033 = vunpack.c.l.b16 %v4005
        %v5034 = vunpack.c.h.b16 %v4005
        %v5035 = vunpack.c.l.b16 %v4006
        %v5036 = vunpack.c.h.b16 %v4006
        %v5037 = vunpack.c.l.b16 %v4007
        %v5038 = vunpack.c.h.b16 %v4007
        %v5039 = vunpack.c.l.b16 %v4008
        %v5040 = vunpack.c.h.b16 %v4008
        %v5041 = vunpack.c.l.b16 %v4009
        %v5042 = vunpack.c.h.b16 %v4009
        %v5043 = vunpack.c.l.b16 %v4010
        %v5044 = vunpack.c.h.b16 %v4010
        %v5045 = vunpack.c.l.b16 %v4011
        %v5046 = vunpack.c.h.b16 %v4011
        %v5047 = vunpack.c.l.b16 %v4012
        %v5048 = vunpack.c.h.b16 %v4012
        %v5049 = vunpack.c.l.b16 %v4013
        %v5050 = vunpack.c.h.b16 %v4013
        %v5051 = vunpack.c.l.b16 %v4014
        %v5052 = vunpack.c.h.b16 %v4014
        %v5053 = vunpack.c.l.b16 %v4015
        %v5054 = vunpack.c.h.b16 %v4015
        %v5055 = vunpack.c.l.b16 %v4016
        %v5056 = vunpack.c.h.b16 %v4016
        %v5057 = vunpack.c.l.b16 %v4017
        %v5058 = vunpack.c.h.b16 %v4017
        %v5059 = vunpack.c.l.b16 %v4018
        %v5060 = vunpack.c.h.b16 %v4018
        %v5061 = vunpack.c.l.b16 %v4019
        %v5062 = vunpack.c.h.b16 %v4019
        %v5063 = vunpack.c.l.b16 %v4020
        %v5064 = vunpack.c.h.b16 %v4020
        %v5065 = vunpack.c.l.b16 %v4021
        %v5066 = vunpack.c.h.b16 %v4021
        %v5067 = vunpack.c.l.b16 %v4022
        %v5068 = vunpack.c.h.b16 %v4022
        %v5069 = vunpack.c.l.b16 %v4023
        %v5070 = vunpack.c.h.b16 %v4023
        %v5071 = vunpack.c.l.b16 %v4024
        %v5072 = vunpack.c.h.b16 %v4024
        %v5073 = vunpack.c.l.b16 %v4025
        %v5074 = vunpack.c.h.b16 %v4025
        %v5075 = vunpack.c.l.b16 %v4026
        %v5076 = vunpack.c.h.b16 %v4026
        %v5077 = vunpack.c.l.b16 %v4027
        %v5078 = vunpack.c.h.b16 %v4027
        %v5079 = vunpack.c.l.b16 %v4028
        %v5080 = vunpack.c.h.b16 %v4028
        %v5081 = vunpack.c.l.b16 %v4029
        %v5082 = vunpack.c.h.b16 %v4029
        %v5083 = vunpack.c.l.b16 %v4030
        %v5084 = vunpack.c.h.b16 %v4030
        %v5085 = vunpack.c.l.b16 %v4031
        %v5086 = vunpack.c.h.b16 %v4031
        %v5087 = vunpack.c.l.b16 %v4032
        %v5088 = vunpack.c.h.b16 %v4032
        %v5089 = vunpack.c.l.b16 %v4033
        %v5090 = vunpack.c.h.b16 %v4033
        %v5091 = vunpack.c.l.b16 %v4034
        %v5092 = vunpack.c.h.b16 %v4034
        %v5093 = vunpack.c.l.b16 %v4035
        %v5094 = vunpack.c.h.b16 %v4035
        %v5095 = vunpack.c.l.b16 %v4036
        %v5096 = vunpack.c.h.b16 %v4036
        %v5097 = vunpack.c.l.b16 %v4037
        %v5098 = vunpack.c.h.b16 %v4037
        %v5099 = vpack.c.b16 %v4911, %v4907
        %v5100 = vpack.c.b16 %v4912, %v4908
        %v5101 = vpack.c.b16 %v4913, %v4909
        %v5102 = vpack.c.b16 %v4914, %v4910
        %v5103 = vpack.c.b16 %v4919, %v4915
        %v5104 = vpack.c.b16 %v4920, %v4916
        %v5105 = vpack.c.b16 %v4921, %v4917
        %v5106 = vpack.c.b16 %v4922, %v4918
        %v5107 = vpack.c.b16 %v4927, %v4923
        %v5108 = vpack.c.b16 %v4928, %v4924
        %v5109 = vpack.c.b16 %v4929, %v4925
        %v5110 = vpack.c.b16 %v4930, %v4926
        %v5111 = vpack.c.b16 %v4935, %v4931
        %v5112 = vpack.c.b16 %v4936, %v4932
        %v5113 = vpack.c.b16 %v4937, %v4933
        %v5114 = vpack.c.b16 %v4938, %v4934
        %v5115 = vpack.c.b16 %v4943, %v4939
        %v5116 = vpack.c.b16 %v4944, %v4940
        %v5117 = vpack.c.b16 %v4945, %v4941
        %v5118 = vpack.c.b16 %v4946, %v4942
        %v5119 = vpack.c.b16 %v4951, %v4947
        %v5120 = vpack.c.b16 %v4952, %v4948
        %v5121 = vpack.c.b16 %v4953, %v4949
        %v5122 = vpack.c.b16 %v4954, %v4950
        %v5123 = vpack.c.b16 %v4959, %v4955
        %v5124 = vpack.c.b16 %v4960, %v4956
        %v5125 = vpack.c.b16 %v4961, %v4957
        %v5126 = vpack.c.b16 %v4962, %v4958
        %v5127 = vpack.c.b16 %v4967, %v4963
        %v5128 = vpack.c.b16 %v4968, %v4964
        %v5129 = vpack.c.b16 %v4969, %v4965
        %v5130 = vpack.c.b16 %v4970, %v4966
        %v5131 = vpack.c.b16 %v4975, %v4971
        %v5132 = vpack.c.b16 %v4976, %v4972
        %v5133 = vpack.c.b16 %v4977, %v4973
        %v5134 = vpack.c.b16 %v4978, %v4974
        %v5135 = vpack.c.b16 %v4983, %v4979
        %v5136 = vpack.c.b16 %v4984, %v4980
        %v5137 = vpack.c.b16 %v4985, %v4981
        %v5138 = vpack.c.b16 %v4986, %v4982
        %v5139 = vpack.c.b16 %v4991, %v4987
        %v5140 = vpack.c.b16 %v4992, %v4988
        %v5141 = vpack.c.b16 %v4993, %v4989
        %v5142 = vpack.c.b16 %v4994, %v4990
        %v5143 = vpack.c.b16 %v4999, %v4995
        %v5144 = vpack.c.b16 %v5000, %v4996
        %v5145 = vpack.c.b16 %v5001, %v4997
        %v5146 = vpack.c.b16 %v5002, %v4998
        %v5147 = vpack.c.b16 %v5007, %v5003
        %v5148 = vpack.c.b16 %v5008, %v5004
        %v5149 = vpack.c.b16 %v5009, %v5005
        %v5150 = vpack.c.b16 %v5010, %v5006
        %v5151 = vpack.c.b16 %v5015, %v5011
        %v5152 = vpack.c.b16 %v5016, %v5012
        %v5153 = vpack.c.b16 %v5017, %v5013
        %v5154 = vpack.c.b16 %v5018, %v5014
        %v5155 = vpack.c.b16 %v5023, %v5019
        %v5156 = vpack.c.b16 %v5024, %v5020
        %v5157 = vpack.c.b16 %v5025, %v5021
        %v5158 = vpack.c.b16 %v5026, %v5022
        %v5159 = vpack.c.b16 %v5031, %v5027
        %v5160 = vpack.c.b16 %v5032, %v5028
        %v5161 = vpack.c.b16 %v5033, %v5029
        %v5162 = vpack.c.b16 %v5034, %v5030
        %v5163 = vpack.c.b16 %v5039, %v5035
        %v5164 = vpack.c.b16 %v5040, %v5036
        %v5165 = vpack.c.b16 %v5041, %v5037
        %v5166 = vpack.c.b16 %v5042, %v5038
        %v5167 = vpack.c.b16 %v5047, %v5043
        %v5168 = vpack.c.b16 %v5048, %v5044
        %v5169 = vpack.c.b16 %v5049, %v5045
        %v5170 = vpack.c.b16 %v5050, %v5046
        %v5171 = vpack.c.b16 %v5055, %v5051
        %v5172 = vpack.c.b16 %v5056, %v5052
        %v5173 = vpack.c.b16 %v5057, %v5053
        %v5174 = vpack.c.b16 %v5058, %v5054
        %v5175 = vpack.c.b16 %v5063, %v5059
        %v5176 = vpack.c.b16 %v5064, %v5060
        %v5177 = vpack.c.b16 %v5065, %v5061
        %v5178 = vpack.c.b16 %v5066, %v5062
        %v5179 = vpack.c.b16 %v5071, %v5067
        %v5180 = vpack.c.b16 %v5072, %v5068
        %v5181 = vpack.c.b16 %v5073, %v5069
        %v5182 = vpack.c.b16 %v5074, %v5070
        %v5183 = vpack.c.b16 %v5079, %v5075
        %v5184 = vpack.c.b16 %v5080, %v5076
        %v5185 = vpack.c.b16 %v5081, %v5077
        %v5186 = vpack.c.b16 %v5082, %v5078
        %v5187 = vpack.c.b16 %v5087, %v5083
        %v5188 = vpack.c.b16 %v5088, %v5084
        %v5189 = vpack.c.b16 %v5089, %v5085
        %v5190 = vpack.c.b16 %v5090, %v5086
        %v5191 = vpack.c.b16 %v5095, %v5091
        %v5192 = vpack.c.b16 %v5096, %v5092
        %v5193 = vpack.c.b16 %v5097, %v5093
        %v5194 = vpack.c.b16 %v5098, %v5094
        %5291 = vmatprep.subr.bf16.mxu0 %v5100
        %5292 = vmatpush1.bf16.msra.mxu0 %v5099
        %5293 = vmatprep.subr.bf16.mxu0 %v5104
        %5294 = vmatpush1.bf16.msra.mxu0 %v5103
        %5295 = vmatprep.subr.bf16.mxu0 %v5108
        %5296 = vmatpush1.bf16.msra.mxu0 %v5107
        %5297 = vmatprep.subr.bf16.mxu0 %v5112
        %5298 = vmatpush1.bf16.msra.mxu0 %v5111
        %5299 = vmatprep.subr.bf16.mxu0 %v5116
        %5300 = vmatpush1.bf16.msra.mxu0 %v5115
        %5301 = vmatprep.subr.bf16.mxu0 %v5120
        %5302 = vmatpush1.bf16.msra.mxu0 %v5119
        %5303 = vmatprep.subr.bf16.mxu0 %v5124
        %5304 = vmatpush1.bf16.msra.mxu0 %v5123
        %5305 = vmatprep.subr.bf16.mxu0 %v5128
        %5306 = vmatpush1.bf16.msra.mxu0 %v5127
        %5307 = vmatprep.subr.bf16.mxu0 %v5132
        %5308 = vmatpush1.bf16.msra.mxu0 %v5131
        %5309 = vmatprep.subr.bf16.mxu0 %v5136
        %5310 = vmatpush1.bf16.msra.mxu0 %v5135
        %5311 = vmatprep.subr.bf16.mxu0 %v5140
        %5312 = vmatpush1.bf16.msra.mxu0 %v5139
        %5313 = vmatprep.subr.bf16.mxu0 %v5144
        %5314 = vmatpush1.bf16.msra.mxu0 %v5143
        %5315 = vmatprep.subr.bf16.mxu0 %v5148
        %5316 = vmatpush1.bf16.msra.mxu0 %v5147
        %5317 = vmatprep.subr.bf16.mxu0 %v5152
        %5318 = vmatpush1.bf16.msra.mxu0 %v5151
        %5319 = vmatprep.subr.bf16.mxu0 %v5156
        %5320 = vmatpush1.bf16.msra.mxu0 %v5155
        %5321 = vmatprep.subr.bf16.mxu0 %v5160
        %5322 = vmatpush1.bf16.msra.mxu0 %v5159
        %5323 = vmatprep.mubr.bf16.mxu0 %v3940
        %5324 = vmatmul.mubr.bf16.gmra.mrb[0].mxu0 %v3939
        %v5325 = vpop.f32.mrb[0].mxu0
        %v5326 = vadd.f32 %v4723, %v5325
        %v5327 = vpop.f32.mrb[0].mxu0
        %v5328 = vadd.f32 %v4725, %v5327
        %v5329 = vpop.f32.mrb[0].mxu0
        %v5330 = vpop.f32.mrb[0].mxu0
        %5331 = vdwg.mxu0
        %5332 = vmatprep.subr.bf16.mxu0 %v5164
        %5333 = vmatpush1.bf16.msra.mxu0 %v5163
        %5334 = vmatprep.subr.bf16.mxu0 %v5168
        %5335 = vmatpush1.bf16.msra.mxu0 %v5167
        %5336 = vmatprep.subr.bf16.mxu0 %v5172
        %5337 = vmatpush1.bf16.msra.mxu0 %v5171
        %5338 = vmatprep.subr.bf16.mxu0 %v5176
        %5339 = vmatpush1.bf16.msra.mxu0 %v5175
        %5340 = vmatprep.subr.bf16.mxu0 %v5180
        %5341 = vmatpush1.bf16.msra.mxu0 %v5179
        %5342 = vmatprep.subr.bf16.mxu0 %v5184
        %5343 = vmatpush1.bf16.msra.mxu0 %v5183
        %5344 = vmatprep.subr.bf16.mxu0 %v5188
        %5345 = vmatpush1.bf16.msra.mxu0 %v5187
        %5346 = vmatprep.subr.bf16.mxu0 %v5192
        %5347 = vmatpush1.bf16.msra.mxu0 %v5191
        %5348 = vmatprep.subr.bf16.mxu0 0
        %5349 = vmatpush1.bf16.msra.mxu0 0
        %5350 = vmatprep.subr.bf16.mxu0 0
        %5351 = vmatpush1.bf16.msra.mxu0 0
        %5352 = vmatprep.subr.bf16.mxu0 0
        %5353 = vmatpush1.bf16.msra.mxu0 0
        %5354 = vmatprep.subr.bf16.mxu0 0
        %5355 = vmatpush1.bf16.msra.mxu0 0
        %5356 = vmatprep.subr.bf16.mxu0 0
        %5357 = vmatpush1.bf16.msra.mxu0 0
        %5358 = vmatprep.subr.bf16.mxu0 0
        %5359 = vmatpush1.bf16.msra.mxu0 0
        %5360 = vmatprep.subr.bf16.mxu0 0
        %5361 = vmatpush1.bf16.msra.mxu0 0
        %5362 = vmatprep.subr.bf16.mxu0 0
        %5363 = vmatpush1.bf16.msra.mxu0 0
        %5364 = vmatprep.mubr.bf16.mxu0 0
        %5365 = vmatmul.mubr.bf16.gmra.mrb[0].mxu0 %v3941
        %v5366 = vpop.f32.mrb[0].mxu0
        %v5367 = vadd.f32 %v5326, %v5366
        %v5368 = vpop.f32.mrb[0].mxu0
        %v5369 = vadd.f32 %v5328, %v5368
        %v5370 = vpop.f32.mrb[0].mxu0
        %v5371 = vpop.f32.mrb[0].mxu0
        %5372 = vdwg.mxu0
        %5373 = vmatprep.subr.bf16.mxu0 %v5102
        %5374 = vmatpush1.bf16.msra.mxu0 %v5101
        %5375 = vmatprep.subr.bf16.mxu0 %v5106
        %5376 = vmatpush1.bf16.msra.mxu0 %v5105
        %5377 = vmatprep.subr.bf16.mxu0 %v5110
        %5378 = vmatpush1.bf16.msra.mxu0 %v5109
        %5379 = vmatprep.subr.bf16.mxu0 %v5114
        %5380 = vmatpush1.bf16.msra.mxu0 %v5113
        %5381 = vmatprep.subr.bf16.mxu0 %v5118
        %5382 = vmatpush1.bf16.msra.mxu0 %v5117
        %5383 = vmatprep.subr.bf16.mxu0 %v5122
        %5384 = vmatpush1.bf16.msra.mxu0 %v5121
        %5385 = vmatprep.subr.bf16.mxu0 %v5126
        %5386 = vmatpush1.bf16.msra.mxu0 %v5125
        %5387 = vmatprep.subr.bf16.mxu0 %v5130
        %5388 = vmatpush1.bf16.msra.mxu0 %v5129
        %5389 = vmatprep.subr.bf16.mxu0 %v5134
        %5390 = vmatpush1.bf16.msra.mxu0 %v5133
        %5391 = vmatprep.subr.bf16.mxu0 %v5138
        %5392 = vmatpush1.bf16.msra.mxu0 %v5137
        %5393 = vmatprep.subr.bf16.mxu0 %v5142
        %5394 = vmatpush1.bf16.msra.mxu0 %v5141
        %5395 = vmatprep.subr.bf16.mxu0 %v5146
        %5396 = vmatpush1.bf16.msra.mxu0 %v5145
        %5397 = vmatprep.subr.bf16.mxu0 %v5150
        %5398 = vmatpush1.bf16.msra.mxu0 %v5149
        %5399 = vmatprep.subr.bf16.mxu0 %v5154
        %5400 = vmatpush1.bf16.msra.mxu0 %v5153
        %5401 = vmatprep.subr.bf16.mxu0 %v5158
        %5402 = vmatpush1.bf16.msra.mxu0 %v5157
        %5403 = vmatprep.subr.bf16.mxu0 %v5162
        %5404 = vmatpush1.bf16.msra.mxu0 %v5161
        %5405 = vmatprep.mubr.bf16.mxu0 %v3940
        %5406 = vmatmul.mubr.bf16.gmra.mrb[0].mxu0 %v3939
        %v5407 = vpop.f32.mrb[0].mxu0
        %v5408 = vadd.f32 %v4805, %v5407
        %v5409 = vpop.f32.mrb[0].mxu0
        %v5410 = vadd.f32 %v4807, %v5409
        %v5411 = vpop.f32.mrb[0].mxu0
        %v5412 = vpop.f32.mrb[0].mxu0
        %5413 = vdwg.mxu0
        %5414 = vmatprep.subr.bf16.mxu0 %v5166
        %5415 = vmatpush1.bf16.msra.mxu0 %v5165
        %5416 = vmatprep.subr.bf16.mxu0 %v5170
        %5417 = vmatpush1.bf16.msra.mxu0 %v5169
        %5418 = vmatprep.subr.bf16.mxu0 %v5174
        %5419 = vmatpush1.bf16.msra.mxu0 %v5173
        %5420 = vmatprep.subr.bf16.mxu0 %v5178
        %5421 = vmatpush1.bf16.msra.mxu0 %v5177
        %5422 = vmatprep.subr.bf16.mxu0 %v5182
        %5423 = vmatpush1.bf16.msra.mxu0 %v5181
        %5424 = vmatprep.subr.bf16.mxu0 %v5186
        %5425 = vmatpush1.bf16.msra.mxu0 %v5185
        %5426 = vmatprep.subr.bf16.mxu0 %v5190
        %5427 = vmatpush1.bf16.msra.mxu0 %v5189
        %5428 = vmatprep.subr.bf16.mxu0 %v5194
        %5429 = vmatpush1.bf16.msra.mxu0 %v5193
        %5430 = vmatprep.subr.bf16.mxu0 0
        %5431 = vmatpush1.bf16.msra.mxu0 0
        %5432 = vmatprep.subr.bf16.mxu0 0
        %5433 = vmatpush1.bf16.msra.mxu0 0
        %5434 = vmatprep.subr.bf16.mxu0 0
        %5435 = vmatpush1.bf16.msra.mxu0 0
        %5436 = vmatprep.subr.bf16.mxu0 0
        %5437 = vmatpush1.bf16.msra.mxu0 0
        %5438 = vmatprep.subr.bf16.mxu0 0
        %5439 = vmatpush1.bf16.msra.mxu0 0
        %5440 = vmatprep.subr.bf16.mxu0 0
        %5441 = vmatpush1.bf16.msra.mxu0 0
        %5442 = vmatprep.subr.bf16.mxu0 0
        %5443 = vmatpush1.bf16.msra.mxu0 0
        %5444 = vmatprep.subr.bf16.mxu0 0
        %5445 = vmatpush1.bf16.msra.mxu0 0
        %5446 = vmatprep.mubr.bf16.mxu0 0
        %5447 = vmatmul.mubr.bf16.gmra.mrb[0].mxu0 %v3941
        %v5448 = vpop.f32.mrb[0].mxu0
        %v5449 = vadd.f32 %v5408, %v5448
        %v5450 = vpop.f32.mrb[0].mxu0
        %v5451 = vadd.f32 %v5410, %v5450
        %v5452 = vpop.f32.mrb[0].mxu0
        %v5453 = vpop.f32.mrb[0].mxu0
        %5454 = vdwg.mxu0
        %v5455 = vld [vmem:[#allocation12] sm:$0xf]
        %v5457 = vlaneseq
        %v5458 = vshrl.u32 %v5457, 7
        %v5459 = vsub.s32 0, %v5458
        %v5460 = vrot.slane %v5455, %v5459
        %v5461 = vlaneseq
        %v5462 = vshrl.u32 %v5461, 7
        %v5463 = vsub.s32 1, %v5462
        %v5464 = vrot.slane %v5455, %v5463
        %v5465 = vlaneseq
        %v5466 = vshrl.u32 %v5465, 7
        %v5467 = vsub.s32 2, %v5466
        %v5468 = vrot.slane %v5455, %v5467
        %v5469 = vlaneseq
        %v5470 = vshrl.u32 %v5469, 7
        %v5471 = vsub.s32 3, %v5470
        %v5472 = vrot.slane %v5455, %v5471
        %v5477 = vadd.f32 %v5367, %v5460
        %v5478 = vadd.f32 %v5369, %v5464
        %v5479 = vadd.f32 %v5449, %v5468
        %v5480 = vadd.f32 %v5451, %v5472
        %v5481 = vmax.f32 %v5477, 0.0
        %v5482 = vmax.f32 %v5478, 0.0
        %v5483 = vmax.f32 %v5479, 0.0
        %v5484 = vmax.f32 %v5480, 0.0
        %v5485 = vmax.f32 %v5481, %v5482
        %v5486 = vmax.f32 %v5483, %v5484
        %v5487 = vmax.f32 %v5485, %v5486
        %5489 = vrot.lane.b32.xlu0 %v5487, 64
        %v5490 = vpop.permute.xlu0 %5489
        %v5492 = vadd.f32 %v5487, %v5490
        %v5493 = vrot.slane %v5487, 1
        %v5495 = vadd.f32 %v5492, %v5493
        %5496 = vrot.lane.b32.xlu0 %v5493, 64
        %v5497 = vpop.permute.xlu0 %5496
        %v5499 = vadd.f32 %v5495, %v5497
        %v5500 = vmul.f32 %v5499, 0.25
        %v5501 = vpack.c.bf16 %v5500, %v5500
        %v5502 = vld [vmem:[#allocation13] sm:$0xff]
        %v5503 = vld [vmem:[#allocation13 + $0x8] sm:$0xff]
        %v5504 = vld [vmem:[#allocation13 + $0x10] sm:$0xff]
        %v5505 = vld [vmem:[#allocation13 + $0x18] sm:$0xff]
        %v5506 = vld [vmem:[#allocation13 + $0x20] sm:$0xff]
        %v5507 = vld [vmem:[#allocation13 + $0x28] sm:$0xff]
        %v5508 = vld [vmem:[#allocation13 + $0x30] sm:$0xff]
        %v5509 = vld [vmem:[#allocation13 + $0x38] sm:$0xff]
        %v5510 = vld [vmem:[#allocation13 + $0x40] sm:$0xff]
        %v5511 = vld [vmem:[#allocation13 + $0x48] sm:$0xff]
        %v5512 = vld [vmem:[#allocation13 + $0x50] sm:$0xff]
        %v5513 = vld [vmem:[#allocation13 + $0x58] sm:$0xff]
        %v5514 = vld [vmem:[#allocation13 + $0x60] sm:$0xff]
        %v5515 = vld [vmem:[#allocation13 + $0x68] sm:$0xff]
        %v5516 = vld [vmem:[#allocation13 + $0x70] sm:$0xff]
        %v5517 = vld [vmem:[#allocation13 + $0x78] sm:$0xff]
        %v5518 = vld [vmem:[#allocation15] sm:$0xf]
        %v5535 = vunpack.c.l.b16 %v5502
        %v5536 = vunpack.c.h.b16 %v5502
        %v5537 = vunpack.c.l.b16 %v5503
        %v5538 = vunpack.c.h.b16 %v5503
        %v5539 = vunpack.c.l.b16 %v5504
        %v5540 = vunpack.c.h.b16 %v5504
        %v5541 = vunpack.c.l.b16 %v5505
        %v5542 = vunpack.c.h.b16 %v5505
        %v5543 = vunpack.c.l.b16 %v5506
        %v5544 = vunpack.c.h.b16 %v5506
        %v5545 = vunpack.c.l.b16 %v5507
        %v5546 = vunpack.c.h.b16 %v5507
        %v5547 = vunpack.c.l.b16 %v5508
        %v5548 = vunpack.c.h.b16 %v5508
        %v5549 = vunpack.c.l.b16 %v5509
        %v5550 = vunpack.c.h.b16 %v5509
        %v5551 = vunpack.c.l.b16 %v5510
        %v5552 = vunpack.c.h.b16 %v5510
        %v5553 = vunpack.c.l.b16 %v5511
        %v5554 = vunpack.c.h.b16 %v5511
        %v5555 = vunpack.c.l.b16 %v5512
        %v5556 = vunpack.c.h.b16 %v5512
        %v5557 = vunpack.c.l.b16 %v5513
        %v5558 = vunpack.c.h.b16 %v5513
        %v5559 = vunpack.c.l.b16 %v5514
        %v5560 = vunpack.c.h.b16 %v5514
        %v5561 = vunpack.c.l.b16 %v5515
        %v5562 = vunpack.c.h.b16 %v5515
        %v5563 = vunpack.c.l.b16 %v5516
        %v5564 = vunpack.c.h.b16 %v5516
        %v5565 = vunpack.c.l.b16 %v5517
        %v5566 = vunpack.c.h.b16 %v5517
        %v5567 = vpack.c.b16 %v5539, %v5535
        %v5568 = vpack.c.b16 %v5540, %v5536
        %v5569 = vpack.c.b16 %v5541, %v5537
        %v5570 = vpack.c.b16 %v5542, %v5538
        %v5571 = vpack.c.b16 %v5547, %v5543
        %v5572 = vpack.c.b16 %v5548, %v5544
        %v5573 = vpack.c.b16 %v5549, %v5545
        %v5574 = vpack.c.b16 %v5550, %v5546
        %v5575 = vpack.c.b16 %v5555, %v5551
        %v5576 = vpack.c.b16 %v5556, %v5552
        %v5577 = vpack.c.b16 %v5557, %v5553
        %v5578 = vpack.c.b16 %v5558, %v5554
        %v5579 = vpack.c.b16 %v5563, %v5559
        %v5580 = vpack.c.b16 %v5564, %v5560
        %v5581 = vpack.c.b16 %v5565, %v5561
        %v5582 = vpack.c.b16 %v5566, %v5562
        %v5600 = vlaneseq
        %v5601 = vshrl.u32 %v5600, 7
        %v5602 = vsub.s32 0, %v5601
        %v5603 = vrot.slane %v5518, %v5602
        %v5604 = vlaneseq
        %v5605 = vshrl.u32 %v5604, 7
        %v5606 = vsub.s32 1, %v5605
        %v5607 = vrot.slane %v5518, %v5606
        %v5608 = vlaneseq
        %v5609 = vshrl.u32 %v5608, 7
        %v5610 = vsub.s32 2, %v5609
        %v5611 = vrot.slane %v5518, %v5610
        %v5612 = vlaneseq
        %v5613 = vshrl.u32 %v5612, 7
        %v5614 = vsub.s32 3, %v5613
        %v5615 = vrot.slane %v5518, %v5614
        %vm5620 = vcmask 523264
        %v5622 = vsel %vm5620, %v5501, 0
        %5624 = vmatprep.subr.bf16.mxu0 %v5568
        %5625 = vmatpush1.bf16.msra.mxu0 %v5567
        %5626 = vmatprep.subr.bf16.mxu0 %v5572
        %5627 = vmatpush1.bf16.msra.mxu0 %v5571
        %5628 = vmatprep.subr.bf16.mxu0 %v5576
        %5629 = vmatpush1.bf16.msra.mxu0 %v5575
        %5630 = vmatprep.subr.bf16.mxu0 %v5580
        %5631 = vmatpush1.bf16.msra.mxu0 %v5579
        %5632 = vmatprep.subr.bf16.mxu0 0
        %5633 = vmatpush1.bf16.msra.mxu0 0
        %5634 = vmatprep.subr.bf16.mxu0 0
        %5635 = vmatpush1.bf16.msra.mxu0 0
        %5636 = vmatprep.subr.bf16.mxu0 0
        %5637 = vmatpush1.bf16.msra.mxu0 0
        %5638 = vmatprep.subr.bf16.mxu0 0
        %5639 = vmatpush1.bf16.msra.mxu0 0
        %5640 = vmatprep.subr.bf16.mxu0 0
        %5641 = vmatpush1.bf16.msra.mxu0 0
        %5642 = vmatprep.subr.bf16.mxu0 0
        %5643 = vmatpush1.bf16.msra.mxu0 0
        %5644 = vmatprep.subr.bf16.mxu0 0
        %5645 = vmatpush1.bf16.msra.mxu0 0
        %5646 = vmatprep.subr.bf16.mxu0 0
        %5647 = vmatpush1.bf16.msra.mxu0 0
        %5648 = vmatprep.subr.bf16.mxu0 0
        %5649 = vmatpush1.bf16.msra.mxu0 0
        %5650 = vmatprep.subr.bf16.mxu0 0
        %5651 = vmatpush1.bf16.msra.mxu0 0
        %5652 = vmatprep.subr.bf16.mxu0 0
        %5653 = vmatpush1.bf16.msra.mxu0 0
        %5654 = vmatprep.subr.bf16.mxu0 0
        %5655 = vmatpush1.bf16.msra.mxu0 0
        %5656 = vmatprep.mubr.bf16.mxu0 0
        %5657 = vmatmul.mubr.bf16.gmra.mrb[0].mxu0 %v5622
        %v5658 = vpop.f32.mrb[0].mxu0
        %v5659 = vadd.f32 %v5603, %v5658
        %v5660 = vpop.f32.mrb[0].mxu0
        %v5661 = vadd.f32 %v5607, %v5660
        %v5662 = vpop.f32.mrb[0].mxu0
        %v5663 = vpop.f32.mrb[0].mxu0
        %5664 = vdwg.mxu0
        %5665 = vmatprep.subr.bf16.mxu0 %v5570
        %5666 = vmatpush1.bf16.msra.mxu0 %v5569
        %5667 = vmatprep.subr.bf16.mxu0 %v5574
        %5668 = vmatpush1.bf16.msra.mxu0 %v5573
        %5669 = vmatprep.subr.bf16.mxu0 %v5578
        %5670 = vmatpush1.bf16.msra.mxu0 %v5577
        %5671 = vmatprep.subr.bf16.mxu0 %v5582
        %5672 = vmatpush1.bf16.msra.mxu0 %v5581
        %5673 = vmatprep.subr.bf16.mxu0 0
        %5674 = vmatpush1.bf16.msra.mxu0 0
        %5675 = vmatprep.subr.bf16.mxu0 0
        %5676 = vmatpush1.bf16.msra.mxu0 0
        %5677 = vmatprep.subr.bf16.mxu0 0
        %5678 = vmatpush1.bf16.msra.mxu0 0
        %5679 = vmatprep.subr.bf16.mxu0 0
        %5680 = vmatpush1.bf16.msra.mxu0 0
        %5681 = vmatprep.subr.bf16.mxu0 0
        %5682 = vmatpush1.bf16.msra.mxu0 0
        %5683 = vmatprep.subr.bf16.mxu0 0
        %5684 = vmatpush1.bf16.msra.mxu0 0
        %5685 = vmatprep.subr.bf16.mxu0 0
        %5686 = vmatpush1.bf16.msra.mxu0 0
        %5687 = vmatprep.subr.bf16.mxu0 0
        %5688 = vmatpush1.bf16.msra.mxu0 0
        %5689 = vmatprep.subr.bf16.mxu0 0
        %5690 = vmatpush1.bf16.msra.mxu0 0
        %5691 = vmatprep.subr.bf16.mxu0 0
        %5692 = vmatpush1.bf16.msra.mxu0 0
        %5693 = vmatprep.subr.bf16.mxu0 0
        %5694 = vmatpush1.bf16.msra.mxu0 0
        %5695 = vmatprep.subr.bf16.mxu0 0
        %5696 = vmatpush1.bf16.msra.mxu0 0
        %5697 = vmatprep.mubr.bf16.mxu0 0
        %5698 = vmatmul.mubr.bf16.gmra.mrb[0].mxu0 %v5622
        %v5699 = vpop.f32.mrb[0].mxu0
        %v5700 = vadd.f32 %v5611, %v5699
        %v5701 = vpop.f32.mrb[0].mxu0
        %v5702 = vadd.f32 %v5615, %v5701
        %v5703 = vpop.f32.mrb[0].mxu0
        %v5704 = vpop.f32.mrb[0].mxu0
        %5705 = vdwg.mxu0
        %v5706 = vmax.f32 %v5659, 0.0
        %v5707 = vmax.f32 %v5661, 0.0
        %v5708 = vmax.f32 %v5700, 0.0
        %v5709 = vmax.f32 %v5702, 0.0
        %v5710 = vpack.c.bf16 %v5706, %v5706
        %v5711 = vpack.c.bf16 %v5707, %v5707
        %v5712 = vpack.c.bf16 %v5708, %v5708
        %v5713 = vpack.c.bf16 %v5709, %v5709
        %v5714 = vld [vmem:[#allocation16] sm:$0xf]
        %v5715 = vld [vmem:[#allocation16 + $0x4] sm:$0xf]
        %v5716 = vld [vmem:[#allocation16 + $0x8] sm:$0xf]
        %v5717 = vld [vmem:[#allocation16 + $0xc] sm:$0xf]
        %v5718 = vld [vmem:[#allocation16 + $0x10] sm:$0xf]
        %v5719 = vld [vmem:[#allocation16 + $0x14] sm:$0xf]
        %v5720 = vld [vmem:[#allocation16 + $0x18] sm:$0xf]
        %v5721 = vld [vmem:[#allocation16 + $0x1c] sm:$0xf]
        %v5722 = vld [vmem:[#allocation16 + $0x20] sm:$0xf]
        %v5723 = vld [vmem:[#allocation16 + $0x24] sm:$0xf]
        %v5724 = vld [vmem:[#allocation16 + $0x28] sm:$0xf]
        %v5725 = vld [vmem:[#allocation16 + $0x2c] sm:$0xf]
        %v5726 = vld [vmem:[#allocation16 + $0x30] sm:$0xf]
        %v5727 = vld [vmem:[#allocation16 + $0x34] sm:$0xf]
        %v5728 = vld [vmem:[#allocation16 + $0x38] sm:$0xf]
        %v5729 = vld [vmem:[#allocation16 + $0x3c] sm:$0xf]
        %v5730 = vld [vmem:[#allocation16 + $0x40] sm:$0xf]
        %v5731 = vld [vmem:[#allocation16 + $0x44] sm:$0xf]
        %v5732 = vld [vmem:[#allocation16 + $0x48] sm:$0xf]
        %v5733 = vld [vmem:[#allocation16 + $0x4c] sm:$0xf]
        %v5734 = vld [vmem:[#allocation16 + $0x50] sm:$0xf]
        %v5735 = vld [vmem:[#allocation16 + $0x54] sm:$0xf]
        %v5736 = vld [vmem:[#allocation16 + $0x58] sm:$0xf]
        %v5737 = vld [vmem:[#allocation16 + $0x5c] sm:$0xf]
        %v5738 = vld [vmem:[#allocation16 + $0x60] sm:$0xf]
        %v5739 = vld [vmem:[#allocation16 + $0x64] sm:$0xf]
        %v5740 = vld [vmem:[#allocation16 + $0x68] sm:$0xf]
        %v5741 = vld [vmem:[#allocation16 + $0x6c] sm:$0xf]
        %v5742 = vld [vmem:[#allocation16 + $0x70] sm:$0xf]
        %v5743 = vld [vmem:[#allocation16 + $0x74] sm:$0xf]
        %v5744 = vld [vmem:[#allocation16 + $0x78] sm:$0xf]
        %v5745 = vld [vmem:[#allocation16 + $0x7c] sm:$0xf]
        %v5746 = vld [vmem:[#allocation16 + $0x80] sm:$0xf]
        %v5747 = vld [vmem:[#allocation16 + $0x84] sm:$0xf]
        %v5748 = vld [vmem:[#allocation16 + $0x88] sm:$0xf]
        %v5749 = vld [vmem:[#allocation16 + $0x8c] sm:$0xf]
        %v5750 = vld [vmem:[#allocation16 + $0x90] sm:$0xf]
        %v5751 = vld [vmem:[#allocation16 + $0x94] sm:$0xf]
        %v5752 = vld [vmem:[#allocation16 + $0x98] sm:$0xf]
        %v5753 = vld [vmem:[#allocation16 + $0x9c] sm:$0xf]
        %v5754 = vld [vmem:[#allocation16 + $0xa0] sm:$0xf]
        %v5755 = vld [vmem:[#allocation16 + $0xa4] sm:$0xf]
        %v5756 = vld [vmem:[#allocation16 + $0xa8] sm:$0xf]
        %v5757 = vld [vmem:[#allocation16 + $0xac] sm:$0xf]
        %v5758 = vld [vmem:[#allocation16 + $0xb0] sm:$0xf]
        %v5759 = vld [vmem:[#allocation16 + $0xb4] sm:$0xf]
        %v5760 = vld [vmem:[#allocation16 + $0xb8] sm:$0xf]
        %v5761 = vld [vmem:[#allocation16 + $0xbc] sm:$0xf]
        %v5762 = vld [vmem:[#allocation16 + $0xc0] sm:$0xf]
        %v5763 = vld [vmem:[#allocation16 + $0xc4] sm:$0xf]
        %v5764 = vld [vmem:[#allocation16 + $0xc8] sm:$0xf]
        %v5765 = vld [vmem:[#allocation16 + $0xcc] sm:$0xf]
        %v5766 = vld [vmem:[#allocation16 + $0xd0] sm:$0xf]
        %v5767 = vld [vmem:[#allocation16 + $0xd4] sm:$0xf]
        %v5768 = vld [vmem:[#allocation16 + $0xd8] sm:$0xf]
        %v5769 = vld [vmem:[#allocation16 + $0xdc] sm:$0xf]
        %v5770 = vld [vmem:[#allocation16 + $0xe0] sm:$0xf]
        %v5771 = vld [vmem:[#allocation16 + $0xe4] sm:$0xf]
        %v5772 = vld [vmem:[#allocation16 + $0xe8] sm:$0xf]
        %v5773 = vld [vmem:[#allocation16 + $0xec] sm:$0xf]
        %v5774 = vld [vmem:[#allocation16 + $0xf0] sm:$0xf]
        %v5775 = vld [vmem:[#allocation16 + $0xf4] sm:$0xf]
        %v5776 = vld [vmem:[#allocation16 + $0xf8] sm:$0xf]
        %v5777 = vld [vmem:[#allocation16 + $0xfc] sm:$0xf]
        %v5778 = vld [vmem:[#allocation18] sm:$0x1]
        %v5843 = vunpack.c.l.b16 %v5714
        %v5844 = vunpack.c.l.b16 %v5715
        %v5845 = vunpack.c.l.b16 %v5716
        %v5846 = vunpack.c.l.b16 %v5717
        %v5847 = vunpack.c.l.b16 %v5718
        %v5848 = vunpack.c.l.b16 %v5719
        %v5849 = vunpack.c.l.b16 %v5720
        %v5850 = vunpack.c.l.b16 %v5721
        %v5851 = vunpack.c.l.b16 %v5722
        %v5852 = vunpack.c.l.b16 %v5723
        %v5853 = vunpack.c.l.b16 %v5724
        %v5854 = vunpack.c.l.b16 %v5725
        %v5855 = vunpack.c.l.b16 %v5726
        %v5856 = vunpack.c.l.b16 %v5727
        %v5857 = vunpack.c.l.b16 %v5728
        %v5858 = vunpack.c.l.b16 %v5729
        %v5859 = vunpack.c.l.b16 %v5730
        %v5860 = vunpack.c.l.b16 %v5731
        %v5861 = vunpack.c.l.b16 %v5732
        %v5862 = vunpack.c.l.b16 %v5733
        %v5863 = vunpack.c.l.b16 %v5734
        %v5864 = vunpack.c.l.b16 %v5735
        %v5865 = vunpack.c.l.b16 %v5736
        %v5866 = vunpack.c.l.b16 %v5737
        %v5867 = vunpack.c.l.b16 %v5738
        %v5868 = vunpack.c.l.b16 %v5739
        %v5869 = vunpack.c.l.b16 %v5740
        %v5870 = vunpack.c.l.b16 %v5741
        %v5871 = vunpack.c.l.b16 %v5742
        %v5872 = vunpack.c.l.b16 %v5743
        %v5873 = vunpack.c.l.b16 %v5744
        %v5874 = vunpack.c.l.b16 %v5745
        %v5875 = vunpack.c.l.b16 %v5746
        %v5876 = vunpack.c.l.b16 %v5747
        %v5877 = vunpack.c.l.b16 %v5748
        %v5878 = vunpack.c.l.b16 %v5749
        %v5879 = vunpack.c.l.b16 %v5750
        %v5880 = vunpack.c.l.b16 %v5751
        %v5881 = vunpack.c.l.b16 %v5752
        %v5882 = vunpack.c.l.b16 %v5753
        %v5883 = vunpack.c.l.b16 %v5754
        %v5884 = vunpack.c.l.b16 %v5755
        %v5885 = vunpack.c.l.b16 %v5756
        %v5886 = vunpack.c.l.b16 %v5757
        %v5887 = vunpack.c.l.b16 %v5758
        %v5888 = vunpack.c.l.b16 %v5759
        %v5889 = vunpack.c.l.b16 %v5760
        %v5890 = vunpack.c.l.b16 %v5761
        %v5891 = vunpack.c.l.b16 %v5762
        %v5892 = vunpack.c.l.b16 %v5763
        %v5893 = vunpack.c.l.b16 %v5764
        %v5894 = vunpack.c.l.b16 %v5765
        %v5895 = vunpack.c.l.b16 %v5766
        %v5896 = vunpack.c.l.b16 %v5767
        %v5897 = vunpack.c.l.b16 %v5768
        %v5898 = vunpack.c.l.b16 %v5769
        %v5899 = vunpack.c.l.b16 %v5770
        %v5900 = vunpack.c.l.b16 %v5771
        %v5901 = vunpack.c.l.b16 %v5772
        %v5902 = vunpack.c.l.b16 %v5773
        %v5903 = vunpack.c.l.b16 %v5774
        %v5904 = vunpack.c.l.b16 %v5775
        %v5905 = vunpack.c.l.b16 %v5776
        %v5906 = vunpack.c.l.b16 %v5777
        %v5907 = vpack.c.b16 %v5844, %v5843
        %v5908 = vpack.c.b16 %v5846, %v5845
        %v5909 = vpack.c.b16 %v5848, %v5847
        %v5910 = vpack.c.b16 %v5850, %v5849
        %v5911 = vpack.c.b16 %v5852, %v5851
        %v5912 = vpack.c.b16 %v5854, %v5853
        %v5913 = vpack.c.b16 %v5856, %v5855
        %v5914 = vpack.c.b16 %v5858, %v5857
        %v5915 = vpack.c.b16 %v5860, %v5859
        %v5916 = vpack.c.b16 %v5862, %v5861
        %v5917 = vpack.c.b16 %v5864, %v5863
        %v5918 = vpack.c.b16 %v5866, %v5865
        %v5919 = vpack.c.b16 %v5868, %v5867
        %v5920 = vpack.c.b16 %v5870, %v5869
        %v5921 = vpack.c.b16 %v5872, %v5871
        %v5922 = vpack.c.b16 %v5874, %v5873
        %v5923 = vpack.c.b16 %v5876, %v5875
        %v5924 = vpack.c.b16 %v5878, %v5877
        %v5925 = vpack.c.b16 %v5880, %v5879
        %v5926 = vpack.c.b16 %v5882, %v5881
        %v5927 = vpack.c.b16 %v5884, %v5883
        %v5928 = vpack.c.b16 %v5886, %v5885
        %v5929 = vpack.c.b16 %v5888, %v5887
        %v5930 = vpack.c.b16 %v5890, %v5889
        %v5931 = vpack.c.b16 %v5892, %v5891
        %v5932 = vpack.c.b16 %v5894, %v5893
        %v5933 = vpack.c.b16 %v5896, %v5895
        %v5934 = vpack.c.b16 %v5898, %v5897
        %v5935 = vpack.c.b16 %v5900, %v5899
        %v5936 = vpack.c.b16 %v5902, %v5901
        %v5937 = vpack.c.b16 %v5904, %v5903
        %v5938 = vpack.c.b16 %v5906, %v5905
        %5971 = vmatprep.subr.bf16.mxu0 0
        %5972 = vmatpush1.bf16.msra.mxu0 %v5907
        %5973 = vmatprep.subr.bf16.mxu0 0
        %5974 = vmatpush1.bf16.msra.mxu0 %v5908
        %5975 = vmatprep.subr.bf16.mxu0 0
        %5976 = vmatpush1.bf16.msra.mxu0 %v5909
        %5977 = vmatprep.subr.bf16.mxu0 0
        %5978 = vmatpush1.bf16.msra.mxu0 %v5910
        %5979 = vmatprep.subr.bf16.mxu0 0
        %5980 = vmatpush1.bf16.msra.mxu0 %v5911
        %5981 = vmatprep.subr.bf16.mxu0 0
        %5982 = vmatpush1.bf16.msra.mxu0 %v5912
        %5983 = vmatprep.subr.bf16.mxu0 0
        %5984 = vmatpush1.bf16.msra.mxu0 %v5913
        %5985 = vmatprep.subr.bf16.mxu0 0
        %5986 = vmatpush1.bf16.msra.mxu0 %v5914
        %5987 = vmatprep.subr.bf16.mxu0 0
        %5988 = vmatpush1.bf16.msra.mxu0 %v5915
        %5989 = vmatprep.subr.bf16.mxu0 0
        %5990 = vmatpush1.bf16.msra.mxu0 %v5916
        %5991 = vmatprep.subr.bf16.mxu0 0
        %5992 = vmatpush1.bf16.msra.mxu0 %v5917
        %5993 = vmatprep.subr.bf16.mxu0 0
        %5994 = vmatpush1.bf16.msra.mxu0 %v5918
        %5995 = vmatprep.subr.bf16.mxu0 0
        %5996 = vmatpush1.bf16.msra.mxu0 %v5919
        %5997 = vmatprep.subr.bf16.mxu0 0
        %5998 = vmatpush1.bf16.msra.mxu0 %v5920
        %5999 = vmatprep.subr.bf16.mxu0 0
        %6000 = vmatpush1.bf16.msra.mxu0 %v5921
        %6001 = vmatprep.subr.bf16.mxu0 0
        %6002 = vmatpush1.bf16.msra.mxu0 %v5922
        %6003 = vmatprep.mubr.bf16.mxu0 %v5711
        %6004 = vmatmul.mubr.bf16.gmra.mrb[0].mxu0 %v5710
        %v6005 = vpop.f32.mrb[0].mxu0
        %v6006 = vadd.f32 %v5778, %v6005
        %v6007 = vpop.f32.mrb[0].mxu0
        %v6008 = vpop.f32.mrb[0].mxu0
        %v6009 = vpop.f32.mrb[0].mxu0
        %6010 = vdwg.mxu0
        %6011 = vmatprep.subr.bf16.mxu0 0
        %6012 = vmatpush1.bf16.msra.mxu0 %v5923
        %6013 = vmatprep.subr.bf16.mxu0 0
        %6014 = vmatpush1.bf16.msra.mxu0 %v5924
        %6015 = vmatprep.subr.bf16.mxu0 0
        %6016 = vmatpush1.bf16.msra.mxu0 %v5925
        %6017 = vmatprep.subr.bf16.mxu0 0
        %6018 = vmatpush1.bf16.msra.mxu0 %v5926
        %6019 = vmatprep.subr.bf16.mxu0 0
        %6020 = vmatpush1.bf16.msra.mxu0 %v5927
        %6021 = vmatprep.subr.bf16.mxu0 0
        %6022 = vmatpush1.bf16.msra.mxu0 %v5928
        %6023 = vmatprep.subr.bf16.mxu0 0
        %6024 = vmatpush1.bf16.msra.mxu0 %v5929
        %6025 = vmatprep.subr.bf16.mxu0 0
        %6026 = vmatpush1.bf16.msra.mxu0 %v5930
        %6027 = vmatprep.subr.bf16.mxu0 0
        %6028 = vmatpush1.bf16.msra.mxu0 %v5931
        %6029 = vmatprep.subr.bf16.mxu0 0
        %6030 = vmatpush1.bf16.msra.mxu0 %v5932
        %6031 = vmatprep.subr.bf16.mxu0 0
        %6032 = vmatpush1.bf16.msra.mxu0 %v5933
        %6033 = vmatprep.subr.bf16.mxu0 0
        %6034 = vmatpush1.bf16.msra.mxu0 %v5934
        %6035 = vmatprep.subr.bf16.mxu0 0
        %6036 = vmatpush1.bf16.msra.mxu0 %v5935
        %6037 = vmatprep.subr.bf16.mxu0 0
        %6038 = vmatpush1.bf16.msra.mxu0 %v5936
        %6039 = vmatprep.subr.bf16.mxu0 0
        %6040 = vmatpush1.bf16.msra.mxu0 %v5937
        %6041 = vmatprep.subr.bf16.mxu0 0
        %6042 = vmatpush1.bf16.msra.mxu0 %v5938
        %6043 = vmatprep.mubr.bf16.mxu0 %v5713
        %6044 = vmatmul.mubr.bf16.gmra.mrb[0].mxu0 %v5712
        %v6045 = vpop.f32.mrb[0].mxu0
        %v6046 = vadd.f32 %v6006, %v6045
        %v6047 = vpop.f32.mrb[0].mxu0
        %v6048 = vpop.f32.mrb[0].mxu0
        %v6049 = vpop.f32.mrb[0].mxu0
        %6050 = vdwg.mxu0
        %v6051 = vmax.f32 %v6046, 0.0
        %v6052 = vpack.c.bf16 %v6051, %v6051
        %v6053 = vld [vmem:[%s11] sm:$0xf]
        %v6054 = vld [vmem:[%s11 + $0x4] sm:$0xf]
        %v6055 = vld [vmem:[%s11 + $0x8] sm:$0xf]
        %v6056 = vld [vmem:[%s11 + $0xc] sm:$0xf]
        %v6057 = vld [vmem:[%s11 + $0x10] sm:$0xf]
        %v6058 = vld [vmem:[%s11 + $0x14] sm:$0xf]
        %v6059 = vld [vmem:[%s11 + $0x18] sm:$0xf]
        %v6060 = vld [vmem:[%s11 + $0x1c] sm:$0xf]
        %v6061 = vld [vmem:[%s11 + $0x20] sm:$0xf]
        %v6062 = vld [vmem:[%s11 + $0x24] sm:$0xf]
        %v6063 = vld [vmem:[%s11 + $0x28] sm:$0xf]
        %v6064 = vld [vmem:[%s11 + $0x2c] sm:$0xf]
        %v6065 = vld [vmem:[%s11 + $0x30] sm:$0xf]
        %v6066 = vld [vmem:[%s11 + $0x34] sm:$0xf]
        %v6067 = vld [vmem:[%s11 + $0x38] sm:$0xf]
        %v6068 = vld [vmem:[%s11 + $0x3c] sm:$0xf]
        %v6069 = vld [vmem:[#allocation19] sm:$0x1]
        %v6086 = vunpack.c.l.b16 %v6053
        %v6087 = vunpack.c.l.b16 %v6054
        %v6088 = vunpack.c.l.b16 %v6055
        %v6089 = vunpack.c.l.b16 %v6056
        %v6090 = vunpack.c.l.b16 %v6057
        %v6091 = vunpack.c.l.b16 %v6058
        %v6092 = vunpack.c.l.b16 %v6059
        %v6093 = vunpack.c.l.b16 %v6060
        %v6094 = vunpack.c.l.b16 %v6061
        %v6095 = vunpack.c.l.b16 %v6062
        %v6096 = vunpack.c.l.b16 %v6063
        %v6097 = vunpack.c.l.b16 %v6064
        %v6098 = vunpack.c.l.b16 %v6065
        %v6099 = vunpack.c.l.b16 %v6066
        %v6100 = vunpack.c.l.b16 %v6067
        %v6101 = vunpack.c.l.b16 %v6068
        %v6102 = vpack.c.b16 %v6087, %v6086
        %v6103 = vpack.c.b16 %v6089, %v6088
        %v6104 = vpack.c.b16 %v6091, %v6090
        %v6105 = vpack.c.b16 %v6093, %v6092
        %v6106 = vpack.c.b16 %v6095, %v6094
        %v6107 = vpack.c.b16 %v6097, %v6096
        %v6108 = vpack.c.b16 %v6099, %v6098
        %v6109 = vpack.c.b16 %v6101, %v6100
        %6118 = vmatprep.subr.bf16.mxu0 0
        %6119 = vmatpush1.bf16.msra.mxu0 %v6102
        %6120 = vmatprep.subr.bf16.mxu0 0
        %6121 = vmatpush1.bf16.msra.mxu0 %v6103
        %6122 = vmatprep.subr.bf16.mxu0 0
        %6123 = vmatpush1.bf16.msra.mxu0 %v6104
        %6124 = vmatprep.subr.bf16.mxu0 0
        %6125 = vmatpush1.bf16.msra.mxu0 %v6105
        %6126 = vmatprep.subr.bf16.mxu0 0
        %6127 = vmatpush1.bf16.msra.mxu0 %v6106
        %6128 = vmatprep.subr.bf16.mxu0 0
        %6129 = vmatpush1.bf16.msra.mxu0 %v6107
        %6130 = vmatprep.subr.bf16.mxu0 0
        %6131 = vmatpush1.bf16.msra.mxu0 %v6108
        %6132 = vmatprep.subr.bf16.mxu0 0
        %6133 = vmatpush1.bf16.msra.mxu0 %v6109
        %6134 = vmatprep.subr.bf16.mxu0 0
        %6135 = vmatpush1.bf16.msra.mxu0 0
        %6136 = vmatprep.subr.bf16.mxu0 0
        %6137 = vmatpush1.bf16.msra.mxu0 0
        %6138 = vmatprep.subr.bf16.mxu0 0
        %6139 = vmatpush1.bf16.msra.mxu0 0
        %6140 = vmatprep.subr.bf16.mxu0 0
        %6141 = vmatpush1.bf16.msra.mxu0 0
        %6142 = vmatprep.subr.bf16.mxu0 0
        %6143 = vmatpush1.bf16.msra.mxu0 0
        %6144 = vmatprep.subr.bf16.mxu0 0
        %6145 = vmatpush1.bf16.msra.mxu0 0
        %6146 = vmatprep.subr.bf16.mxu0 0
        %6147 = vmatpush1.bf16.msra.mxu0 0
        %6148 = vmatprep.subr.bf16.mxu0 0
        %6149 = vmatpush1.bf16.msra.mxu0 0
        %6150 = vmatprep.mubr.bf16.mxu0 0
        %6151 = vmatmul.mubr.bf16.gmra.mrb[0].mxu0 %v6052
        %v6152 = vpop.f32.mrb[0].mxu0
        %v6153 = vadd.f32 %v6069, %v6152
        %v6154 = vpop.f32.mrb[0].mxu0
        %v6155 = vpop.f32.mrb[0].mxu0
        %v6156 = vpop.f32.mrb[0].mxu0
        %6157 = vdwg.mxu0
        %v6158 = vmax.f32 %v6153, 0.0
        %v6159 = vpack.c.bf16 %v6158, %v6158
        %v6160 = vld [vmem:[%s13] sm:$0xf]
        %v6161 = vld [vmem:[%s13 + $0x4] sm:$0xf]
        %v6162 = vld [vmem:[%s13 + $0x8] sm:$0xf]
        %v6163 = vld [vmem:[%s13 + $0xc] sm:$0xf]
        %v6164 = vld [vmem:[%s13 + $0x10] sm:$0xf]
        %v6165 = vld [vmem:[%s13 + $0x14] sm:$0xf]
        %v6166 = vld [vmem:[%s13 + $0x18] sm:$0xf]
        %v6167 = vld [vmem:[%s13 + $0x1c] sm:$0xf]
        %v6168 = vld [vmem:[#allocation21] sm:$0x1]
        %v6177 = vunpack.c.l.b16 %v6160
        %v6178 = vunpack.c.l.b16 %v6161
        %v6179 = vunpack.c.l.b16 %v6162
        %v6180 = vunpack.c.l.b16 %v6163
        %v6181 = vunpack.c.l.b16 %v6164
        %v6182 = vunpack.c.l.b16 %v6165
        %v6183 = vunpack.c.l.b16 %v6166
        %v6184 = vunpack.c.l.b16 %v6167
        %v6185 = vpack.c.b16 %v6178, %v6177
        %v6186 = vpack.c.b16 %v6180, %v6179
        %v6187 = vpack.c.b16 %v6182, %v6181
        %v6188 = vpack.c.b16 %v6184, %v6183
        %v6194 = vsel %vm5620, %v6159, 0
        %6196 = vmatprep.subr.bf16.mxu0 0
        %6197 = vmatpush1.bf16.msra.mxu0 %v6185
        %6198 = vmatprep.subr.bf16.mxu0 0
        %6199 = vmatpush1.bf16.msra.mxu0 %v6186
        %6200 = vmatprep.subr.bf16.mxu0 0
        %6201 = vmatpush1.bf16.msra.mxu0 %v6187
        %6202 = vmatprep.subr.bf16.mxu0 0
        %6203 = vmatpush1.bf16.msra.mxu0 %v6188
        %6204 = vmatprep.subr.bf16.mxu0 0
        %6205 = vmatpush1.bf16.msra.mxu0 0
        %6206 = vmatprep.subr.bf16.mxu0 0
        %6207 = vmatpush1.bf16.msra.mxu0 0
        %6208 = vmatprep.subr.bf16.mxu0 0
        %6209 = vmatpush1.bf16.msra.mxu0 0
        %6210 = vmatprep.subr.bf16.mxu0 0
        %6211 = vmatpush1.bf16.msra.mxu0 0
        %6212 = vmatprep.subr.bf16.mxu0 0
        %6213 = vmatpush1.bf16.msra.mxu0 0
        %6214 = vmatprep.subr.bf16.mxu0 0
        %6215 = vmatpush1.bf16.msra.mxu0 0
        %6216 = vmatprep.subr.bf16.mxu0 0
        %6217 = vmatpush1.bf16.msra.mxu0 0
        %6218 = vmatprep.subr.bf16.mxu0 0
        %6219 = vmatpush1.bf16.msra.mxu0 0
        %6220 = vmatprep.subr.bf16.mxu0 0
        %6221 = vmatpush1.bf16.msra.mxu0 0
        %6222 = vmatprep.subr.bf16.mxu0 0
        %6223 = vmatpush1.bf16.msra.mxu0 0
        %6224 = vmatprep.subr.bf16.mxu0 0
        %6225 = vmatpush1.bf16.msra.mxu0 0
        %6226 = vmatprep.subr.bf16.mxu0 0
        %6227 = vmatpush1.bf16.msra.mxu0 0
        %6228 = vmatprep.mubr.bf16.mxu0 0
        %6229 = vmatmul.mubr.bf16.gmra.mrb[0].mxu0 %v6194
        %v6230 = vpop.f32.mrb[0].mxu0
        %v6231 = vadd.f32 %v6168, %v6230
        %v6232 = vpop.f32.mrb[0].mxu0
        %v6233 = vpop.f32.mrb[0].mxu0
        %v6234 = vpop.f32.mrb[0].mxu0
        %6235 = vdwg.mxu0
        %v6236 = vand.u32 2147483647, %v6231
        %v6237 = vsub.f32 0.0, %v6236
        %v6238 = vmul.f32 %v6237, 1.442695
        %v6239 = vpow.pop %v6238
        %vm6240 = vcmp.ge.f32.partialorder %v6231, 0.0
        %v6241 = vadd.f32 %v6239, 1.0
        %v6242 = vrcp.pop %v6241
        %v6243 = vmul.f32 1.0, %v6242
        %v6244 = vmul.f32 %v6239, %v6242
        %v6245 = vsel %vm6240, %v6243, %v6244
        %vm6246 = vcmask 24576
        %6247 = vst.msk [vmem:[%s632] sm:$0x1] %vm6246, %v6245
        %s6248 = sand.u32 %s363, 1
        %s6249 = scalar_lea.sflag [#allocation6], %s6248
        %s6250 = sand.u32 %s363, 1
        %s6251 = scalar_lea.vmem [#allocation22], %s6250
        // Predicated region
        $region125: #{weather_cnn_forward.1} parent=79 // pred_check
          %p6252 = pneg %p373
        $region126: #{weather_cnn_forward.1} parent=79 // pred_check_branch
          %6254 = sbr.rel (%p6252) target = $region128
        $region127: #{weather_cnn_forward.1} parent=79 // pred_region
          %s6256 = ssub.s32 16, 16
          %6257 = vsyncadd %s6249, %s6256
          %s6258 = smul.addr %s35, 16
          %s6259 = scalar_lea.hbm %s15, %s6258
          %s6261 = sshll.u32 %s6251, 4
          %s6262 = int_to_ptr.vmem [resolvable:$true] %s6261
          %6264 = dma.vmem_to_hbm [thread:$0]  %s6262, 16, %s6259, %s6249
        $region128: #{weather_cnn_forward.1} parent=79 // pred_fallthru
          _
      $region80: #{weather_cnn_forward.1} parent=5 // pred_fallthru
        _
      %p6265 = scmp.le.s32.totalorder 2, %s30
      // Predicated region
      $region129: #{weather_cnn_forward.1} parent=5 // pred_check
        %p6266 = pneg %p6265
      $region130: #{weather_cnn_forward.1} parent=5 // pred_check_branch
        %6268 = sbr.rel (%p6266) target = $region132
      $region131: #{weather_cnn_forward.1} parent=5 // pred_region
        %s6269 = ssub.s32 %s30, 2
        // Predicated region
        $region133: #{weather_cnn_forward.1} parent=131 // pred_check
          %p6270 = pneg %p379
        $region134: #{weather_cnn_forward.1} parent=131 // pred_check_branch
          %6272 = sbr.rel (%p6270) target = $region136
        $region135: #{weather_cnn_forward.1} parent=131 // pred_region
          %s6273 = sand.u32 %s364, 1
          %s6274 = scalar_lea.sflag [#allocation6], %s6273
          %s6275 = sand.u32 %s364, 1
          %s6276 = scalar_lea.vmem [#allocation22], %s6275
          %6277 = dma.done %s6274, 16
        $region136: #{weather_cnn_forward.1} parent=131 // pred_fallthru
          _
      $region132: #{weather_cnn_forward.1} parent=5 // pred_fallthru
        _
    $region6: #{weather_cnn_forward.1} parent=1 // loop_footer
      %s34 = sadd.s32 1, %s30
    $region7: #{weather_cnn_forward.1} parent=1 // loop_footer_branch
      %29 = sbr.rel target = $region3
    $region8: #{weather_cnn_forward.1} parent=1 // loop_exit
      _
    %6278 = vsyncpa [#allocation5], 1
    %s6279 = scalar_lea.sflag [#allocation5], 1
    %6280 = vsyncpa %s6279, 1
    %6281 = vsyncpa [#allocation8], 1
    %6282 = vsyncpa [#allocation11], 1
    %6283 = vsyncpa [#allocation14], 1
    %6284 = vsyncpa [#allocation17], 1
    %6285 = vsyncpa [#allocation20], 1
    %6286 = vsyncpa [#allocation6], 1
    %s6287 = scalar_lea.sflag [#allocation6], 1
    %6288 = vsyncpa %s6287, 1

</llo_original>
